<compile_context>
chip_gen: v6e
topology: v6e:2x2x1
jax: 0.10.0
libtpu: 0.0.40
codegen_flags: <defaults>
</compile_context>

<pallas_src>
import functools

import jax
import jax.numpy as jnp
import numpy as np
from jax import lax
from jax.experimental import pallas as pl
from jax.experimental.pallas import tpu as pltpu

HIDDEN = 128
CONV_CH = 32
NUM_CLASSES = 10
FC_PAD = 128   # lane-dense padded class dimension


# ---------------------------------------------------------------------------
# Pallas kernel
# ---------------------------------------------------------------------------
def _voice_kernel(patches_ref,   # (T*BP, 3)   im2col taps (kw=0,1,2), time-major
                  wconv_ref,     # (3, 32)     conv weight (center H row only)
                  bconv_ref,     # (1, 32)
                  wih_ref,       # (32, 512)   W_ih^T
                  whh_ref,       # (128, 512)  W_hh^T
                  bgate_ref,     # (1, 512)    b_ih + b_hh
                  wfc_ref,       # (128, 128)  W_fc^T zero-padded to 128 cols
                  bfc_ref,       # (1, 128)    b_fc, padded cols = -1e30
                  out_ref,       # (BP, 128)   log-probs (lane-dense)
                  xg_scr,        # VMEM scratch (T*BP, 512), 2-D / sublane-dense
                  *, BP, T, H):
    # --- conv1 (effective 1x3, pad 1) as an im2col matmul, then ReLU ---------
    conv = jnp.dot(patches_ref[...], wconv_ref[...],
                   preferred_element_type=jnp.float32) + bconv_ref[...]
    conv = jnp.maximum(conv, 0.0)                                  # (T*BP, 32)

    # --- input-to-gates projection for every timestep at once ----------------
    xg_scr[...] = jnp.dot(conv, wih_ref[...],
                          preferred_element_type=jnp.float32) + bgate_ref[...]

    whh = whh_ref[...]                                             # (H, 4H)

    # --- LSTM recurrence (PyTorch gate order: i, f, g, o), fully unrolled ----
    def step(t, carry):
        h, c = carry
        row = pl.multiple_of(t * BP, BP)
        gates = xg_scr[pl.ds(row, BP), :] + jnp.dot(
            h, whh, preferred_element_type=jnp.float32)            # (BP, 4H)
        i = jax.nn.sigmoid(gates[:, 0:H])
        f = jax.nn.sigmoid(gates[:, H:2 * H])
        g = jnp.tanh(gates[:, 2 * H:3 * H])
        o = jax.nn.sigmoid(gates[:, 3 * H:4 * H])
        c_new = f * c + i * g
        h_new = o * jnp.tanh(c_new)
        return (h_new, c_new)

    h0 = jnp.zeros((BP, H), jnp.float32)
    c0 = jnp.zeros((BP, H), jnp.float32)
    h_n, _ = lax.fori_loop(0, T, step, (h0, c0), unroll=True)      # (BP, H)

    # --- fc + log_softmax (padded classes carry -1e30 bias -> exp()==0) ------
    logits = jnp.dot(h_n, wfc_ref[...],
                     preferred_element_type=jnp.float32) + bfc_ref[...]  # (BP,128)
    m = jnp.max(logits, axis=1, keepdims=True)
    s = logits - m
    lse = jnp.log(jnp.sum(jnp.exp(s), axis=1, keepdims=True))
    out_ref[...] = s - lse


# ---------------------------------------------------------------------------
# Wrapper: glue (im2col, padding, weight reshapes) in JAX, hot path in Pallas.
# ---------------------------------------------------------------------------
def voice_command_forward(x, params):
    """x: (B, 1, T) float32 -> (B, 10) log-probs."""
    B, one, T = x.shape
    assert one == 1
    BP = ((B + 7) // 8) * 8                                        # sublane pad

    w_conv, b_conv, w_ih, w_hh, b_ih, b_hh, w_fc, b_fc = params

    # im2col with only the 3 non-zero taps (kh=1 row; kh=0/2 hit zero padding).
    xw = x[:, 0, :]                                                # (B, T)
    xp = jnp.pad(xw, ((0, 0), (1, 1)))                             # (B, T+2)
    patches = jnp.stack([xp[:, kw:kw + T] for kw in range(3)], axis=-1)  # (B,T,3)
    patches = jnp.pad(patches, ((0, BP - B), (0, 0), (0, 0)))      # (BP,T,3)
    patches_tm = jnp.transpose(patches, (1, 0, 2)).reshape(T * BP, 3)

    wconv_mat = w_conv[:, 0, 1, :].T                               # (3, 32)
    bconv2d = b_conv.reshape(1, CONV_CH)
    wih_t = w_ih.T                                                 # (32, 4H)
    whh_t = w_hh.T                                                 # (H, 4H)
    bgate = (b_ih + b_hh).reshape(1, 4 * HIDDEN)

    # Lane-dense FC head: pad classes to 128; padded bias = -1e30 so padded
    # logits vanish under the softmax normalization.
    wfc_pad = jnp.pad(w_fc.T, ((0, 0), (0, FC_PAD - NUM_CLASSES)))       # (H,128)
    bfc_pad = jnp.concatenate(
        [b_fc, jnp.full((FC_PAD - NUM_CLASSES,), -1e30, jnp.float32)]
    ).reshape(1, FC_PAD)

    flops = int(2 * T * BP * 3 * CONV_CH
                + 2 * T * BP * CONV_CH * 4 * HIDDEN
                + 2 * T * BP * HIDDEN * 4 * HIDDEN
                + 2 * BP * HIDDEN * FC_PAD)
    transcendentals = int(4 * T * BP * HIDDEN + BP * FC_PAD)
    bytes_accessed = int(4 * (patches_tm.size + wconv_mat.size + CONV_CH
                              + wih_t.size + whh_t.size + 4 * HIDDEN
                              + wfc_pad.size + FC_PAD + BP * FC_PAD))

    kernel = functools.partial(_voice_kernel, BP=BP, T=T, H=HIDDEN)
    vmem = pl.BlockSpec(memory_space=pltpu.MemorySpace.VMEM)

    out_pad = pl.pallas_call(
        kernel,
        out_shape=jax.ShapeDtypeStruct((BP, FC_PAD), jnp.float32),
        in_specs=[vmem] * 8,
        out_specs=vmem,
        scratch_shapes=[pltpu.VMEM((T * BP, 4 * HIDDEN), jnp.float32)],
        cost_estimate=pl.CostEstimate(flops=flops,
                                      transcendentals=transcendentals,
                                      bytes_accessed=bytes_accessed),
    )(patches_tm, wconv_mat, bconv2d, wih_t, whh_t, bgate, wfc_pad, bfc_pad)

    return out_pad[:B, :NUM_CLASSES]


# ---------------------------------------------------------------------------
# Pure-JAX reference for validation
# ---------------------------------------------------------------------------
def reference_forward(x, params):
    w_conv, b_conv, w_ih, w_hh, b_ih, b_hh, w_fc, b_fc = params
    B, _, T = x.shape
    x4 = x[:, :, None, :]                                          # (B,1,1,T)
    conv = lax.conv_general_dilated(
        x4, w_conv, window_strides=(1, 1), padding=((1, 1), (1, 1)),
        dimension_numbers=("NCHW", "OIHW", "NCHW"))
    conv = jax.nn.relu(conv + b_conv.reshape(1, CONV_CH, 1, 1))    # (B,32,1,T)
    seq = jnp.transpose(conv[:, :, 0, :], (0, 2, 1))               # (B,T,32)

    def step(carry, xt):
        h, c = carry
        gates = xt @ w_ih.T + h @ w_hh.T + b_ih + b_hh
        i, f, g, o = jnp.split(gates, 4, axis=-1)
        i, f, g, o = jax.nn.sigmoid(i), jax.nn.sigmoid(f), jnp.tanh(g), jax.nn.sigmoid(o)
        c = f * c + i * g
        h = o * jnp.tanh(c)
        return (h, c), None

    h0 = jnp.zeros((B, HIDDEN), jnp.float32)
    c0 = jnp.zeros((B, HIDDEN), jnp.float32)
    (h_n, _), _ = lax.scan(step, (h0, c0), jnp.transpose(seq, (1, 0, 2)))
    logits = h_n @ w_fc.T + b_fc
    return jax.nn.log_softmax(logits, axis=1)


# ---------------------------------------------------------------------------
def init_params(key):
    ks = jax.random.split(key, 8)

    def unif(k, shape, bound):
        return jax.random.uniform(k, shape, jnp.float32, -bound, bound)

    conv_bound = 1.0 / np.sqrt(1 * 3 * 3)
    lstm_bound = 1.0 / np.sqrt(HIDDEN)
    fc_bound = 1.0 / np.sqrt(HIDDEN)

    w_conv = unif(ks[0], (CONV_CH, 1, 3, 3), conv_bound)
    b_conv = unif(ks[1], (CONV_CH,), conv_bound)
    w_ih = unif(ks[2], (4 * HIDDEN, CONV_CH), lstm_bound)
    w_hh = unif(ks[3], (4 * HIDDEN, HIDDEN), lstm_bound)
    b_ih = unif(ks[4], (4 * HIDDEN,), lstm_bound)
    b_hh = unif(ks[5], (4 * HIDDEN,), lstm_bound)
    w_fc = unif(ks[6], (NUM_CLASSES, HIDDEN), fc_bound)
    b_fc = unif(ks[7], (NUM_CLASSES,), fc_bound)
    return (w_conv, b_conv, w_ih, w_hh, b_ih, b_hh, w_fc, b_fc)


if __name__ == "__main__":
    key = jax.random.PRNGKey(0)
    k_x, k_p = jax.random.split(key)

    B, T = 2, 16
    x = jax.random.normal(k_x, (B, 1, T), jnp.float32)
    params = init_params(k_p)

    out = jax.block_until_ready(voice_command_forward(x, params))
    ref = jax.block_until_ready(reference_forward(x, params))

    np.testing.assert_allclose(np.asarray(out), np.asarray(ref),
                               rtol=1e-5, atol=1e-5)
    assert out.shape == (B, NUM_CLASSES)
    print("KERNEL_OK")
</pallas_src>

<mosaic_0001>
module attributes {stable_mosaic.version = 11 : i64} {
  func.func @_voice_kernel(%arg0: memref<128x3xf32, #tpu.memory_space<vmem>>, %arg1: memref<3x32xf32, #tpu.memory_space<vmem>>, %arg2: memref<1x32xf32, #tpu.memory_space<vmem>>, %arg3: memref<32x512xf32, #tpu.memory_space<vmem>>, %arg4: memref<128x512xf32, #tpu.memory_space<vmem>>, %arg5: memref<1x512xf32, #tpu.memory_space<vmem>>, %arg6: memref<128x128xf32, #tpu.memory_space<vmem>>, %arg7: memref<1x128xf32, #tpu.memory_space<vmem>>, %arg8: memref<8x128xf32, #tpu.memory_space<vmem>>, %arg9: memref<128x512xf32, #tpu.memory_space<vmem>>) attributes {dimension_semantics = [], scalar_prefetch = 0 : i64, scratch_operands = 1 : i64, tpu.core_type = #tpu.core_type<tc>} {
    %c0 = arith.constant 0 : index
    %c0_0 = arith.constant 0 : index
    %0 = vector.load %arg0[%c0, %c0_0] : memref<128x3xf32, #tpu.memory_space<vmem>>, vector<128x3xf32>
    %c0_1 = arith.constant 0 : index
    %c0_2 = arith.constant 0 : index
    %1 = vector.load %arg1[%c0_1, %c0_2] : memref<3x32xf32, #tpu.memory_space<vmem>>, vector<3x32xf32>
    %cst = arith.constant dense<0.000000e+00> : vector<128x32xf32>
    %2 = tpu.matmul %0, %1, %cst {dimension_numbers = #tpu.dot_dimension_numbers<[1], [0], [0], [1], [0, 0, 1, 1], [], []>} : vector<128x3xf32>, vector<3x32xf32>, vector<128x32xf32> -> vector<128x32xf32>
    %c0_3 = arith.constant 0 : index
    %c0_4 = arith.constant 0 : index
    %3 = vector.load %arg2[%c0_3, %c0_4] : memref<1x32xf32, #tpu.memory_space<vmem>>, vector<1x32xf32>
    %4 = vector.broadcast %3 : vector<1x32xf32> to vector<128x32xf32>
    %5 = arith.addf %2, %4 : vector<128x32xf32>
    %cst_5 = arith.constant 0.000000e+00 : f32
    %6 = vector.broadcast %cst_5 : f32 to vector<128x32xf32>
    %7 = arith.maximumf %5, %6 : vector<128x32xf32>
    %c0_6 = arith.constant 0 : index
    %c0_7 = arith.constant 0 : index
    %8 = vector.load %arg3[%c0_6, %c0_7] : memref<32x512xf32, #tpu.memory_space<vmem>>, vector<32x512xf32>
    %cst_8 = arith.constant dense<0.000000e+00> : vector<128x512xf32>
    %9 = tpu.matmul %7, %8, %cst_8 {dimension_numbers = #tpu.dot_dimension_numbers<[1], [0], [0], [1], [0, 0, 1, 1], [], []>} : vector<128x32xf32>, vector<32x512xf32>, vector<128x512xf32> -> vector<128x512xf32>
    %c0_9 = arith.constant 0 : index
    %c0_10 = arith.constant 0 : index
    %10 = vector.load %arg5[%c0_9, %c0_10] : memref<1x512xf32, #tpu.memory_space<vmem>>, vector<1x512xf32>
    %11 = vector.broadcast %10 : vector<1x512xf32> to vector<128x512xf32>
    %12 = arith.addf %9, %11 : vector<128x512xf32>
    %c0_11 = arith.constant 0 : index
    %c0_12 = arith.constant 0 : index
    %13 = vector.load %arg9[%c0_11, %c0_12] : memref<128x512xf32, #tpu.memory_space<vmem>>, vector<128x512xf32>
    tpu.vector_store %arg9[%c0_11, %c0_12], %12 {strides = array<i32>} : memref<128x512xf32, #tpu.memory_space<vmem>>, vector<128x512xf32>,
    %c0_13 = arith.constant 0 : index
    %c0_14 = arith.constant 0 : index
    %14 = vector.load %arg4[%c0_13, %c0_14] : memref<128x512xf32, #tpu.memory_space<vmem>>, vector<128x512xf32>
    %cst_15 = arith.constant 0.000000e+00 : f32
    %15 = vector.broadcast %cst_15 : f32 to vector<8x128xf32>
    %cst_16 = arith.constant 0.000000e+00 : f32
    %16 = vector.broadcast %cst_16 : f32 to vector<8x128xf32>
    %c0_i32 = arith.constant 0 : i32
    %c8_i32 = arith.constant 8 : i32
    %17 = arith.muli %c0_i32, %c8_i32 : i32
    %18 = tpu.assume_multiple %17, 8 : i32
    %19 = arith.index_cast %18 : i32 to index
    %c0_17 = arith.constant 0 : index
    %20 = vector.load %arg9[%19, %c0_17] : memref<128x512xf32, #tpu.memory_space<vmem>>, vector<8x512xf32>
    %cst_18 = arith.constant dense<0.000000e+00> : vector<8x512xf32>
    %21 = tpu.matmul %15, %14, %cst_18 {dimension_numbers = #tpu.dot_dimension_numbers<[1], [0], [0], [1], [0, 0, 1, 1], [], []>} : vector<8x128xf32>, vector<128x512xf32>, vector<8x512xf32> -> vector<8x512xf32>
    %22 = arith.addf %20, %21 : vector<8x512xf32>
    %23 = vector.extract_strided_slice %22 {offsets = [0, 0], sizes = [8, 128], strides = [1, 1]} : vector<8x512xf32> to vector<8x128xf32>
    %24 = arith.negf %23 : vector<8x128xf32>
    %25 = math.exp %24 : vector<8x128xf32>
    %cst_19 = arith.constant 1.000000e+00 : f32
    %26 = vector.broadcast %cst_19 : f32 to vector<8x128xf32>
    %27 = arith.addf %26, %25 : vector<8x128xf32>
    %28 = arith.divf %26, %27 : vector<8x128xf32>
    %29 = vector.extract_strided_slice %22 {offsets = [0, 128], sizes = [8, 128], strides = [1, 1]} : vector<8x512xf32> to vector<8x128xf32>
    %30 = arith.negf %29 : vector<8x128xf32>
    %31 = math.exp %30 : vector<8x128xf32>
    %cst_20 = arith.constant 1.000000e+00 : f32
    %32 = vector.broadcast %cst_20 : f32 to vector<8x128xf32>
    %33 = arith.addf %32, %31 : vector<8x128xf32>
    %34 = arith.divf %32, %33 : vector<8x128xf32>
    %35 = vector.extract_strided_slice %22 {offsets = [0, 256], sizes = [8, 128], strides = [1, 1]} : vector<8x512xf32> to vector<8x128xf32>
    %36 = math.tanh %35 : vector<8x128xf32>
    %37 = vector.extract_strided_slice %22 {offsets = [0, 384], sizes = [8, 128], strides = [1, 1]} : vector<8x512xf32> to vector<8x128xf32>
    %38 = arith.negf %37 : vector<8x128xf32>
    %39 = math.exp %38 : vector<8x128xf32>
    %cst_21 = arith.constant 1.000000e+00 : f32
    %40 = vector.broadcast %cst_21 : f32 to vector<8x128xf32>
    %41 = arith.addf %40, %39 : vector<8x128xf32>
    %42 = arith.divf %40, %41 : vector<8x128xf32>
    %43 = arith.mulf %34, %16 : vector<8x128xf32>
    %44 = arith.mulf %28, %36 : vector<8x128xf32>
    %45 = arith.addf %43, %44 : vector<8x128xf32>
    %46 = math.tanh %45 : vector<8x128xf32>
    %47 = arith.mulf %42, %46 : vector<8x128xf32>
    %c1_i32 = arith.constant 1 : i32
    %c8_i32_22 = arith.constant 8 : i32
    %48 = arith.muli %c1_i32, %c8_i32_22 : i32
    %49 = tpu.assume_multiple %48, 8 : i32
    %50 = arith.index_cast %49 : i32 to index
    %c0_23 = arith.constant 0 : index
    %51 = vector.load %arg9[%50, %c0_23] : memref<128x512xf32, #tpu.memory_space<vmem>>, vector<8x512xf32>
    %cst_24 = arith.constant dense<0.000000e+00> : vector<8x512xf32>
    %52 = tpu.matmul %47, %14, %cst_24 {dimension_numbers = #tpu.dot_dimension_numbers<[1], [0], [0], [1], [0, 0, 1, 1], [], []>} : vector<8x128xf32>, vector<128x512xf32>, vector<8x512xf32> -> vector<8x512xf32>
    %53 = arith.addf %51, %52 : vector<8x512xf32>
    %54 = vector.extract_strided_slice %53 {offsets = [0, 0], sizes = [8, 128], strides = [1, 1]} : vector<8x512xf32> to vector<8x128xf32>
    %55 = arith.negf %54 : vector<8x128xf32>
    %56 = math.exp %55 : vector<8x128xf32>
    %cst_25 = arith.constant 1.000000e+00 : f32
    %57 = vector.broadcast %cst_25 : f32 to vector<8x128xf32>
    %58 = arith.addf %57, %56 : vector<8x128xf32>
    %59 = arith.divf %57, %58 : vector<8x128xf32>
    %60 = vector.extract_strided_slice %53 {offsets = [0, 128], sizes = [8, 128], strides = [1, 1]} : vector<8x512xf32> to vector<8x128xf32>
    %61 = arith.negf %60 : vector<8x128xf32>
    %62 = math.exp %61 : vector<8x128xf32>
    %cst_26 = arith.constant 1.000000e+00 : f32
    %63 = vector.broadcast %cst_26 : f32 to vector<8x128xf32>
    %64 = arith.addf %63, %62 : vector<8x128xf32>
    %65 = arith.divf %63, %64 : vector<8x128xf32>
    %66 = vector.extract_strided_slice %53 {offsets = [0, 256], sizes = [8, 128], strides = [1, 1]} : vector<8x512xf32> to vector<8x128xf32>
    %67 = math.tanh %66 : vector<8x128xf32>
    %68 = vector.extract_strided_slice %53 {offsets = [0, 384], sizes = [8, 128], strides = [1, 1]} : vector<8x512xf32> to vector<8x128xf32>
    %69 = arith.negf %68 : vector<8x128xf32>
    %70 = math.exp %69 : vector<8x128xf32>
    %cst_27 = arith.constant 1.000000e+00 : f32
    %71 = vector.broadcast %cst_27 : f32 to vector<8x128xf32>
    %72 = arith.addf %71, %70 : vector<8x128xf32>
    %73 = arith.divf %71, %72 : vector<8x128xf32>
    %74 = arith.mulf %65, %45 : vector<8x128xf32>
    %75 = arith.mulf %59, %67 : vector<8x128xf32>
    %76 = arith.addf %74, %75 : vector<8x128xf32>
    %77 = math.tanh %76 : vector<8x128xf32>
    %78 = arith.mulf %73, %77 : vector<8x128xf32>
    %c2_i32 = arith.constant 2 : i32
    %c8_i32_28 = arith.constant 8 : i32
    %79 = arith.muli %c2_i32, %c8_i32_28 : i32
    %80 = tpu.assume_multiple %79, 8 : i32
    %81 = arith.index_cast %80 : i32 to index
    %c0_29 = arith.constant 0 : index
    %82 = vector.load %arg9[%81, %c0_29] : memref<128x512xf32, #tpu.memory_space<vmem>>, vector<8x512xf32>
    %cst_30 = arith.constant dense<0.000000e+00> : vector<8x512xf32>
    %83 = tpu.matmul %78, %14, %cst_30 {dimension_numbers = #tpu.dot_dimension_numbers<[1], [0], [0], [1], [0, 0, 1, 1], [], []>} : vector<8x128xf32>, vector<128x512xf32>, vector<8x512xf32> -> vector<8x512xf32>
    %84 = arith.addf %82, %83 : vector<8x512xf32>
    %85 = vector.extract_strided_slice %84 {offsets = [0, 0], sizes = [8, 128], strides = [1, 1]} : vector<8x512xf32> to vector<8x128xf32>
    %86 = arith.negf %85 : vector<8x128xf32>
    %87 = math.exp %86 : vector<8x128xf32>
    %cst_31 = arith.constant 1.000000e+00 : f32
    %88 = vector.broadcast %cst_31 : f32 to vector<8x128xf32>
    %89 = arith.addf %88, %87 : vector<8x128xf32>
    %90 = arith.divf %88, %89 : vector<8x128xf32>
    %91 = vector.extract_strided_slice %84 {offsets = [0, 128], sizes = [8, 128], strides = [1, 1]} : vector<8x512xf32> to vector<8x128xf32>
    %92 = arith.negf %91 : vector<8x128xf32>
    %93 = math.exp %92 : vector<8x128xf32>
    %cst_32 = arith.constant 1.000000e+00 : f32
    %94 = vector.broadcast %cst_32 : f32 to vector<8x128xf32>
    %95 = arith.addf %94, %93 : vector<8x128xf32>
    %96 = arith.divf %94, %95 : vector<8x128xf32>
    %97 = vector.extract_strided_slice %84 {offsets = [0, 256], sizes = [8, 128], strides = [1, 1]} : vector<8x512xf32> to vector<8x128xf32>
    %98 = math.tanh %97 : vector<8x128xf32>
    %99 = vector.extract_strided_slice %84 {offsets = [0, 384], sizes = [8, 128], strides = [1, 1]} : vector<8x512xf32> to vector<8x128xf32>
    %100 = arith.negf %99 : vector<8x128xf32>
    %101 = math.exp %100 : vector<8x128xf32>
    %cst_33 = arith.constant 1.000000e+00 : f32
    %102 = vector.broadcast %cst_33 : f32 to vector<8x128xf32>
    %103 = arith.addf %102, %101 : vector<8x128xf32>
    %104 = arith.divf %102, %103 : vector<8x128xf32>
    %105 = arith.mulf %96, %76 : vector<8x128xf32>
    %106 = arith.mulf %90, %98 : vector<8x128xf32>
    %107 = arith.addf %105, %106 : vector<8x128xf32>
    %108 = math.tanh %107 : vector<8x128xf32>
    %109 = arith.mulf %104, %108 : vector<8x128xf32>
    %c3_i32 = arith.constant 3 : i32
    %c8_i32_34 = arith.constant 8 : i32
    %110 = arith.muli %c3_i32, %c8_i32_34 : i32
    %111 = tpu.assume_multiple %110, 8 : i32
    %112 = arith.index_cast %111 : i32 to index
    %c0_35 = arith.constant 0 : index
    %113 = vector.load %arg9[%112, %c0_35] : memref<128x512xf32, #tpu.memory_space<vmem>>, vector<8x512xf32>
    %cst_36 = arith.constant dense<0.000000e+00> : vector<8x512xf32>
    %114 = tpu.matmul %109, %14, %cst_36 {dimension_numbers = #tpu.dot_dimension_numbers<[1], [0], [0], [1], [0, 0, 1, 1], [], []>} : vector<8x128xf32>, vector<128x512xf32>, vector<8x512xf32> -> vector<8x512xf32>
    %115 = arith.addf %113, %114 : vector<8x512xf32>
    %116 = vector.extract_strided_slice %115 {offsets = [0, 0], sizes = [8, 128], strides = [1, 1]} : vector<8x512xf32> to vector<8x128xf32>
    %117 = arith.negf %116 : vector<8x128xf32>
    %118 = math.exp %117 : vector<8x128xf32>
    %cst_37 = arith.constant 1.000000e+00 : f32
    %119 = vector.broadcast %cst_37 : f32 to vector<8x128xf32>
    %120 = arith.addf %119, %118 : vector<8x128xf32>
    %121 = arith.divf %119, %120 : vector<8x128xf32>
    %122 = vector.extract_strided_slice %115 {offsets = [0, 128], sizes = [8, 128], strides = [1, 1]} : vector<8x512xf32> to vector<8x128xf32>
    %123 = arith.negf %122 : vector<8x128xf32>
    %124 = math.exp %123 : vector<8x128xf32>
    %cst_38 = arith.constant 1.000000e+00 : f32
    %125 = vector.broadcast %cst_38 : f32 to vector<8x128xf32>
    %126 = arith.addf %125, %124 : vector<8x128xf32>
    %127 = arith.divf %125, %126 : vector<8x128xf32>
    %128 = vector.extract_strided_slice %115 {offsets = [0, 256], sizes = [8, 128], strides = [1, 1]} : vector<8x512xf32> to vector<8x128xf32>
    %129 = math.tanh %128 : vector<8x128xf32>
    %130 = vector.extract_strided_slice %115 {offsets = [0, 384], sizes = [8, 128], strides = [1, 1]} : vector<8x512xf32> to vector<8x128xf32>
    %131 = arith.negf %130 : vector<8x128xf32>
    %132 = math.exp %131 : vector<8x128xf32>
    %cst_39 = arith.constant 1.000000e+00 : f32
    %133 = vector.broadcast %cst_39 : f32 to vector<8x128xf32>
    %134 = arith.addf %133, %132 : vector<8x128xf32>
    %135 = arith.divf %133, %134 : vector<8x128xf32>
    %136 = arith.mulf %127, %107 : vector<8x128xf32>
    %137 = arith.mulf %121, %129 : vector<8x128xf32>
    %138 = arith.addf %136, %137 : vector<8x128xf32>
    %139 = math.tanh %138 : vector<8x128xf32>
    %140 = arith.mulf %135, %139 : vector<8x128xf32>
    %c4_i32 = arith.constant 4 : i32
    %c8_i32_40 = arith.constant 8 : i32
    %141 = arith.muli %c4_i32, %c8_i32_40 : i32
    %142 = tpu.assume_multiple %141, 8 : i32
    %143 = arith.index_cast %142 : i32 to index
    %c0_41 = arith.constant 0 : index
    %144 = vector.load %arg9[%143, %c0_41] : memref<128x512xf32, #tpu.memory_space<vmem>>, vector<8x512xf32>
    %cst_42 = arith.constant dense<0.000000e+00> : vector<8x512xf32>
    %145 = tpu.matmul %140, %14, %cst_42 {dimension_numbers = #tpu.dot_dimension_numbers<[1], [0], [0], [1], [0, 0, 1, 1], [], []>} : vector<8x128xf32>, vector<128x512xf32>, vector<8x512xf32> -> vector<8x512xf32>
    %146 = arith.addf %144, %145 : vector<8x512xf32>
    %147 = vector.extract_strided_slice %146 {offsets = [0, 0], sizes = [8, 128], strides = [1, 1]} : vector<8x512xf32> to vector<8x128xf32>
    %148 = arith.negf %147 : vector<8x128xf32>
    %149 = math.exp %148 : vector<8x128xf32>
    %cst_43 = arith.constant 1.000000e+00 : f32
    %150 = vector.broadcast %cst_43 : f32 to vector<8x128xf32>
    %151 = arith.addf %150, %149 : vector<8x128xf32>
    %152 = arith.divf %150, %151 : vector<8x128xf32>
    %153 = vector.extract_strided_slice %146 {offsets = [0, 128], sizes = [8, 128], strides = [1, 1]} : vector<8x512xf32> to vector<8x128xf32>
    %154 = arith.negf %153 : vector<8x128xf32>
    %155 = math.exp %154 : vector<8x128xf32>
    %cst_44 = arith.constant 1.000000e+00 : f32
    %156 = vector.broadcast %cst_44 : f32 to vector<8x128xf32>
    %157 = arith.addf %156, %155 : vector<8x128xf32>
    %158 = arith.divf %156, %157 : vector<8x128xf32>
    %159 = vector.extract_strided_slice %146 {offsets = [0, 256], sizes = [8, 128], strides = [1, 1]} : vector<8x512xf32> to vector<8x128xf32>
    %160 = math.tanh %159 : vector<8x128xf32>
    %161 = vector.extract_strided_slice %146 {offsets = [0, 384], sizes = [8, 128], strides = [1, 1]} : vector<8x512xf32> to vector<8x128xf32>
    %162 = arith.negf %161 : vector<8x128xf32>
    %163 = math.exp %162 : vector<8x128xf32>
    %cst_45 = arith.constant 1.000000e+00 : f32
    %164 = vector.broadcast %cst_45 : f32 to vector<8x128xf32>
    %165 = arith.addf %164, %163 : vector<8x128xf32>
    %166 = arith.divf %164, %165 : vector<8x128xf32>
    %167 = arith.mulf %158, %138 : vector<8x128xf32>
    %168 = arith.mulf %152, %160 : vector<8x128xf32>
    %169 = arith.addf %167, %168 : vector<8x128xf32>
    %170 = math.tanh %169 : vector<8x128xf32>
    %171 = arith.mulf %166, %170 : vector<8x128xf32>
    %c5_i32 = arith.constant 5 : i32
    %c8_i32_46 = arith.constant 8 : i32
    %172 = arith.muli %c5_i32, %c8_i32_46 : i32
    %173 = tpu.assume_multiple %172, 8 : i32
    %174 = arith.index_cast %173 : i32 to index
    %c0_47 = arith.constant 0 : index
    %175 = vector.load %arg9[%174, %c0_47] : memref<128x512xf32, #tpu.memory_space<vmem>>, vector<8x512xf32>
    %cst_48 = arith.constant dense<0.000000e+00> : vector<8x512xf32>
    %176 = tpu.matmul %171, %14, %cst_48 {dimension_numbers = #tpu.dot_dimension_numbers<[1], [0], [0], [1], [0, 0, 1, 1], [], []>} : vector<8x128xf32>, vector<128x512xf32>, vector<8x512xf32> -> vector<8x512xf32>
    %177 = arith.addf %175, %176 : vector<8x512xf32>
    %178 = vector.extract_strided_slice %177 {offsets = [0, 0], sizes = [8, 128], strides = [1, 1]} : vector<8x512xf32> to vector<8x128xf32>
    %179 = arith.negf %178 : vector<8x128xf32>
    %180 = math.exp %179 : vector<8x128xf32>
    %cst_49 = arith.constant 1.000000e+00 : f32
    %181 = vector.broadcast %cst_49 : f32 to vector<8x128xf32>
    %182 = arith.addf %181, %180 : vector<8x128xf32>
    %183 = arith.divf %181, %182 : vector<8x128xf32>
    %184 = vector.extract_strided_slice %177 {offsets = [0, 128], sizes = [8, 128], strides = [1, 1]} : vector<8x512xf32> to vector<8x128xf32>
    %185 = arith.negf %184 : vector<8x128xf32>
    %186 = math.exp %185 : vector<8x128xf32>
    %cst_50 = arith.constant 1.000000e+00 : f32
    %187 = vector.broadcast %cst_50 : f32 to vector<8x128xf32>
    %188 = arith.addf %187, %186 : vector<8x128xf32>
    %189 = arith.divf %187, %188 : vector<8x128xf32>
    %190 = vector.extract_strided_slice %177 {offsets = [0, 256], sizes = [8, 128], strides = [1, 1]} : vector<8x512xf32> to vector<8x128xf32>
    %191 = math.tanh %190 : vector<8x128xf32>
    %192 = vector.extract_strided_slice %177 {offsets = [0, 384], sizes = [8, 128], strides = [1, 1]} : vector<8x512xf32> to vector<8x128xf32>
    %193 = arith.negf %192 : vector<8x128xf32>
    %194 = math.exp %193 : vector<8x128xf32>
    %cst_51 = arith.constant 1.000000e+00 : f32
    %195 = vector.broadcast %cst_51 : f32 to vector<8x128xf32>
    %196 = arith.addf %195, %194 : vector<8x128xf32>
    %197 = arith.divf %195, %196 : vector<8x128xf32>
    %198 = arith.mulf %189, %169 : vector<8x128xf32>
    %199 = arith.mulf %183, %191 : vector<8x128xf32>
    %200 = arith.addf %198, %199 : vector<8x128xf32>
    %201 = math.tanh %200 : vector<8x128xf32>
    %202 = arith.mulf %197, %201 : vector<8x128xf32>
    %c6_i32 = arith.constant 6 : i32
    %c8_i32_52 = arith.constant 8 : i32
    %203 = arith.muli %c6_i32, %c8_i32_52 : i32
    %204 = tpu.assume_multiple %203, 8 : i32
    %205 = arith.index_cast %204 : i32 to index
    %c0_53 = arith.constant 0 : index
    %206 = vector.load %arg9[%205, %c0_53] : memref<128x512xf32, #tpu.memory_space<vmem>>, vector<8x512xf32>
    %cst_54 = arith.constant dense<0.000000e+00> : vector<8x512xf32>
    %207 = tpu.matmul %202, %14, %cst_54 {dimension_numbers = #tpu.dot_dimension_numbers<[1], [0], [0], [1], [0, 0, 1, 1], [], []>} : vector<8x128xf32>, vector<128x512xf32>, vector<8x512xf32> -> vector<8x512xf32>
    %208 = arith.addf %206, %207 : vector<8x512xf32>
    %209 = vector.extract_strided_slice %208 {offsets = [0, 0], sizes = [8, 128], strides = [1, 1]} : vector<8x512xf32> to vector<8x128xf32>
    %210 = arith.negf %209 : vector<8x128xf32>
    %211 = math.exp %210 : vector<8x128xf32>
    %cst_55 = arith.constant 1.000000e+00 : f32
    %212 = vector.broadcast %cst_55 : f32 to vector<8x128xf32>
    %213 = arith.addf %212, %211 : vector<8x128xf32>
    %214 = arith.divf %212, %213 : vector<8x128xf32>
    %215 = vector.extract_strided_slice %208 {offsets = [0, 128], sizes = [8, 128], strides = [1, 1]} : vector<8x512xf32> to vector<8x128xf32>
    %216 = arith.negf %215 : vector<8x128xf32>
    %217 = math.exp %216 : vector<8x128xf32>
    %cst_56 = arith.constant 1.000000e+00 : f32
    %218 = vector.broadcast %cst_56 : f32 to vector<8x128xf32>
    %219 = arith.addf %218, %217 : vector<8x128xf32>
    %220 = arith.divf %218, %219 : vector<8x128xf32>
    %221 = vector.extract_strided_slice %208 {offsets = [0, 256], sizes = [8, 128], strides = [1, 1]} : vector<8x512xf32> to vector<8x128xf32>
    %222 = math.tanh %221 : vector<8x128xf32>
    %223 = vector.extract_strided_slice %208 {offsets = [0, 384], sizes = [8, 128], strides = [1, 1]} : vector<8x512xf32> to vector<8x128xf32>
    %224 = arith.negf %223 : vector<8x128xf32>
    %225 = math.exp %224 : vector<8x128xf32>
    %cst_57 = arith.constant 1.000000e+00 : f32
    %226 = vector.broadcast %cst_57 : f32 to vector<8x128xf32>
    %227 = arith.addf %226, %225 : vector<8x128xf32>
    %228 = arith.divf %226, %227 : vector<8x128xf32>
    %229 = arith.mulf %220, %200 : vector<8x128xf32>
    %230 = arith.mulf %214, %222 : vector<8x128xf32>
    %231 = arith.addf %229, %230 : vector<8x128xf32>
    %232 = math.tanh %231 : vector<8x128xf32>
    %233 = arith.mulf %228, %232 : vector<8x128xf32>
    %c7_i32 = arith.constant 7 : i32
    %c8_i32_58 = arith.constant 8 : i32
    %234 = arith.muli %c7_i32, %c8_i32_58 : i32
    %235 = tpu.assume_multiple %234, 8 : i32
    %236 = arith.index_cast %235 : i32 to index
    %c0_59 = arith.constant 0 : index
    %237 = vector.load %arg9[%236, %c0_59] : memref<128x512xf32, #tpu.memory_space<vmem>>, vector<8x512xf32>
    %cst_60 = arith.constant dense<0.000000e+00> : vector<8x512xf32>
    %238 = tpu.matmul %233, %14, %cst_60 {dimension_numbers = #tpu.dot_dimension_numbers<[1], [0], [0], [1], [0, 0, 1, 1], [], []>} : vector<8x128xf32>, vector<128x512xf32>, vector<8x512xf32> -> vector<8x512xf32>
    %239 = arith.addf %237, %238 : vector<8x512xf32>
    %240 = vector.extract_strided_slice %239 {offsets = [0, 0], sizes = [8, 128], strides = [1, 1]} : vector<8x512xf32> to vector<8x128xf32>
    %241 = arith.negf %240 : vector<8x128xf32>
    %242 = math.exp %241 : vector<8x128xf32>
    %cst_61 = arith.constant 1.000000e+00 : f32
    %243 = vector.broadcast %cst_61 : f32 to vector<8x128xf32>
    %244 = arith.addf %243, %242 : vector<8x128xf32>
    %245 = arith.divf %243, %244 : vector<8x128xf32>
    %246 = vector.extract_strided_slice %239 {offsets = [0, 128], sizes = [8, 128], strides = [1, 1]} : vector<8x512xf32> to vector<8x128xf32>
    %247 = arith.negf %246 : vector<8x128xf32>
    %248 = math.exp %247 : vector<8x128xf32>
    %cst_62 = arith.constant 1.000000e+00 : f32
    %249 = vector.broadcast %cst_62 : f32 to vector<8x128xf32>
    %250 = arith.addf %249, %248 : vector<8x128xf32>
    %251 = arith.divf %249, %250 : vector<8x128xf32>
    %252 = vector.extract_strided_slice %239 {offsets = [0, 256], sizes = [8, 128], strides = [1, 1]} : vector<8x512xf32> to vector<8x128xf32>
    %253 = math.tanh %252 : vector<8x128xf32>
    %254 = vector.extract_strided_slice %239 {offsets = [0, 384], sizes = [8, 128], strides = [1, 1]} : vector<8x512xf32> to vector<8x128xf32>
    %255 = arith.negf %254 : vector<8x128xf32>
    %256 = math.exp %255 : vector<8x128xf32>
    %cst_63 = arith.constant 1.000000e+00 : f32
    %257 = vector.broadcast %cst_63 : f32 to vector<8x128xf32>
    %258 = arith.addf %257, %256 : vector<8x128xf32>
    %259 = arith.divf %257, %258 : vector<8x128xf32>
    %260 = arith.mulf %251, %231 : vector<8x128xf32>
    %261 = arith.mulf %245, %253 : vector<8x128xf32>
    %262 = arith.addf %260, %261 : vector<8x128xf32>
    %263 = math.tanh %262 : vector<8x128xf32>
    %264 = arith.mulf %259, %263 : vector<8x128xf32>
    %c8_i32_64 = arith.constant 8 : i32
    %c8_i32_65 = arith.constant 8 : i32
    %265 = arith.muli %c8_i32_64, %c8_i32_65 : i32
    %266 = tpu.assume_multiple %265, 8 : i32
    %267 = arith.index_cast %266 : i32 to index
    %c0_66 = arith.constant 0 : index
    %268 = vector.load %arg9[%267, %c0_66] : memref<128x512xf32, #tpu.memory_space<vmem>>, vector<8x512xf32>
    %cst_67 = arith.constant dense<0.000000e+00> : vector<8x512xf32>
    %269 = tpu.matmul %264, %14, %cst_67 {dimension_numbers = #tpu.dot_dimension_numbers<[1], [0], [0], [1], [0, 0, 1, 1], [], []>} : vector<8x128xf32>, vector<128x512xf32>, vector<8x512xf32> -> vector<8x512xf32>
    %270 = arith.addf %268, %269 : vector<8x512xf32>
    %271 = vector.extract_strided_slice %270 {offsets = [0, 0], sizes = [8, 128], strides = [1, 1]} : vector<8x512xf32> to vector<8x128xf32>
    %272 = arith.negf %271 : vector<8x128xf32>
    %273 = math.exp %272 : vector<8x128xf32>
    %cst_68 = arith.constant 1.000000e+00 : f32
    %274 = vector.broadcast %cst_68 : f32 to vector<8x128xf32>
    %275 = arith.addf %274, %273 : vector<8x128xf32>
    %276 = arith.divf %274, %275 : vector<8x128xf32>
    %277 = vector.extract_strided_slice %270 {offsets = [0, 128], sizes = [8, 128], strides = [1, 1]} : vector<8x512xf32> to vector<8x128xf32>
    %278 = arith.negf %277 : vector<8x128xf32>
    %279 = math.exp %278 : vector<8x128xf32>
    %cst_69 = arith.constant 1.000000e+00 : f32
    %280 = vector.broadcast %cst_69 : f32 to vector<8x128xf32>
    %281 = arith.addf %280, %279 : vector<8x128xf32>
    %282 = arith.divf %280, %281 : vector<8x128xf32>
    %283 = vector.extract_strided_slice %270 {offsets = [0, 256], sizes = [8, 128], strides = [1, 1]} : vector<8x512xf32> to vector<8x128xf32>
    %284 = math.tanh %283 : vector<8x128xf32>
    %285 = vector.extract_strided_slice %270 {offsets = [0, 384], sizes = [8, 128], strides = [1, 1]} : vector<8x512xf32> to vector<8x128xf32>
    %286 = arith.negf %285 : vector<8x128xf32>
    %287 = math.exp %286 : vector<8x128xf32>
    %cst_70 = arith.constant 1.000000e+00 : f32
    %288 = vector.broadcast %cst_70 : f32 to vector<8x128xf32>
    %289 = arith.addf %288, %287 : vector<8x128xf32>
    %290 = arith.divf %288, %289 : vector<8x128xf32>
    %291 = arith.mulf %282, %262 : vector<8x128xf32>
    %292 = arith.mulf %276, %284 : vector<8x128xf32>
    %293 = arith.addf %291, %292 : vector<8x128xf32>
    %294 = math.tanh %293 : vector<8x128xf32>
    %295 = arith.mulf %290, %294 : vector<8x128xf32>
    %c9_i32 = arith.constant 9 : i32
    %c8_i32_71 = arith.constant 8 : i32
    %296 = arith.muli %c9_i32, %c8_i32_71 : i32
    %297 = tpu.assume_multiple %296, 8 : i32
    %298 = arith.index_cast %297 : i32 to index
    %c0_72 = arith.constant 0 : index
    %299 = vector.load %arg9[%298, %c0_72] : memref<128x512xf32, #tpu.memory_space<vmem>>, vector<8x512xf32>
    %cst_73 = arith.constant dense<0.000000e+00> : vector<8x512xf32>
    %300 = tpu.matmul %295, %14, %cst_73 {dimension_numbers = #tpu.dot_dimension_numbers<[1], [0], [0], [1], [0, 0, 1, 1], [], []>} : vector<8x128xf32>, vector<128x512xf32>, vector<8x512xf32> -> vector<8x512xf32>
    %301 = arith.addf %299, %300 : vector<8x512xf32>
    %302 = vector.extract_strided_slice %301 {offsets = [0, 0], sizes = [8, 128], strides = [1, 1]} : vector<8x512xf32> to vector<8x128xf32>
    %303 = arith.negf %302 : vector<8x128xf32>
    %304 = math.exp %303 : vector<8x128xf32>
    %cst_74 = arith.constant 1.000000e+00 : f32
    %305 = vector.broadcast %cst_74 : f32 to vector<8x128xf32>
    %306 = arith.addf %305, %304 : vector<8x128xf32>
    %307 = arith.divf %305, %306 : vector<8x128xf32>
    %308 = vector.extract_strided_slice %301 {offsets = [0, 128], sizes = [8, 128], strides = [1, 1]} : vector<8x512xf32> to vector<8x128xf32>
    %309 = arith.negf %308 : vector<8x128xf32>
    %310 = math.exp %309 : vector<8x128xf32>
    %cst_75 = arith.constant 1.000000e+00 : f32
    %311 = vector.broadcast %cst_75 : f32 to vector<8x128xf32>
    %312 = arith.addf %311, %310 : vector<8x128xf32>
    %313 = arith.divf %311, %312 : vector<8x128xf32>
    %314 = vector.extract_strided_slice %301 {offsets = [0, 256], sizes = [8, 128], strides = [1, 1]} : vector<8x512xf32> to vector<8x128xf32>
    %315 = math.tanh %314 : vector<8x128xf32>
    %316 = vector.extract_strided_slice %301 {offsets = [0, 384], sizes = [8, 128], strides = [1, 1]} : vector<8x512xf32> to vector<8x128xf32>
    %317 = arith.negf %316 : vector<8x128xf32>
    %318 = math.exp %317 : vector<8x128xf32>
    %cst_76 = arith.constant 1.000000e+00 : f32
    %319 = vector.broadcast %cst_76 : f32 to vector<8x128xf32>
    %320 = arith.addf %319, %318 : vector<8x128xf32>
    %321 = arith.divf %319, %320 : vector<8x128xf32>
    %322 = arith.mulf %313, %293 : vector<8x128xf32>
    %323 = arith.mulf %307, %315 : vector<8x128xf32>
    %324 = arith.addf %322, %323 : vector<8x128xf32>
    %325 = math.tanh %324 : vector<8x128xf32>
    %326 = arith.mulf %321, %325 : vector<8x128xf32>
    %c10_i32 = arith.constant 10 : i32
    %c8_i32_77 = arith.constant 8 : i32
    %327 = arith.muli %c10_i32, %c8_i32_77 : i32
    %328 = tpu.assume_multiple %327, 8 : i32
    %329 = arith.index_cast %328 : i32 to index
    %c0_78 = arith.constant 0 : index
    %330 = vector.load %arg9[%329, %c0_78] : memref<128x512xf32, #tpu.memory_space<vmem>>, vector<8x512xf32>
    %cst_79 = arith.constant dense<0.000000e+00> : vector<8x512xf32>
    %331 = tpu.matmul %326, %14, %cst_79 {dimension_numbers = #tpu.dot_dimension_numbers<[1], [0], [0], [1], [0, 0, 1, 1], [], []>} : vector<8x128xf32>, vector<128x512xf32>, vector<8x512xf32> -> vector<8x512xf32>
    %332 = arith.addf %330, %331 : vector<8x512xf32>
    %333 = vector.extract_strided_slice %332 {offsets = [0, 0], sizes = [8, 128], strides = [1, 1]} : vector<8x512xf32> to vector<8x128xf32>
    %334 = arith.negf %333 : vector<8x128xf32>
    %335 = math.exp %334 : vector<8x128xf32>
    %cst_80 = arith.constant 1.000000e+00 : f32
    %336 = vector.broadcast %cst_80 : f32 to vector<8x128xf32>
    %337 = arith.addf %336, %335 : vector<8x128xf32>
    %338 = arith.divf %336, %337 : vector<8x128xf32>
    %339 = vector.extract_strided_slice %332 {offsets = [0, 128], sizes = [8, 128], strides = [1, 1]} : vector<8x512xf32> to vector<8x128xf32>
    %340 = arith.negf %339 : vector<8x128xf32>
    %341 = math.exp %340 : vector<8x128xf32>
    %cst_81 = arith.constant 1.000000e+00 : f32
    %342 = vector.broadcast %cst_81 : f32 to vector<8x128xf32>
    %343 = arith.addf %342, %341 : vector<8x128xf32>
    %344 = arith.divf %342, %343 : vector<8x128xf32>
    %345 = vector.extract_strided_slice %332 {offsets = [0, 256], sizes = [8, 128], strides = [1, 1]} : vector<8x512xf32> to vector<8x128xf32>
    %346 = math.tanh %345 : vector<8x128xf32>
    %347 = vector.extract_strided_slice %332 {offsets = [0, 384], sizes = [8, 128], strides = [1, 1]} : vector<8x512xf32> to vector<8x128xf32>
    %348 = arith.negf %347 : vector<8x128xf32>
    %349 = math.exp %348 : vector<8x128xf32>
    %cst_82 = arith.constant 1.000000e+00 : f32
    %350 = vector.broadcast %cst_82 : f32 to vector<8x128xf32>
    %351 = arith.addf %350, %349 : vector<8x128xf32>
    %352 = arith.divf %350, %351 : vector<8x128xf32>
    %353 = arith.mulf %344, %324 : vector<8x128xf32>
    %354 = arith.mulf %338, %346 : vector<8x128xf32>
    %355 = arith.addf %353, %354 : vector<8x128xf32>
    %356 = math.tanh %355 : vector<8x128xf32>
    %357 = arith.mulf %352, %356 : vector<8x128xf32>
    %c11_i32 = arith.constant 11 : i32
    %c8_i32_83 = arith.constant 8 : i32
    %358 = arith.muli %c11_i32, %c8_i32_83 : i32
    %359 = tpu.assume_multiple %358, 8 : i32
    %360 = arith.index_cast %359 : i32 to index
    %c0_84 = arith.constant 0 : index
    %361 = vector.load %arg9[%360, %c0_84] : memref<128x512xf32, #tpu.memory_space<vmem>>, vector<8x512xf32>
    %cst_85 = arith.constant dense<0.000000e+00> : vector<8x512xf32>
    %362 = tpu.matmul %357, %14, %cst_85 {dimension_numbers = #tpu.dot_dimension_numbers<[1], [0], [0], [1], [0, 0, 1, 1], [], []>} : vector<8x128xf32>, vector<128x512xf32>, vector<8x512xf32> -> vector<8x512xf32>
    %363 = arith.addf %361, %362 : vector<8x512xf32>
    %364 = vector.extract_strided_slice %363 {offsets = [0, 0], sizes = [8, 128], strides = [1, 1]} : vector<8x512xf32> to vector<8x128xf32>
    %365 = arith.negf %364 : vector<8x128xf32>
    %366 = math.exp %365 : vector<8x128xf32>
    %cst_86 = arith.constant 1.000000e+00 : f32
    %367 = vector.broadcast %cst_86 : f32 to vector<8x128xf32>
    %368 = arith.addf %367, %366 : vector<8x128xf32>
    %369 = arith.divf %367, %368 : vector<8x128xf32>
    %370 = vector.extract_strided_slice %363 {offsets = [0, 128], sizes = [8, 128], strides = [1, 1]} : vector<8x512xf32> to vector<8x128xf32>
    %371 = arith.negf %370 : vector<8x128xf32>
    %372 = math.exp %371 : vector<8x128xf32>
    %cst_87 = arith.constant 1.000000e+00 : f32
    %373 = vector.broadcast %cst_87 : f32 to vector<8x128xf32>
    %374 = arith.addf %373, %372 : vector<8x128xf32>
    %375 = arith.divf %373, %374 : vector<8x128xf32>
    %376 = vector.extract_strided_slice %363 {offsets = [0, 256], sizes = [8, 128], strides = [1, 1]} : vector<8x512xf32> to vector<8x128xf32>
    %377 = math.tanh %376 : vector<8x128xf32>
    %378 = vector.extract_strided_slice %363 {offsets = [0, 384], sizes = [8, 128], strides = [1, 1]} : vector<8x512xf32> to vector<8x128xf32>
    %379 = arith.negf %378 : vector<8x128xf32>
    %380 = math.exp %379 : vector<8x128xf32>
    %cst_88 = arith.constant 1.000000e+00 : f32
    %381 = vector.broadcast %cst_88 : f32 to vector<8x128xf32>
    %382 = arith.addf %381, %380 : vector<8x128xf32>
    %383 = arith.divf %381, %382 : vector<8x128xf32>
    %384 = arith.mulf %375, %355 : vector<8x128xf32>
    %385 = arith.mulf %369, %377 : vector<8x128xf32>
    %386 = arith.addf %384, %385 : vector<8x128xf32>
    %387 = math.tanh %386 : vector<8x128xf32>
    %388 = arith.mulf %383, %387 : vector<8x128xf32>
    %c12_i32 = arith.constant 12 : i32
    %c8_i32_89 = arith.constant 8 : i32
    %389 = arith.muli %c12_i32, %c8_i32_89 : i32
    %390 = tpu.assume_multiple %389, 8 : i32
    %391 = arith.index_cast %390 : i32 to index
    %c0_90 = arith.constant 0 : index
    %392 = vector.load %arg9[%391, %c0_90] : memref<128x512xf32, #tpu.memory_space<vmem>>, vector<8x512xf32>
    %cst_91 = arith.constant dense<0.000000e+00> : vector<8x512xf32>
    %393 = tpu.matmul %388, %14, %cst_91 {dimension_numbers = #tpu.dot_dimension_numbers<[1], [0], [0], [1], [0, 0, 1, 1], [], []>} : vector<8x128xf32>, vector<128x512xf32>, vector<8x512xf32> -> vector<8x512xf32>
    %394 = arith.addf %392, %393 : vector<8x512xf32>
    %395 = vector.extract_strided_slice %394 {offsets = [0, 0], sizes = [8, 128], strides = [1, 1]} : vector<8x512xf32> to vector<8x128xf32>
    %396 = arith.negf %395 : vector<8x128xf32>
    %397 = math.exp %396 : vector<8x128xf32>
    %cst_92 = arith.constant 1.000000e+00 : f32
    %398 = vector.broadcast %cst_92 : f32 to vector<8x128xf32>
    %399 = arith.addf %398, %397 : vector<8x128xf32>
    %400 = arith.divf %398, %399 : vector<8x128xf32>
    %401 = vector.extract_strided_slice %394 {offsets = [0, 128], sizes = [8, 128], strides = [1, 1]} : vector<8x512xf32> to vector<8x128xf32>
    %402 = arith.negf %401 : vector<8x128xf32>
    %403 = math.exp %402 : vector<8x128xf32>
    %cst_93 = arith.constant 1.000000e+00 : f32
    %404 = vector.broadcast %cst_93 : f32 to vector<8x128xf32>
    %405 = arith.addf %404, %403 : vector<8x128xf32>
    %406 = arith.divf %404, %405 : vector<8x128xf32>
    %407 = vector.extract_strided_slice %394 {offsets = [0, 256], sizes = [8, 128], strides = [1, 1]} : vector<8x512xf32> to vector<8x128xf32>
    %408 = math.tanh %407 : vector<8x128xf32>
    %409 = vector.extract_strided_slice %394 {offsets = [0, 384], sizes = [8, 128], strides = [1, 1]} : vector<8x512xf32> to vector<8x128xf32>
    %410 = arith.negf %409 : vector<8x128xf32>
    %411 = math.exp %410 : vector<8x128xf32>
    %cst_94 = arith.constant 1.000000e+00 : f32
    %412 = vector.broadcast %cst_94 : f32 to vector<8x128xf32>
    %413 = arith.addf %412, %411 : vector<8x128xf32>
    %414 = arith.divf %412, %413 : vector<8x128xf32>
    %415 = arith.mulf %406, %386 : vector<8x128xf32>
    %416 = arith.mulf %400, %408 : vector<8x128xf32>
    %417 = arith.addf %415, %416 : vector<8x128xf32>
    %418 = math.tanh %417 : vector<8x128xf32>
    %419 = arith.mulf %414, %418 : vector<8x128xf32>
    %c13_i32 = arith.constant 13 : i32
    %c8_i32_95 = arith.constant 8 : i32
    %420 = arith.muli %c13_i32, %c8_i32_95 : i32
    %421 = tpu.assume_multiple %420, 8 : i32
    %422 = arith.index_cast %421 : i32 to index
    %c0_96 = arith.constant 0 : index
    %423 = vector.load %arg9[%422, %c0_96] : memref<128x512xf32, #tpu.memory_space<vmem>>, vector<8x512xf32>
    %cst_97 = arith.constant dense<0.000000e+00> : vector<8x512xf32>
    %424 = tpu.matmul %419, %14, %cst_97 {dimension_numbers = #tpu.dot_dimension_numbers<[1], [0], [0], [1], [0, 0, 1, 1], [], []>} : vector<8x128xf32>, vector<128x512xf32>, vector<8x512xf32> -> vector<8x512xf32>
    %425 = arith.addf %423, %424 : vector<8x512xf32>
    %426 = vector.extract_strided_slice %425 {offsets = [0, 0], sizes = [8, 128], strides = [1, 1]} : vector<8x512xf32> to vector<8x128xf32>
    %427 = arith.negf %426 : vector<8x128xf32>
    %428 = math.exp %427 : vector<8x128xf32>
    %cst_98 = arith.constant 1.000000e+00 : f32
    %429 = vector.broadcast %cst_98 : f32 to vector<8x128xf32>
    %430 = arith.addf %429, %428 : vector<8x128xf32>
    %431 = arith.divf %429, %430 : vector<8x128xf32>
    %432 = vector.extract_strided_slice %425 {offsets = [0, 128], sizes = [8, 128], strides = [1, 1]} : vector<8x512xf32> to vector<8x128xf32>
    %433 = arith.negf %432 : vector<8x128xf32>
    %434 = math.exp %433 : vector<8x128xf32>
    %cst_99 = arith.constant 1.000000e+00 : f32
    %435 = vector.broadcast %cst_99 : f32 to vector<8x128xf32>
    %436 = arith.addf %435, %434 : vector<8x128xf32>
    %437 = arith.divf %435, %436 : vector<8x128xf32>
    %438 = vector.extract_strided_slice %425 {offsets = [0, 256], sizes = [8, 128], strides = [1, 1]} : vector<8x512xf32> to vector<8x128xf32>
    %439 = math.tanh %438 : vector<8x128xf32>
    %440 = vector.extract_strided_slice %425 {offsets = [0, 384], sizes = [8, 128], strides = [1, 1]} : vector<8x512xf32> to vector<8x128xf32>
    %441 = arith.negf %440 : vector<8x128xf32>
    %442 = math.exp %441 : vector<8x128xf32>
    %cst_100 = arith.constant 1.000000e+00 : f32
    %443 = vector.broadcast %cst_100 : f32 to vector<8x128xf32>
    %444 = arith.addf %443, %442 : vector<8x128xf32>
    %445 = arith.divf %443, %444 : vector<8x128xf32>
    %446 = arith.mulf %437, %417 : vector<8x128xf32>
    %447 = arith.mulf %431, %439 : vector<8x128xf32>
    %448 = arith.addf %446, %447 : vector<8x128xf32>
    %449 = math.tanh %448 : vector<8x128xf32>
    %450 = arith.mulf %445, %449 : vector<8x128xf32>
    %c14_i32 = arith.constant 14 : i32
    %c8_i32_101 = arith.constant 8 : i32
    %451 = arith.muli %c14_i32, %c8_i32_101 : i32
    %452 = tpu.assume_multiple %451, 8 : i32
    %453 = arith.index_cast %452 : i32 to index
    %c0_102 = arith.constant 0 : index
    %454 = vector.load %arg9[%453, %c0_102] : memref<128x512xf32, #tpu.memory_space<vmem>>, vector<8x512xf32>
    %cst_103 = arith.constant dense<0.000000e+00> : vector<8x512xf32>
    %455 = tpu.matmul %450, %14, %cst_103 {dimension_numbers = #tpu.dot_dimension_numbers<[1], [0], [0], [1], [0, 0, 1, 1], [], []>} : vector<8x128xf32>, vector<128x512xf32>, vector<8x512xf32> -> vector<8x512xf32>
    %456 = arith.addf %454, %455 : vector<8x512xf32>
    %457 = vector.extract_strided_slice %456 {offsets = [0, 0], sizes = [8, 128], strides = [1, 1]} : vector<8x512xf32> to vector<8x128xf32>
    %458 = arith.negf %457 : vector<8x128xf32>
    %459 = math.exp %458 : vector<8x128xf32>
    %cst_104 = arith.constant 1.000000e+00 : f32
    %460 = vector.broadcast %cst_104 : f32 to vector<8x128xf32>
    %461 = arith.addf %460, %459 : vector<8x128xf32>
    %462 = arith.divf %460, %461 : vector<8x128xf32>
    %463 = vector.extract_strided_slice %456 {offsets = [0, 128], sizes = [8, 128], strides = [1, 1]} : vector<8x512xf32> to vector<8x128xf32>
    %464 = arith.negf %463 : vector<8x128xf32>
    %465 = math.exp %464 : vector<8x128xf32>
    %cst_105 = arith.constant 1.000000e+00 : f32
    %466 = vector.broadcast %cst_105 : f32 to vector<8x128xf32>
    %467 = arith.addf %466, %465 : vector<8x128xf32>
    %468 = arith.divf %466, %467 : vector<8x128xf32>
    %469 = vector.extract_strided_slice %456 {offsets = [0, 256], sizes = [8, 128], strides = [1, 1]} : vector<8x512xf32> to vector<8x128xf32>
    %470 = math.tanh %469 : vector<8x128xf32>
    %471 = vector.extract_strided_slice %456 {offsets = [0, 384], sizes = [8, 128], strides = [1, 1]} : vector<8x512xf32> to vector<8x128xf32>
    %472 = arith.negf %471 : vector<8x128xf32>
    %473 = math.exp %472 : vector<8x128xf32>
    %cst_106 = arith.constant 1.000000e+00 : f32
    %474 = vector.broadcast %cst_106 : f32 to vector<8x128xf32>
    %475 = arith.addf %474, %473 : vector<8x128xf32>
    %476 = arith.divf %474, %475 : vector<8x128xf32>
    %477 = arith.mulf %468, %448 : vector<8x128xf32>
    %478 = arith.mulf %462, %470 : vector<8x128xf32>
    %479 = arith.addf %477, %478 : vector<8x128xf32>
    %480 = math.tanh %479 : vector<8x128xf32>
    %481 = arith.mulf %476, %480 : vector<8x128xf32>
    %c15_i32 = arith.constant 15 : i32
    %c8_i32_107 = arith.constant 8 : i32
    %482 = arith.muli %c15_i32, %c8_i32_107 : i32
    %483 = tpu.assume_multiple %482, 8 : i32
    %484 = arith.index_cast %483 : i32 to index
    %c0_108 = arith.constant 0 : index
    %485 = vector.load %arg9[%484, %c0_108] : memref<128x512xf32, #tpu.memory_space<vmem>>, vector<8x512xf32>
    %cst_109 = arith.constant dense<0.000000e+00> : vector<8x512xf32>
    %486 = tpu.matmul %481, %14, %cst_109 {dimension_numbers = #tpu.dot_dimension_numbers<[1], [0], [0], [1], [0, 0, 1, 1], [], []>} : vector<8x128xf32>, vector<128x512xf32>, vector<8x512xf32> -> vector<8x512xf32>
    %487 = arith.addf %485, %486 : vector<8x512xf32>
    %488 = vector.extract_strided_slice %487 {offsets = [0, 0], sizes = [8, 128], strides = [1, 1]} : vector<8x512xf32> to vector<8x128xf32>
    %489 = arith.negf %488 : vector<8x128xf32>
    %490 = math.exp %489 : vector<8x128xf32>
    %cst_110 = arith.constant 1.000000e+00 : f32
    %491 = vector.broadcast %cst_110 : f32 to vector<8x128xf32>
    %492 = arith.addf %491, %490 : vector<8x128xf32>
    %493 = arith.divf %491, %492 : vector<8x128xf32>
    %494 = vector.extract_strided_slice %487 {offsets = [0, 128], sizes = [8, 128], strides = [1, 1]} : vector<8x512xf32> to vector<8x128xf32>
    %495 = arith.negf %494 : vector<8x128xf32>
    %496 = math.exp %495 : vector<8x128xf32>
    %cst_111 = arith.constant 1.000000e+00 : f32
    %497 = vector.broadcast %cst_111 : f32 to vector<8x128xf32>
    %498 = arith.addf %497, %496 : vector<8x128xf32>
    %499 = arith.divf %497, %498 : vector<8x128xf32>
    %500 = vector.extract_strided_slice %487 {offsets = [0, 256], sizes = [8, 128], strides = [1, 1]} : vector<8x512xf32> to vector<8x128xf32>
    %501 = math.tanh %500 : vector<8x128xf32>
    %502 = vector.extract_strided_slice %487 {offsets = [0, 384], sizes = [8, 128], strides = [1, 1]} : vector<8x512xf32> to vector<8x128xf32>
    %503 = arith.negf %502 : vector<8x128xf32>
    %504 = math.exp %503 : vector<8x128xf32>
    %cst_112 = arith.constant 1.000000e+00 : f32
    %505 = vector.broadcast %cst_112 : f32 to vector<8x128xf32>
    %506 = arith.addf %505, %504 : vector<8x128xf32>
    %507 = arith.divf %505, %506 : vector<8x128xf32>
    %508 = arith.mulf %499, %479 : vector<8x128xf32>
    %509 = arith.mulf %493, %501 : vector<8x128xf32>
    %510 = arith.addf %508, %509 : vector<8x128xf32>
    %511 = math.tanh %510 : vector<8x128xf32>
    %512 = arith.mulf %507, %511 : vector<8x128xf32>
    %c16_i32 = arith.constant 16 : i32
    %c0_113 = arith.constant 0 : index
    %c0_114 = arith.constant 0 : index
    %513 = vector.load %arg6[%c0_113, %c0_114] : memref<128x128xf32, #tpu.memory_space<vmem>>, vector<128x128xf32>
    %cst_115 = arith.constant dense<0.000000e+00> : vector<8x128xf32>
    %514 = tpu.matmul %512, %513, %cst_115 {dimension_numbers = #tpu.dot_dimension_numbers<[1], [0], [0], [1], [0, 0, 1, 1], [], []>} : vector<8x128xf32>, vector<128x128xf32>, vector<8x128xf32> -> vector<8x128xf32>
    %c0_116 = arith.constant 0 : index
    %c0_117 = arith.constant 0 : index
    %515 = vector.load %arg7[%c0_116, %c0_117] : memref<1x128xf32, #tpu.memory_space<vmem>>, vector<1x128xf32>
    %516 = vector.broadcast %515 : vector<1x128xf32> to vector<8x128xf32>
    %517 = arith.addf %514, %516 : vector<8x128xf32>
    %cst_118 = arith.constant dense<0xFF800000> : vector<8xf32>
    %518 = vector.multi_reduction <maximumf>, %517, %cst_118 [1] : vector<8x128xf32> to vector<8xf32>
    %519 = vector.shape_cast %518 : vector<8xf32> to vector<8x1xf32>
    %520 = vector.broadcast %519 : vector<8x1xf32> to vector<8x128xf32>
    %521 = arith.subf %517, %520 : vector<8x128xf32>
    %522 = math.exp %521 : vector<8x128xf32>
    %cst_119 = arith.constant dense<0.000000e+00> : vector<8xf32>
    %523 = vector.multi_reduction <add>, %522, %cst_119 [1] : vector<8x128xf32> to vector<8xf32>
    %524 = vector.shape_cast %523 : vector<8xf32> to vector<8x1xf32>
    %525 = math.log %524 : vector<8x1xf32>
    %526 = vector.broadcast %525 : vector<8x1xf32> to vector<8x128xf32>
    %527 = arith.subf %521, %526 : vector<8x128xf32>
    %c0_120 = arith.constant 0 : index
    %c0_121 = arith.constant 0 : index
    %528 = vector.load %arg8[%c0_120, %c0_121] : memref<8x128xf32, #tpu.memory_space<vmem>>, vector<8x128xf32>
    tpu.vector_store %arg8[%c0_120, %c0_121], %527 {strides = array<i32>} : memref<8x128xf32, #tpu.memory_space<vmem>>, vector<8x128xf32>,
    return
  }
}

</mosaic_0001>

<llo_original>
// kernel: tpu_custom_call.1
$region0: #{tpu_custom_call.1}
  #allocation0 [shape = 'u32[]', space=smem, size = 0x4, offset = 0x4, fixed_abs, tag = 'smem constant byte address 0x4 - core index']
  #allocation1 [shape = 'u32[144,128]{1,0:T(1,128)}', space=vmem, size = 0x12000, scoped, tag = 'internal scratch']
  #allocation2 [shape = 'f32[128,512]{1,0:T(8,128)}', space=vmem, size = 0x40000, scoped, tag = 'scratch operand']
  %s0 = inlined_call_operand.vmem [shape: f32[128,3], index: 0, kind: input, shape index: {}]
  %s1 = inlined_call_operand.vmem [shape: f32[3,32], index: 1, kind: input, shape index: {}]
  %s2 = inlined_call_operand.vmem [shape: f32[1,32], index: 2, kind: input, shape index: {}]
  %s3 = inlined_call_operand.vmem [shape: f32[32,512], index: 3, kind: input, shape index: {}]
  %s4 = inlined_call_operand.hbm [shape: f32[128,512], index: 4, kind: input, shape index: {}]
  %s5 = inlined_call_operand.vmem [shape: f32[1,512], index: 5, kind: input, shape index: {}]
  %s6 = inlined_call_operand.hbm [shape: f32[128,128], index: 6, kind: input, shape index: {}]
  %s7 = inlined_call_operand.vmem [shape: f32[1,128], index: 7, kind: input, shape index: {}]
  %s8 = inlined_call_operand.hbm [shape: f32[8,128], index: 8, kind: output, shape index: {}]
  %s9 = sld [smem:[#allocation0]]
  $region50: #{tpu_custom_call.1} parent=0
    _
  %s11 = ssub.s32 1, %s9
  %s12 = scalar_select 0, %s11, %s9
  $region1: #{tpu_custom_call.1} parent=0
    #allocation3 [shape = 'u8[262144]{0}', space=vmem, size = 0x40000, scoped, tag = 'input window, operand 4, single buffered']
    #allocation4 [shape = 's32[1]{0}', space=sflag, size = 0x4, scoped, tag = 'scoped memory for tpu_custom_call.1']
    #allocation5 [shape = 's32[1]{0}', space=sflag, size = 0x4, scoped, tag = 'scoped memory for tpu_custom_call.1']
    #allocation6 [shape = 'u8[65536]{0}', space=vmem, size = 0x10000, scoped, tag = 'input window, operand 6, single buffered']
    #allocation7 [shape = 's32[1]{0}', space=sflag, size = 0x4, scoped, tag = 'scoped memory for tpu_custom_call.1']
    #allocation8 [shape = 'u8[4096]{0}', space=vmem, size = 0x1000, scoped, tag = 'output window, operand 0, single buffered']
    %13 = vsyncpa [#allocation4], 0
    %14 = vsyncpa [#allocation7], 0
    %15 = vsyncpa [#allocation5], 0
    // Predicated region
    $region2: #{tpu_custom_call.1} parent=1 // pred_check
      _
    $region3: #{tpu_custom_call.1} parent=1 // pred_check_branch
      %17 = sbr.rel (0) target = $region5
    $region4: #{tpu_custom_call.1} parent=1 // pred_region
      _
    $region5: #{tpu_custom_call.1} parent=1 // pred_fallthru
      _
    // Predicated region
    $region6: #{tpu_custom_call.1} parent=1 // pred_check
      _
    $region7: #{tpu_custom_call.1} parent=1 // pred_check_branch
      %19 = sbr.rel (0) target = $region9
    $region8: #{tpu_custom_call.1} parent=1 // pred_region
      _
    $region9: #{tpu_custom_call.1} parent=1 // pred_fallthru
      _
    // Predicated region
    $region10: #{tpu_custom_call.1} parent=1 // pred_check
      _
    $region11: #{tpu_custom_call.1} parent=1 // pred_check_branch
      %21 = sbr.rel (0) target = $region13
    $region12: #{tpu_custom_call.1} parent=1 // pred_region
      _
    $region13: #{tpu_custom_call.1} parent=1 // pred_fallthru
      _
    // Predicated region
    $region14: #{tpu_custom_call.1} parent=1 // pred_check
      _
    $region15: #{tpu_custom_call.1} parent=1 // pred_check_branch
      %23 = sbr.rel (0) target = $region17
    $region16: #{tpu_custom_call.1} parent=1 // pred_region
      _
    $region17: #{tpu_custom_call.1} parent=1 // pred_fallthru
      _
    // Predicated region
    $region18: #{tpu_custom_call.1} parent=1 // pred_check
      _
    $region19: #{tpu_custom_call.1} parent=1 // pred_check_branch
      %25 = sbr.rel (0) target = $region21
    $region20: #{tpu_custom_call.1} parent=1 // pred_region
      %s27 = ssub.s32 8192, 8192
      %28 = vsyncadd [#allocation4], %s27
      %s29 = sshll.u32 [#allocation3], 4
      %s30 = int_to_ptr.vmem [resolvable:$true] %s29
      %35 = dma.hbm_to_vmem [thread:$0]  %s4, 8192, %s30, [#allocation4], 512, 512, 32
    $region21: #{tpu_custom_call.1} parent=1 // pred_fallthru
      _
    // Predicated region
    $region22: #{tpu_custom_call.1} parent=1 // pred_check
      _
    $region23: #{tpu_custom_call.1} parent=1 // pred_check_branch
      %37 = sbr.rel (0) target = $region25
    $region24: #{tpu_custom_call.1} parent=1 // pred_region
      _
    $region25: #{tpu_custom_call.1} parent=1 // pred_fallthru
      _
    // Predicated region
    $region26: #{tpu_custom_call.1} parent=1 // pred_check
      _
    $region27: #{tpu_custom_call.1} parent=1 // pred_check_branch
      %39 = sbr.rel (0) target = $region29
    $region28: #{tpu_custom_call.1} parent=1 // pred_region
      %s41 = ssub.s32 2048, 2048
      %42 = vsyncadd [#allocation7], %s41
      %s43 = sshll.u32 [#allocation6], 4
      %s44 = int_to_ptr.vmem [resolvable:$true] %s43
      %49 = dma.hbm_to_vmem [thread:$0]  %s6, 2048, %s44, [#allocation7], 128, 128, 8
    $region29: #{tpu_custom_call.1} parent=1 // pred_fallthru
      _
    // Predicated region
    $region30: #{tpu_custom_call.1} parent=1 // pred_check
      _
    $region31: #{tpu_custom_call.1} parent=1 // pred_check_branch
      %51 = sbr.rel (0) target = $region33
    $region32: #{tpu_custom_call.1} parent=1 // pred_region
      _
    $region33: #{tpu_custom_call.1} parent=1 // pred_fallthru
      _
    // Predicated region
    $region34: #{tpu_custom_call.1} parent=1 // pred_check
      _
    $region35: #{tpu_custom_call.1} parent=1 // pred_check_branch
      %53 = sbr.rel (0) target = $region37
    $region36: #{tpu_custom_call.1} parent=1 // pred_region
      %54 = dma.done [#allocation4], 8192
    $region37: #{tpu_custom_call.1} parent=1 // pred_fallthru
      _
    // Predicated region
    $region38: #{tpu_custom_call.1} parent=1 // pred_check
      _
    $region39: #{tpu_custom_call.1} parent=1 // pred_check_branch
      %56 = sbr.rel (0) target = $region41
    $region40: #{tpu_custom_call.1} parent=1 // pred_region
      %57 = dma.done [#allocation7], 2048
    $region41: #{tpu_custom_call.1} parent=1 // pred_fallthru
      _
    %v58 = vld [vmem:[%s0] sm:$0xff]
    %v59 = vld [vmem:[%s0 + $0x8] sm:$0xff]
    %v60 = vld [vmem:[%s0 + $0x10] sm:$0xff]
    %v61 = vld [vmem:[%s0 + $0x18] sm:$0xff]
    %v62 = vld [vmem:[%s0 + $0x20] sm:$0xff]
    %v63 = vld [vmem:[%s0 + $0x28] sm:$0xff]
    %v64 = vld [vmem:[%s0 + $0x30] sm:$0xff]
    %v65 = vld [vmem:[%s0 + $0x38] sm:$0xff]
    %v66 = vld [vmem:[%s0 + $0x40] sm:$0xff]
    %v67 = vld [vmem:[%s0 + $0x48] sm:$0xff]
    %v68 = vld [vmem:[%s0 + $0x50] sm:$0xff]
    %v69 = vld [vmem:[%s0 + $0x58] sm:$0xff]
    %v70 = vld [vmem:[%s0 + $0x60] sm:$0xff]
    %v71 = vld [vmem:[%s0 + $0x68] sm:$0xff]
    %v72 = vld [vmem:[%s0 + $0x70] sm:$0xff]
    %v73 = vld [vmem:[%s0 + $0x78] sm:$0xff]
    %v74 = vld [vmem:[%s1] sm:$0x7]
    %v75 = vld [vmem:[%s2] sm:$0x1]
    %v77 = vlaneseq
    %v78 = vshrl.u32 %v77, 7
    %v79 = vsub.s32 0, %v78
    %v80 = vrot.slane %v75, %v79
    %vm82 = vcmask 23552
    %v84 = vsel %vm82, %v58, 0
    %v87 = vsel %vm82, %v59, 0
    %v90 = vsel %vm82, %v60, 0
    %v93 = vsel %vm82, %v61, 0
    %v96 = vsel %vm82, %v62, 0
    %v99 = vsel %vm82, %v63, 0
    %v102 = vsel %vm82, %v64, 0
    %v105 = vsel %vm82, %v65, 0
    %v108 = vsel %vm82, %v66, 0
    %v111 = vsel %vm82, %v67, 0
    %v114 = vsel %vm82, %v68, 0
    %v117 = vsel %vm82, %v69, 0
    %v120 = vsel %vm82, %v70, 0
    %v123 = vsel %vm82, %v71, 0
    %v126 = vsel %vm82, %v72, 0
    %v129 = vsel %vm82, %v73, 0
    %vm131 = vcmask 1042432
    %v133 = vsel %vm131, %v74, 0
    %135 = vmatprep.subr.mxu0 0.0
    %136 = vmatpush1.msra.mxu0 0.0
    %137 = vmatprep.subr.mxu0 0.0
    %138 = vmatpush1.msra.mxu0 0.0
    %139 = vmatprep.subr.mxu0 0.0
    %140 = vmatpush1.msra.mxu0 0.0
    %141 = vmatprep.subr.mxu0 0.0
    %142 = vmatpush1.msra.mxu0 0.0
    %143 = vmatprep.subr.mxu0 0.0
    %144 = vmatpush1.msra.mxu0 0.0
    %145 = vmatprep.subr.mxu0 0.0
    %146 = vmatpush1.msra.mxu0 0.0
    %147 = vmatprep.subr.mxu0 0.0
    %148 = vmatpush1.msra.mxu0 0.0
    %149 = vmatprep.subr.mxu0 0.0
    %150 = vmatpush1.msra.mxu0 0.0
    %151 = vmatprep.subr.mxu0 0.0
    %152 = vmatpush1.msra.mxu0 0.0
    %153 = vmatprep.subr.mxu0 0.0
    %154 = vmatpush1.msra.mxu0 0.0
    %155 = vmatprep.subr.mxu0 0.0
    %156 = vmatpush1.msra.mxu0 0.0
    %157 = vmatprep.subr.mxu0 0.0
    %158 = vmatpush1.msra.mxu0 0.0
    %159 = vmatprep.subr.mxu0 0.0
    %160 = vmatpush1.msra.mxu0 0.0
    %161 = vmatprep.subr.mxu0 0.0
    %162 = vmatpush1.msra.mxu0 0.0
    %163 = vmatprep.subr.mxu0 0.0
    %164 = vmatpush1.msra.mxu0 0.0
    %165 = vmatprep.subr.mxu0 0.0
    %166 = vmatpush1.msra.mxu0 %v133
    %167 = vmatprep.subr.mxu0 0.0
    %168 = vmatpush2.msra.mxu0 0.0
    %169 = vmatprep.subr.mxu0 0.0
    %170 = vmatpush2.msra.mxu0 0.0
    %171 = vmatprep.subr.mxu0 0.0
    %172 = vmatpush2.msra.mxu0 0.0
    %173 = vmatprep.subr.mxu0 0.0
    %174 = vmatpush2.msra.mxu0 0.0
    %175 = vmatprep.subr.mxu0 0.0
    %176 = vmatpush2.msra.mxu0 0.0
    %177 = vmatprep.subr.mxu0 0.0
    %178 = vmatpush2.msra.mxu0 0.0
    %179 = vmatprep.subr.mxu0 0.0
    %180 = vmatpush2.msra.mxu0 0.0
    %181 = vmatprep.subr.mxu0 0.0
    %182 = vmatpush2.msra.mxu0 0.0
    %183 = vmatprep.subr.mxu0 0.0
    %184 = vmatpush2.msra.mxu0 0.0
    %185 = vmatprep.subr.mxu0 0.0
    %186 = vmatpush2.msra.mxu0 0.0
    %187 = vmatprep.subr.mxu0 0.0
    %188 = vmatpush2.msra.mxu0 0.0
    %189 = vmatprep.subr.mxu0 0.0
    %190 = vmatpush2.msra.mxu0 0.0
    %191 = vmatprep.subr.mxu0 0.0
    %192 = vmatpush2.msra.mxu0 0.0
    %193 = vmatprep.subr.mxu0 0.0
    %194 = vmatpush2.msra.mxu0 0.0
    %195 = vmatprep.subr.mxu0 0.0
    %196 = vmatpush2.msra.mxu0 0.0
    %197 = vmatprep.subr.mxu0 0.0
    %198 = vmatpush2.msra.mxu0 0.0
    %199 = vmatprep.mubr.f32.mxu0 0.0
    %200 = vmatmul.mubr.f32.gmra.mxu0 %v84
    %v201 = vpop.f32.mrf.mxu0
    %v202 = vadd.f32 %v80, %v201
    %v203 = vpop.f32.mrf.mxu0
    %204 = vmatprep.mubr.f32.mxu0 0.0
    %205 = vmatmul.mubr.f32.gmra.mxu0 %v87
    %v206 = vpop.f32.mrf.mxu0
    %v207 = vadd.f32 %v80, %v206
    %v208 = vpop.f32.mrf.mxu0
    %209 = vmatprep.mubr.f32.mxu0 0.0
    %210 = vmatmul.mubr.f32.gmra.mxu0 %v90
    %v211 = vpop.f32.mrf.mxu0
    %v212 = vadd.f32 %v80, %v211
    %v213 = vpop.f32.mrf.mxu0
    %214 = vmatprep.mubr.f32.mxu0 0.0
    %215 = vmatmul.mubr.f32.gmra.mxu0 %v93
    %v216 = vpop.f32.mrf.mxu0
    %v217 = vadd.f32 %v80, %v216
    %v218 = vpop.f32.mrf.mxu0
    %219 = vmatprep.mubr.f32.mxu0 0.0
    %220 = vmatmul.mubr.f32.gmra.mxu0 %v96
    %v221 = vpop.f32.mrf.mxu0
    %v222 = vadd.f32 %v80, %v221
    %v223 = vpop.f32.mrf.mxu0
    %224 = vmatprep.mubr.f32.mxu0 0.0
    %225 = vmatmul.mubr.f32.gmra.mxu0 %v99
    %v226 = vpop.f32.mrf.mxu0
    %v227 = vadd.f32 %v80, %v226
    %v228 = vpop.f32.mrf.mxu0
    %229 = vmatprep.mubr.f32.mxu0 0.0
    %230 = vmatmul.mubr.f32.gmra.mxu0 %v102
    %v231 = vpop.f32.mrf.mxu0
    %v232 = vadd.f32 %v80, %v231
    %v233 = vpop.f32.mrf.mxu0
    %234 = vmatprep.mubr.f32.mxu0 0.0
    %235 = vmatmul.mubr.f32.gmra.mxu0 %v105
    %v236 = vpop.f32.mrf.mxu0
    %v237 = vadd.f32 %v80, %v236
    %v238 = vpop.f32.mrf.mxu0
    %239 = vmatprep.mubr.f32.mxu0 0.0
    %240 = vmatmul.mubr.f32.gmra.mxu0 %v108
    %v241 = vpop.f32.mrf.mxu0
    %v242 = vadd.f32 %v80, %v241
    %v243 = vpop.f32.mrf.mxu0
    %244 = vmatprep.mubr.f32.mxu0 0.0
    %245 = vmatmul.mubr.f32.gmra.mxu0 %v111
    %v246 = vpop.f32.mrf.mxu0
    %v247 = vadd.f32 %v80, %v246
    %v248 = vpop.f32.mrf.mxu0
    %249 = vmatprep.mubr.f32.mxu0 0.0
    %250 = vmatmul.mubr.f32.gmra.mxu0 %v114
    %v251 = vpop.f32.mrf.mxu0
    %v252 = vadd.f32 %v80, %v251
    %v253 = vpop.f32.mrf.mxu0
    %254 = vmatprep.mubr.f32.mxu0 0.0
    %255 = vmatmul.mubr.f32.gmra.mxu0 %v117
    %v256 = vpop.f32.mrf.mxu0
    %v257 = vadd.f32 %v80, %v256
    %v258 = vpop.f32.mrf.mxu0
    %259 = vmatprep.mubr.f32.mxu0 0.0
    %260 = vmatmul.mubr.f32.gmra.mxu0 %v120
    %v261 = vpop.f32.mrf.mxu0
    %v262 = vadd.f32 %v80, %v261
    %v263 = vpop.f32.mrf.mxu0
    %264 = vmatprep.mubr.f32.mxu0 0.0
    %265 = vmatmul.mubr.f32.gmra.mxu0 %v123
    %v266 = vpop.f32.mrf.mxu0
    %v267 = vadd.f32 %v80, %v266
    %v268 = vpop.f32.mrf.mxu0
    %269 = vmatprep.mubr.f32.mxu0 0.0
    %270 = vmatmul.mubr.f32.gmra.mxu0 %v126
    %v271 = vpop.f32.mrf.mxu0
    %v272 = vadd.f32 %v80, %v271
    %v273 = vpop.f32.mrf.mxu0
    %274 = vmatprep.mubr.f32.mxu0 0.0
    %275 = vmatmul.mubr.f32.gmra.mxu0 %v129
    %v276 = vpop.f32.mrf.mxu0
    %v277 = vadd.f32 %v80, %v276
    %v278 = vpop.f32.mrf.mxu0
    %279 = vdwg.mxu0
    %v280 = vmax.f32 %v202, 0.0
    %v281 = vmax.f32 %v207, 0.0
    %v282 = vmax.f32 %v212, 0.0
    %v283 = vmax.f32 %v217, 0.0
    %v284 = vmax.f32 %v222, 0.0
    %v285 = vmax.f32 %v227, 0.0
    %v286 = vmax.f32 %v232, 0.0
    %v287 = vmax.f32 %v237, 0.0
    %v288 = vmax.f32 %v242, 0.0
    %v289 = vmax.f32 %v247, 0.0
    %v290 = vmax.f32 %v252, 0.0
    %v291 = vmax.f32 %v257, 0.0
    %v292 = vmax.f32 %v262, 0.0
    %v293 = vmax.f32 %v267, 0.0
    %v294 = vmax.f32 %v272, 0.0
    %v295 = vmax.f32 %v277, 0.0
    %v296 = vld [vmem:[%s3] sm:$0xff]
    %v297 = vld [vmem:[%s3 + $0x8] sm:$0xff]
    %v298 = vld [vmem:[%s3 + $0x10] sm:$0xff]
    %v299 = vld [vmem:[%s3 + $0x18] sm:$0xff]
    %v300 = vld [vmem:[%s3 + $0x20] sm:$0xff]
    %v301 = vld [vmem:[%s3 + $0x28] sm:$0xff]
    %v302 = vld [vmem:[%s3 + $0x30] sm:$0xff]
    %v303 = vld [vmem:[%s3 + $0x38] sm:$0xff]
    %v304 = vld [vmem:[%s3 + $0x40] sm:$0xff]
    %v305 = vld [vmem:[%s3 + $0x48] sm:$0xff]
    %v306 = vld [vmem:[%s3 + $0x50] sm:$0xff]
    %v307 = vld [vmem:[%s3 + $0x58] sm:$0xff]
    %v308 = vld [vmem:[%s3 + $0x60] sm:$0xff]
    %v309 = vld [vmem:[%s3 + $0x68] sm:$0xff]
    %v310 = vld [vmem:[%s3 + $0x70] sm:$0xff]
    %v311 = vld [vmem:[%s3 + $0x78] sm:$0xff]
    %v312 = vld [vmem:[%s5] sm:$0xf]
    %v314 = vlaneseq
    %v315 = vshrl.u32 %v314, 7
    %v316 = vsub.s32 0, %v315
    %v317 = vrot.slane %v312, %v316
    %v318 = vlaneseq
    %v319 = vshrl.u32 %v318, 7
    %v320 = vsub.s32 1, %v319
    %v321 = vrot.slane %v312, %v320
    %v322 = vlaneseq
    %v323 = vshrl.u32 %v322, 7
    %v324 = vsub.s32 2, %v323
    %v325 = vrot.slane %v312, %v324
    %v326 = vlaneseq
    %v327 = vshrl.u32 %v326, 7
    %v328 = vsub.s32 3, %v327
    %v329 = vrot.slane %v312, %v328
    %vm334 = vcmask 261120
    %v336 = vsel %vm334, %v280, 0
    %v339 = vsel %vm334, %v281, 0
    %v342 = vsel %vm334, %v282, 0
    %v345 = vsel %vm334, %v283, 0
    %v348 = vsel %vm334, %v284, 0
    %v351 = vsel %vm334, %v285, 0
    %v354 = vsel %vm334, %v286, 0
    %v357 = vsel %vm334, %v287, 0
    %v360 = vsel %vm334, %v288, 0
    %v363 = vsel %vm334, %v289, 0
    %v366 = vsel %vm334, %v290, 0
    %v369 = vsel %vm334, %v291, 0
    %v372 = vsel %vm334, %v292, 0
    %v375 = vsel %vm334, %v293, 0
    %v378 = vsel %vm334, %v294, 0
    %v381 = vsel %vm334, %v295, 0
    %383 = vmatprep.subr.mxu0 0.0
    %384 = vmatpush1.msra.mxu0 0.0
    %385 = vmatprep.subr.mxu0 0.0
    %386 = vmatpush1.msra.mxu0 0.0
    %387 = vmatprep.subr.mxu0 0.0
    %388 = vmatpush1.msra.mxu0 0.0
    %389 = vmatprep.subr.mxu0 0.0
    %390 = vmatpush1.msra.mxu0 0.0
    %391 = vmatprep.subr.mxu0 0.0
    %392 = vmatpush1.msra.mxu0 0.0
    %393 = vmatprep.subr.mxu0 0.0
    %394 = vmatpush1.msra.mxu0 0.0
    %395 = vmatprep.subr.mxu0 0.0
    %396 = vmatpush1.msra.mxu0 0.0
    %397 = vmatprep.subr.mxu0 0.0
    %398 = vmatpush1.msra.mxu0 0.0
    %399 = vmatprep.subr.mxu0 0.0
    %400 = vmatpush1.msra.mxu0 0.0
    %401 = vmatprep.subr.mxu0 0.0
    %402 = vmatpush1.msra.mxu0 0.0
    %403 = vmatprep.subr.mxu0 0.0
    %404 = vmatpush1.msra.mxu0 0.0
    %405 = vmatprep.subr.mxu0 0.0
    %406 = vmatpush1.msra.mxu0 0.0
    %407 = vmatprep.subr.mxu0 %v309
    %408 = vmatpush1.msra.mxu0 %v308
    %409 = vmatprep.subr.mxu0 %v305
    %410 = vmatpush1.msra.mxu0 %v304
    %411 = vmatprep.subr.mxu0 %v301
    %412 = vmatpush1.msra.mxu0 %v300
    %413 = vmatprep.subr.mxu0 %v297
    %414 = vmatpush1.msra.mxu0 %v296
    %415 = vmatprep.subr.mxu0 0.0
    %416 = vmatpush2.msra.mxu0 0.0
    %417 = vmatprep.subr.mxu0 0.0
    %418 = vmatpush2.msra.mxu0 0.0
    %419 = vmatprep.subr.mxu0 0.0
    %420 = vmatpush2.msra.mxu0 0.0
    %421 = vmatprep.subr.mxu0 0.0
    %422 = vmatpush2.msra.mxu0 0.0
    %423 = vmatprep.subr.mxu0 0.0
    %424 = vmatpush2.msra.mxu0 0.0
    %425 = vmatprep.subr.mxu0 0.0
    %426 = vmatpush2.msra.mxu0 0.0
    %427 = vmatprep.subr.mxu0 0.0
    %428 = vmatpush2.msra.mxu0 0.0
    %429 = vmatprep.subr.mxu0 0.0
    %430 = vmatpush2.msra.mxu0 0.0
    %431 = vmatprep.subr.mxu0 0.0
    %432 = vmatpush2.msra.mxu0 0.0
    %433 = vmatprep.subr.mxu0 0.0
    %434 = vmatpush2.msra.mxu0 0.0
    %435 = vmatprep.subr.mxu0 0.0
    %436 = vmatpush2.msra.mxu0 0.0
    %437 = vmatprep.subr.mxu0 0.0
    %438 = vmatpush2.msra.mxu0 0.0
    %439 = vmatprep.subr.mxu0 0.0
    %440 = vmatpush2.msra.mxu0 0.0
    %441 = vmatprep.subr.mxu0 0.0
    %442 = vmatpush2.msra.mxu0 0.0
    %443 = vmatprep.subr.mxu0 0.0
    %444 = vmatpush2.msra.mxu0 0.0
    %445 = vmatprep.subr.mxu0 0.0
    %446 = vmatpush2.msra.mxu0 0.0
    %447 = vmatprep.mubr.f32.mxu0 0.0
    %448 = vmatmul.mubr.f32.gmra.mxu0 %v336
    %v449 = vpop.f32.mrf.mxu0
    %v450 = vadd.f32 %v317, %v449
    %v451 = vpop.f32.mrf.mxu0
    %v452 = vadd.f32 %v321, %v451
    %453 = vmatprep.mubr.f32.mxu0 0.0
    %454 = vmatmul.mubr.f32.gmra.mxu0 %v339
    %v455 = vpop.f32.mrf.mxu0
    %v456 = vadd.f32 %v317, %v455
    %v457 = vpop.f32.mrf.mxu0
    %v458 = vadd.f32 %v321, %v457
    %459 = vmatprep.mubr.f32.mxu0 0.0
    %460 = vmatmul.mubr.f32.gmra.mxu0 %v342
    %v461 = vpop.f32.mrf.mxu0
    %v462 = vadd.f32 %v317, %v461
    %v463 = vpop.f32.mrf.mxu0
    %v464 = vadd.f32 %v321, %v463
    %465 = vmatprep.mubr.f32.mxu0 0.0
    %466 = vmatmul.mubr.f32.gmra.mxu0 %v345
    %v467 = vpop.f32.mrf.mxu0
    %v468 = vadd.f32 %v317, %v467
    %v469 = vpop.f32.mrf.mxu0
    %v470 = vadd.f32 %v321, %v469
    %471 = vmatprep.mubr.f32.mxu0 0.0
    %472 = vmatmul.mubr.f32.gmra.mxu0 %v348
    %v473 = vpop.f32.mrf.mxu0
    %v474 = vadd.f32 %v317, %v473
    %v475 = vpop.f32.mrf.mxu0
    %v476 = vadd.f32 %v321, %v475
    %477 = vmatprep.mubr.f32.mxu0 0.0
    %478 = vmatmul.mubr.f32.gmra.mxu0 %v351
    %v479 = vpop.f32.mrf.mxu0
    %v480 = vadd.f32 %v317, %v479
    %v481 = vpop.f32.mrf.mxu0
    %v482 = vadd.f32 %v321, %v481
    %483 = vmatprep.mubr.f32.mxu0 0.0
    %484 = vmatmul.mubr.f32.gmra.mxu0 %v354
    %v485 = vpop.f32.mrf.mxu0
    %v486 = vadd.f32 %v317, %v485
    %v487 = vpop.f32.mrf.mxu0
    %v488 = vadd.f32 %v321, %v487
    %489 = vmatprep.mubr.f32.mxu0 0.0
    %490 = vmatmul.mubr.f32.gmra.mxu0 %v357
    %v491 = vpop.f32.mrf.mxu0
    %v492 = vadd.f32 %v317, %v491
    %v493 = vpop.f32.mrf.mxu0
    %v494 = vadd.f32 %v321, %v493
    %495 = vmatprep.mubr.f32.mxu0 0.0
    %496 = vmatmul.mubr.f32.gmra.mxu0 %v360
    %v497 = vpop.f32.mrf.mxu0
    %v498 = vadd.f32 %v317, %v497
    %v499 = vpop.f32.mrf.mxu0
    %v500 = vadd.f32 %v321, %v499
    %501 = vmatprep.mubr.f32.mxu0 0.0
    %502 = vmatmul.mubr.f32.gmra.mxu0 %v363
    %v503 = vpop.f32.mrf.mxu0
    %v504 = vadd.f32 %v317, %v503
    %v505 = vpop.f32.mrf.mxu0
    %v506 = vadd.f32 %v321, %v505
    %507 = vmatprep.mubr.f32.mxu0 0.0
    %508 = vmatmul.mubr.f32.gmra.mxu0 %v366
    %v509 = vpop.f32.mrf.mxu0
    %v510 = vadd.f32 %v317, %v509
    %v511 = vpop.f32.mrf.mxu0
    %v512 = vadd.f32 %v321, %v511
    %513 = vmatprep.mubr.f32.mxu0 0.0
    %514 = vmatmul.mubr.f32.gmra.mxu0 %v369
    %v515 = vpop.f32.mrf.mxu0
    %v516 = vadd.f32 %v317, %v515
    %v517 = vpop.f32.mrf.mxu0
    %v518 = vadd.f32 %v321, %v517
    %519 = vmatprep.mubr.f32.mxu0 0.0
    %520 = vmatmul.mubr.f32.gmra.mxu0 %v372
    %v521 = vpop.f32.mrf.mxu0
    %v522 = vadd.f32 %v317, %v521
    %v523 = vpop.f32.mrf.mxu0
    %v524 = vadd.f32 %v321, %v523
    %525 = vmatprep.mubr.f32.mxu0 0.0
    %526 = vmatmul.mubr.f32.gmra.mxu0 %v375
    %v527 = vpop.f32.mrf.mxu0
    %v528 = vadd.f32 %v317, %v527
    %v529 = vpop.f32.mrf.mxu0
    %v530 = vadd.f32 %v321, %v529
    %531 = vmatprep.mubr.f32.mxu0 0.0
    %532 = vmatmul.mubr.f32.gmra.mxu0 %v378
    %v533 = vpop.f32.mrf.mxu0
    %v534 = vadd.f32 %v317, %v533
    %v535 = vpop.f32.mrf.mxu0
    %v536 = vadd.f32 %v321, %v535
    %537 = vmatprep.mubr.f32.mxu0 0.0
    %538 = vmatmul.mubr.f32.gmra.mxu0 %v381
    %v539 = vpop.f32.mrf.mxu0
    %v540 = vadd.f32 %v317, %v539
    %v541 = vpop.f32.mrf.mxu0
    %v542 = vadd.f32 %v321, %v541
    %543 = vdwg.mxu0
    %544 = vmatprep.subr.mxu0 0.0
    %545 = vmatpush1.msra.mxu0 0.0
    %546 = vmatprep.subr.mxu0 0.0
    %547 = vmatpush1.msra.mxu0 0.0
    %548 = vmatprep.subr.mxu0 0.0
    %549 = vmatpush1.msra.mxu0 0.0
    %550 = vmatprep.subr.mxu0 0.0
    %551 = vmatpush1.msra.mxu0 0.0
    %552 = vmatprep.subr.mxu0 0.0
    %553 = vmatpush1.msra.mxu0 0.0
    %554 = vmatprep.subr.mxu0 0.0
    %555 = vmatpush1.msra.mxu0 0.0
    %556 = vmatprep.subr.mxu0 0.0
    %557 = vmatpush1.msra.mxu0 0.0
    %558 = vmatprep.subr.mxu0 0.0
    %559 = vmatpush1.msra.mxu0 0.0
    %560 = vmatprep.subr.mxu0 0.0
    %561 = vmatpush1.msra.mxu0 0.0
    %562 = vmatprep.subr.mxu0 0.0
    %563 = vmatpush1.msra.mxu0 0.0
    %564 = vmatprep.subr.mxu0 0.0
    %565 = vmatpush1.msra.mxu0 0.0
    %566 = vmatprep.subr.mxu0 0.0
    %567 = vmatpush1.msra.mxu0 0.0
    %568 = vmatprep.subr.mxu0 %v311
    %569 = vmatpush1.msra.mxu0 %v310
    %570 = vmatprep.subr.mxu0 %v307
    %571 = vmatpush1.msra.mxu0 %v306
    %572 = vmatprep.subr.mxu0 %v303
    %573 = vmatpush1.msra.mxu0 %v302
    %574 = vmatprep.subr.mxu0 %v299
    %575 = vmatpush1.msra.mxu0 %v298
    %576 = vmatprep.subr.mxu0 0.0
    %577 = vmatpush2.msra.mxu0 0.0
    %578 = vmatprep.subr.mxu0 0.0
    %579 = vmatpush2.msra.mxu0 0.0
    %580 = vmatprep.subr.mxu0 0.0
    %581 = vmatpush2.msra.mxu0 0.0
    %582 = vmatprep.subr.mxu0 0.0
    %583 = vmatpush2.msra.mxu0 0.0
    %584 = vmatprep.subr.mxu0 0.0
    %585 = vmatpush2.msra.mxu0 0.0
    %586 = vmatprep.subr.mxu0 0.0
    %587 = vmatpush2.msra.mxu0 0.0
    %588 = vmatprep.subr.mxu0 0.0
    %589 = vmatpush2.msra.mxu0 0.0
    %590 = vmatprep.subr.mxu0 0.0
    %591 = vmatpush2.msra.mxu0 0.0
    %592 = vmatprep.subr.mxu0 0.0
    %593 = vmatpush2.msra.mxu0 0.0
    %594 = vmatprep.subr.mxu0 0.0
    %595 = vmatpush2.msra.mxu0 0.0
    %596 = vmatprep.subr.mxu0 0.0
    %597 = vmatpush2.msra.mxu0 0.0
    %598 = vmatprep.subr.mxu0 0.0
    %599 = vmatpush2.msra.mxu0 0.0
    %600 = vmatprep.subr.mxu0 0.0
    %601 = vmatpush2.msra.mxu0 0.0
    %602 = vmatprep.subr.mxu0 0.0
    %603 = vmatpush2.msra.mxu0 0.0
    %604 = vmatprep.subr.mxu0 0.0
    %605 = vmatpush2.msra.mxu0 0.0
    %606 = vmatprep.subr.mxu0 0.0
    %607 = vmatpush2.msra.mxu0 0.0
    %608 = vmatprep.mubr.f32.mxu0 0.0
    %609 = vmatmul.mubr.f32.gmra.mxu0 %v336
    %v610 = vpop.f32.mrf.mxu0
    %v611 = vadd.f32 %v325, %v610
    %v612 = vpop.f32.mrf.mxu0
    %v613 = vadd.f32 %v329, %v612
    %614 = vmatprep.mubr.f32.mxu0 0.0
    %615 = vmatmul.mubr.f32.gmra.mxu0 %v339
    %v616 = vpop.f32.mrf.mxu0
    %v617 = vadd.f32 %v325, %v616
    %v618 = vpop.f32.mrf.mxu0
    %v619 = vadd.f32 %v329, %v618
    %620 = vmatprep.mubr.f32.mxu0 0.0
    %621 = vmatmul.mubr.f32.gmra.mxu0 %v342
    %v622 = vpop.f32.mrf.mxu0
    %v623 = vadd.f32 %v325, %v622
    %v624 = vpop.f32.mrf.mxu0
    %v625 = vadd.f32 %v329, %v624
    %626 = vmatprep.mubr.f32.mxu0 0.0
    %627 = vmatmul.mubr.f32.gmra.mxu0 %v345
    %v628 = vpop.f32.mrf.mxu0
    %v629 = vadd.f32 %v325, %v628
    %v630 = vpop.f32.mrf.mxu0
    %v631 = vadd.f32 %v329, %v630
    %632 = vmatprep.mubr.f32.mxu0 0.0
    %633 = vmatmul.mubr.f32.gmra.mxu0 %v348
    %v634 = vpop.f32.mrf.mxu0
    %v635 = vadd.f32 %v325, %v634
    %v636 = vpop.f32.mrf.mxu0
    %v637 = vadd.f32 %v329, %v636
    %638 = vmatprep.mubr.f32.mxu0 0.0
    %639 = vmatmul.mubr.f32.gmra.mxu0 %v351
    %v640 = vpop.f32.mrf.mxu0
    %v641 = vadd.f32 %v325, %v640
    %v642 = vpop.f32.mrf.mxu0
    %v643 = vadd.f32 %v329, %v642
    %644 = vmatprep.mubr.f32.mxu0 0.0
    %645 = vmatmul.mubr.f32.gmra.mxu0 %v354
    %v646 = vpop.f32.mrf.mxu0
    %v647 = vadd.f32 %v325, %v646
    %v648 = vpop.f32.mrf.mxu0
    %v649 = vadd.f32 %v329, %v648
    %650 = vmatprep.mubr.f32.mxu0 0.0
    %651 = vmatmul.mubr.f32.gmra.mxu0 %v357
    %v652 = vpop.f32.mrf.mxu0
    %v653 = vadd.f32 %v325, %v652
    %v654 = vpop.f32.mrf.mxu0
    %v655 = vadd.f32 %v329, %v654
    %656 = vmatprep.mubr.f32.mxu0 0.0
    %657 = vmatmul.mubr.f32.gmra.mxu0 %v360
    %v658 = vpop.f32.mrf.mxu0
    %v659 = vadd.f32 %v325, %v658
    %v660 = vpop.f32.mrf.mxu0
    %v661 = vadd.f32 %v329, %v660
    %662 = vmatprep.mubr.f32.mxu0 0.0
    %663 = vmatmul.mubr.f32.gmra.mxu0 %v363
    %v664 = vpop.f32.mrf.mxu0
    %v665 = vadd.f32 %v325, %v664
    %v666 = vpop.f32.mrf.mxu0
    %v667 = vadd.f32 %v329, %v666
    %668 = vmatprep.mubr.f32.mxu0 0.0
    %669 = vmatmul.mubr.f32.gmra.mxu0 %v366
    %v670 = vpop.f32.mrf.mxu0
    %v671 = vadd.f32 %v325, %v670
    %v672 = vpop.f32.mrf.mxu0
    %v673 = vadd.f32 %v329, %v672
    %674 = vmatprep.mubr.f32.mxu0 0.0
    %675 = vmatmul.mubr.f32.gmra.mxu0 %v369
    %v676 = vpop.f32.mrf.mxu0
    %v677 = vadd.f32 %v325, %v676
    %v678 = vpop.f32.mrf.mxu0
    %v679 = vadd.f32 %v329, %v678
    %680 = vmatprep.mubr.f32.mxu0 0.0
    %681 = vmatmul.mubr.f32.gmra.mxu0 %v372
    %v682 = vpop.f32.mrf.mxu0
    %v683 = vadd.f32 %v325, %v682
    %v684 = vpop.f32.mrf.mxu0
    %v685 = vadd.f32 %v329, %v684
    %686 = vmatprep.mubr.f32.mxu0 0.0
    %687 = vmatmul.mubr.f32.gmra.mxu0 %v375
    %v688 = vpop.f32.mrf.mxu0
    %v689 = vadd.f32 %v325, %v688
    %v690 = vpop.f32.mrf.mxu0
    %v691 = vadd.f32 %v329, %v690
    %692 = vmatprep.mubr.f32.mxu0 0.0
    %693 = vmatmul.mubr.f32.gmra.mxu0 %v378
    %v694 = vpop.f32.mrf.mxu0
    %v695 = vadd.f32 %v325, %v694
    %v696 = vpop.f32.mrf.mxu0
    %v697 = vadd.f32 %v329, %v696
    %698 = vmatprep.mubr.f32.mxu0 0.0
    %699 = vmatmul.mubr.f32.gmra.mxu0 %v381
    %v700 = vpop.f32.mrf.mxu0
    %v701 = vadd.f32 %v325, %v700
    %v702 = vpop.f32.mrf.mxu0
    %v703 = vadd.f32 %v329, %v702
    %704 = vdwg.mxu0
    %705 = vst [vmem:[#allocation2] sm:$0xff] %v450
    %706 = vst [vmem:[#allocation2 + $0x8] sm:$0xff] %v452
    %707 = vst [vmem:[#allocation2 + $0x10] sm:$0xff] %v611
    %708 = vst [vmem:[#allocation2 + $0x18] sm:$0xff] %v613
    %709 = vst [vmem:[#allocation2 + $0x20] sm:$0xff] %v456
    %710 = vst [vmem:[#allocation2 + $0x28] sm:$0xff] %v458
    %711 = vst [vmem:[#allocation2 + $0x30] sm:$0xff] %v617
    %712 = vst [vmem:[#allocation2 + $0x38] sm:$0xff] %v619
    %713 = vst [vmem:[#allocation2 + $0x40] sm:$0xff] %v462
    %714 = vst [vmem:[#allocation2 + $0x48] sm:$0xff] %v464
    %715 = vst [vmem:[#allocation2 + $0x50] sm:$0xff] %v623
    %716 = vst [vmem:[#allocation2 + $0x58] sm:$0xff] %v625
    %717 = vst [vmem:[#allocation2 + $0x60] sm:$0xff] %v468
    %718 = vst [vmem:[#allocation2 + $0x68] sm:$0xff] %v470
    %719 = vst [vmem:[#allocation2 + $0x70] sm:$0xff] %v629
    %720 = vst [vmem:[#allocation2 + $0x78] sm:$0xff] %v631
    %721 = vst [vmem:[#allocation2 + $0x80] sm:$0xff] %v474
    %722 = vst [vmem:[#allocation2 + $0x88] sm:$0xff] %v476
    %723 = vst [vmem:[#allocation2 + $0x90] sm:$0xff] %v635
    %724 = vst [vmem:[#allocation2 + $0x98] sm:$0xff] %v637
    %725 = vst [vmem:[#allocation2 + $0xa0] sm:$0xff] %v480
    %726 = vst [vmem:[#allocation2 + $0xa8] sm:$0xff] %v482
    %727 = vst [vmem:[#allocation2 + $0xb0] sm:$0xff] %v641
    %728 = vst [vmem:[#allocation2 + $0xb8] sm:$0xff] %v643
    %729 = vst [vmem:[#allocation2 + $0xc0] sm:$0xff] %v486
    %730 = vst [vmem:[#allocation2 + $0xc8] sm:$0xff] %v488
    %731 = vst [vmem:[#allocation2 + $0xd0] sm:$0xff] %v647
    %732 = vst [vmem:[#allocation2 + $0xd8] sm:$0xff] %v649
    %733 = vst [vmem:[#allocation2 + $0xe0] sm:$0xff] %v492
    %734 = vst [vmem:[#allocation2 + $0xe8] sm:$0xff] %v494
    %735 = vst [vmem:[#allocation2 + $0xf0] sm:$0xff] %v653
    %736 = vst [vmem:[#allocation2 + $0xf8] sm:$0xff] %v655
    %737 = vst [vmem:[#allocation2 + $0x100] sm:$0xff] %v498
    %738 = vst [vmem:[#allocation2 + $0x108] sm:$0xff] %v500
    %739 = vst [vmem:[#allocation2 + $0x110] sm:$0xff] %v659
    %740 = vst [vmem:[#allocation2 + $0x118] sm:$0xff] %v661
    %741 = vst [vmem:[#allocation2 + $0x120] sm:$0xff] %v504
    %742 = vst [vmem:[#allocation2 + $0x128] sm:$0xff] %v506
    %743 = vst [vmem:[#allocation2 + $0x130] sm:$0xff] %v665
    %744 = vst [vmem:[#allocation2 + $0x138] sm:$0xff] %v667
    %745 = vst [vmem:[#allocation2 + $0x140] sm:$0xff] %v510
    %746 = vst [vmem:[#allocation2 + $0x148] sm:$0xff] %v512
    %747 = vst [vmem:[#allocation2 + $0x150] sm:$0xff] %v671
    %748 = vst [vmem:[#allocation2 + $0x158] sm:$0xff] %v673
    %749 = vst [vmem:[#allocation2 + $0x160] sm:$0xff] %v516
    %750 = vst [vmem:[#allocation2 + $0x168] sm:$0xff] %v518
    %751 = vst [vmem:[#allocation2 + $0x170] sm:$0xff] %v677
    %752 = vst [vmem:[#allocation2 + $0x178] sm:$0xff] %v679
    %753 = vst [vmem:[#allocation2 + $0x180] sm:$0xff] %v522
    %754 = vst [vmem:[#allocation2 + $0x188] sm:$0xff] %v524
    %755 = vst [vmem:[#allocation2 + $0x190] sm:$0xff] %v683
    %756 = vst [vmem:[#allocation2 + $0x198] sm:$0xff] %v685
    %757 = vst [vmem:[#allocation2 + $0x1a0] sm:$0xff] %v528
    %758 = vst [vmem:[#allocation2 + $0x1a8] sm:$0xff] %v530
    %759 = vst [vmem:[#allocation2 + $0x1b0] sm:$0xff] %v689
    %760 = vst [vmem:[#allocation2 + $0x1b8] sm:$0xff] %v691
    %761 = vst [vmem:[#allocation2 + $0x1c0] sm:$0xff] %v534
    %762 = vst [vmem:[#allocation2 + $0x1c8] sm:$0xff] %v536
    %763 = vst [vmem:[#allocation2 + $0x1d0] sm:$0xff] %v695
    %764 = vst [vmem:[#allocation2 + $0x1d8] sm:$0xff] %v697
    %765 = vst [vmem:[#allocation2 + $0x1e0] sm:$0xff] %v540
    %766 = vst [vmem:[#allocation2 + $0x1e8] sm:$0xff] %v542
    %767 = vst [vmem:[#allocation2 + $0x1f0] sm:$0xff] %v701
    %768 = vst [vmem:[#allocation2 + $0x1f8] sm:$0xff] %v703
    %v769 = vld [vmem:[#allocation3] sm:$0xff]
    %v770 = vld [vmem:[#allocation3 + $0x8] sm:$0xff]
    %v771 = vld [vmem:[#allocation3 + $0x10] sm:$0xff]
    %v772 = vld [vmem:[#allocation3 + $0x18] sm:$0xff]
    %v773 = vld [vmem:[#allocation3 + $0x20] sm:$0xff]
    %v774 = vld [vmem:[#allocation3 + $0x28] sm:$0xff]
    %v775 = vld [vmem:[#allocation3 + $0x30] sm:$0xff]
    %v776 = vld [vmem:[#allocation3 + $0x38] sm:$0xff]
    %v777 = vld [vmem:[#allocation3 + $0x40] sm:$0xff]
    %v778 = vld [vmem:[#allocation3 + $0x48] sm:$0xff]
    %v779 = vld [vmem:[#allocation3 + $0x50] sm:$0xff]
    %v780 = vld [vmem:[#allocation3 + $0x58] sm:$0xff]
    %v781 = vld [vmem:[#allocation3 + $0x60] sm:$0xff]
    %v782 = vld [vmem:[#allocation3 + $0x68] sm:$0xff]
    %v783 = vld [vmem:[#allocation3 + $0x70] sm:$0xff]
    %v784 = vld [vmem:[#allocation3 + $0x78] sm:$0xff]
    %v785 = vld [vmem:[#allocation3 + $0x80] sm:$0xff]
    %v786 = vld [vmem:[#allocation3 + $0x88] sm:$0xff]
    %v787 = vld [vmem:[#allocation3 + $0x90] sm:$0xff]
    %v788 = vld [vmem:[#allocation3 + $0x98] sm:$0xff]
    %v789 = vld [vmem:[#allocation3 + $0xa0] sm:$0xff]
    %v790 = vld [vmem:[#allocation3 + $0xa8] sm:$0xff]
    %v791 = vld [vmem:[#allocation3 + $0xb0] sm:$0xff]
    %v792 = vld [vmem:[#allocation3 + $0xb8] sm:$0xff]
    %v793 = vld [vmem:[#allocation3 + $0xc0] sm:$0xff]
    %v794 = vld [vmem:[#allocation3 + $0xc8] sm:$0xff]
    %v795 = vld [vmem:[#allocation3 + $0xd0] sm:$0xff]
    %v796 = vld [vmem:[#allocation3 + $0xd8] sm:$0xff]
    %v797 = vld [vmem:[#allocation3 + $0xe0] sm:$0xff]
    %v798 = vld [vmem:[#allocation3 + $0xe8] sm:$0xff]
    %v799 = vld [vmem:[#allocation3 + $0xf0] sm:$0xff]
    %v800 = vld [vmem:[#allocation3 + $0xf8] sm:$0xff]
    %v801 = vld [vmem:[#allocation3 + $0x100] sm:$0xff]
    %v802 = vld [vmem:[#allocation3 + $0x108] sm:$0xff]
    %v803 = vld [vmem:[#allocation3 + $0x110] sm:$0xff]
    %v804 = vld [vmem:[#allocation3 + $0x118] sm:$0xff]
    %v805 = vld [vmem:[#allocation3 + $0x120] sm:$0xff]
    %v806 = vld [vmem:[#allocation3 + $0x128] sm:$0xff]
    %v807 = vld [vmem:[#allocation3 + $0x130] sm:$0xff]
    %v808 = vld [vmem:[#allocation3 + $0x138] sm:$0xff]
    %v809 = vld [vmem:[#allocation3 + $0x140] sm:$0xff]
    %v810 = vld [vmem:[#allocation3 + $0x148] sm:$0xff]
    %v811 = vld [vmem:[#allocation3 + $0x150] sm:$0xff]
    %v812 = vld [vmem:[#allocation3 + $0x158] sm:$0xff]
    %v813 = vld [vmem:[#allocation3 + $0x160] sm:$0xff]
    %v814 = vld [vmem:[#allocation3 + $0x168] sm:$0xff]
    %v815 = vld [vmem:[#allocation3 + $0x170] sm:$0xff]
    %v816 = vld [vmem:[#allocation3 + $0x178] sm:$0xff]
    %v817 = vld [vmem:[#allocation3 + $0x180] sm:$0xff]
    %v818 = vld [vmem:[#allocation3 + $0x188] sm:$0xff]
    %v819 = vld [vmem:[#allocation3 + $0x190] sm:$0xff]
    %v820 = vld [vmem:[#allocation3 + $0x198] sm:$0xff]
    %v821 = vld [vmem:[#allocation3 + $0x1a0] sm:$0xff]
    %v822 = vld [vmem:[#allocation3 + $0x1a8] sm:$0xff]
    %v823 = vld [vmem:[#allocation3 + $0x1b0] sm:$0xff]
    %v824 = vld [vmem:[#allocation3 + $0x1b8] sm:$0xff]
    %v825 = vld [vmem:[#allocation3 + $0x1c0] sm:$0xff]
    %v826 = vld [vmem:[#allocation3 + $0x1c8] sm:$0xff]
    %v827 = vld [vmem:[#allocation3 + $0x1d0] sm:$0xff]
    %v828 = vld [vmem:[#allocation3 + $0x1d8] sm:$0xff]
    %v829 = vld [vmem:[#allocation3 + $0x1e0] sm:$0xff]
    %v830 = vld [vmem:[#allocation3 + $0x1e8] sm:$0xff]
    %v831 = vld [vmem:[#allocation3 + $0x1f0] sm:$0xff]
    %v832 = vld [vmem:[#allocation3 + $0x1f8] sm:$0xff]
    %s833 = smul.u32 0, 4
    %s834 = smul.addr %s833, 8
    %s835 = scalar_lea.vmem [#allocation2], %s834
    %v836 = vld [vmem:[%s835] sm:$0xff]
    %v837 = vld [vmem:[%s835 + $0x8] sm:$0xff]
    %v838 = vld [vmem:[%s835 + $0x10] sm:$0xff]
    %v839 = vld [vmem:[%s835 + $0x18] sm:$0xff]
    %840 = vmatprep.subr.mxu0 %v830
    %841 = vmatpush1.msra.mxu0 %v829
    %842 = vmatprep.subr.mxu0 %v826
    %843 = vmatpush1.msra.mxu0 %v825
    %844 = vmatprep.subr.mxu0 %v822
    %845 = vmatpush1.msra.mxu0 %v821
    %846 = vmatprep.subr.mxu0 %v818
    %847 = vmatpush1.msra.mxu0 %v817
    %848 = vmatprep.subr.mxu0 %v814
    %849 = vmatpush1.msra.mxu0 %v813
    %850 = vmatprep.subr.mxu0 %v810
    %851 = vmatpush1.msra.mxu0 %v809
    %852 = vmatprep.subr.mxu0 %v806
    %853 = vmatpush1.msra.mxu0 %v805
    %854 = vmatprep.subr.mxu0 %v802
    %855 = vmatpush1.msra.mxu0 %v801
    %856 = vmatprep.subr.mxu0 %v798
    %857 = vmatpush1.msra.mxu0 %v797
    %858 = vmatprep.subr.mxu0 %v794
    %859 = vmatpush1.msra.mxu0 %v793
    %860 = vmatprep.subr.mxu0 %v790
    %861 = vmatpush1.msra.mxu0 %v789
    %862 = vmatprep.subr.mxu0 %v786
    %863 = vmatpush1.msra.mxu0 %v785
    %864 = vmatprep.subr.mxu0 %v782
    %865 = vmatpush1.msra.mxu0 %v781
    %866 = vmatprep.subr.mxu0 %v778
    %867 = vmatpush1.msra.mxu0 %v777
    %868 = vmatprep.subr.mxu0 %v774
    %869 = vmatpush1.msra.mxu0 %v773
    %870 = vmatprep.subr.mxu0 %v770
    %871 = vmatpush1.msra.mxu0 %v769
    %872 = vmatprep.subr.mxu0 0.0
    %873 = vmatpush2.msra.mxu0 0.0
    %874 = vmatprep.subr.mxu0 0.0
    %875 = vmatpush2.msra.mxu0 0.0
    %876 = vmatprep.subr.mxu0 0.0
    %877 = vmatpush2.msra.mxu0 0.0
    %878 = vmatprep.subr.mxu0 0.0
    %879 = vmatpush2.msra.mxu0 0.0
    %880 = vmatprep.subr.mxu0 0.0
    %881 = vmatpush2.msra.mxu0 0.0
    %882 = vmatprep.subr.mxu0 0.0
    %883 = vmatpush2.msra.mxu0 0.0
    %884 = vmatprep.subr.mxu0 0.0
    %885 = vmatpush2.msra.mxu0 0.0
    %886 = vmatprep.subr.mxu0 0.0
    %887 = vmatpush2.msra.mxu0 0.0
    %888 = vmatprep.subr.mxu0 0.0
    %889 = vmatpush2.msra.mxu0 0.0
    %890 = vmatprep.subr.mxu0 0.0
    %891 = vmatpush2.msra.mxu0 0.0
    %892 = vmatprep.subr.mxu0 0.0
    %893 = vmatpush2.msra.mxu0 0.0
    %894 = vmatprep.subr.mxu0 0.0
    %895 = vmatpush2.msra.mxu0 0.0
    %896 = vmatprep.subr.mxu0 0.0
    %897 = vmatpush2.msra.mxu0 0.0
    %898 = vmatprep.subr.mxu0 0.0
    %899 = vmatpush2.msra.mxu0 0.0
    %900 = vmatprep.subr.mxu0 0.0
    %901 = vmatpush2.msra.mxu0 0.0
    %902 = vmatprep.subr.mxu0 0.0
    %903 = vmatpush2.msra.mxu0 0.0
    %904 = vmatprep.mubr.f32.mxu0 0.0
    %905 = vmatmul.mubr.f32.gmra.mxu0 0.0
    %v906 = vpop.f32.mrf.mxu0
    %v907 = vadd.f32 0.0, %v906
    %v908 = vpop.f32.mrf.mxu0
    %v909 = vadd.f32 0.0, %v908
    %910 = vdwg.mxu0
    %911 = vmatprep.subr.mxu0 %v832
    %912 = vmatpush1.msra.mxu0 %v831
    %913 = vmatprep.subr.mxu0 %v828
    %914 = vmatpush1.msra.mxu0 %v827
    %915 = vmatprep.subr.mxu0 %v824
    %916 = vmatpush1.msra.mxu0 %v823
    %917 = vmatprep.subr.mxu0 %v820
    %918 = vmatpush1.msra.mxu0 %v819
    %919 = vmatprep.subr.mxu0 %v816
    %920 = vmatpush1.msra.mxu0 %v815
    %921 = vmatprep.subr.mxu0 %v812
    %922 = vmatpush1.msra.mxu0 %v811
    %923 = vmatprep.subr.mxu0 %v808
    %924 = vmatpush1.msra.mxu0 %v807
    %925 = vmatprep.subr.mxu0 %v804
    %926 = vmatpush1.msra.mxu0 %v803
    %927 = vmatprep.subr.mxu0 %v800
    %928 = vmatpush1.msra.mxu0 %v799
    %929 = vmatprep.subr.mxu0 %v796
    %930 = vmatpush1.msra.mxu0 %v795
    %931 = vmatprep.subr.mxu0 %v792
    %932 = vmatpush1.msra.mxu0 %v791
    %933 = vmatprep.subr.mxu0 %v788
    %934 = vmatpush1.msra.mxu0 %v787
    %935 = vmatprep.subr.mxu0 %v784
    %936 = vmatpush1.msra.mxu0 %v783
    %937 = vmatprep.subr.mxu0 %v780
    %938 = vmatpush1.msra.mxu0 %v779
    %939 = vmatprep.subr.mxu0 %v776
    %940 = vmatpush1.msra.mxu0 %v775
    %941 = vmatprep.subr.mxu0 %v772
    %942 = vmatpush1.msra.mxu0 %v771
    %943 = vmatprep.subr.mxu0 0.0
    %944 = vmatpush2.msra.mxu0 0.0
    %945 = vmatprep.subr.mxu0 0.0
    %946 = vmatpush2.msra.mxu0 0.0
    %947 = vmatprep.subr.mxu0 0.0
    %948 = vmatpush2.msra.mxu0 0.0
    %949 = vmatprep.subr.mxu0 0.0
    %950 = vmatpush2.msra.mxu0 0.0
    %951 = vmatprep.subr.mxu0 0.0
    %952 = vmatpush2.msra.mxu0 0.0
    %953 = vmatprep.subr.mxu0 0.0
    %954 = vmatpush2.msra.mxu0 0.0
    %955 = vmatprep.subr.mxu0 0.0
    %956 = vmatpush2.msra.mxu0 0.0
    %957 = vmatprep.subr.mxu0 0.0
    %958 = vmatpush2.msra.mxu0 0.0
    %959 = vmatprep.subr.mxu0 0.0
    %960 = vmatpush2.msra.mxu0 0.0
    %961 = vmatprep.subr.mxu0 0.0
    %962 = vmatpush2.msra.mxu0 0.0
    %963 = vmatprep.subr.mxu0 0.0
    %964 = vmatpush2.msra.mxu0 0.0
    %965 = vmatprep.subr.mxu0 0.0
    %966 = vmatpush2.msra.mxu0 0.0
    %967 = vmatprep.subr.mxu0 0.0
    %968 = vmatpush2.msra.mxu0 0.0
    %969 = vmatprep.subr.mxu0 0.0
    %970 = vmatpush2.msra.mxu0 0.0
    %971 = vmatprep.subr.mxu0 0.0
    %972 = vmatpush2.msra.mxu0 0.0
    %973 = vmatprep.subr.mxu0 0.0
    %974 = vmatpush2.msra.mxu0 0.0
    %975 = vmatprep.mubr.f32.mxu0 0.0
    %976 = vmatmul.mubr.f32.gmra.mxu0 0.0
    %v977 = vpop.f32.mrf.mxu0
    %v978 = vadd.f32 0.0, %v977
    %v979 = vpop.f32.mrf.mxu0
    %v980 = vadd.f32 0.0, %v979
    %981 = vdwg.mxu0
    %v982 = vadd.f32 %v836, %v907
    %v983 = vadd.f32 %v837, %v909
    %v984 = vadd.f32 %v838, %v978
    %v985 = vadd.f32 %v839, %v980
    %v986 = vxor.u32 %v982, 2147483648
    %v987 = vmul.f32 %v986, 1.442695
    %v988 = vpow.pop %v987
    %v989 = vadd.f32 %v988, 1.0
    %v990 = vrcp.pop %v989
    %v991 = vmul.f32 1.0, %v990
    %v992 = vxor.u32 %v983, 2147483648
    %v993 = vmul.f32 %v992, 1.442695
    %v994 = vpow.pop %v993
    %v995 = vadd.f32 %v994, 1.0
    %v996 = vrcp.pop %v995
    %v997 = vmul.f32 1.0, %v996
    %v998 = vtanh.pop %v984
    %v999 = vxor.u32 %v985, 2147483648
    %v1000 = vmul.f32 %v999, 1.442695
    %v1001 = vpow.pop %v1000
    %v1002 = vadd.f32 %v1001, 1.0
    %v1003 = vrcp.pop %v1002
    %v1004 = vmul.f32 1.0, %v1003
    %v1005 = vmul.f32 %v997, 0.0
    %v1006 = vmul.f32 %v991, %v998
    %v1007 = vadd.f32 %v1005, %v1006
    %v1008 = vtanh.pop %v1007
    %v1009 = vmul.f32 %v1004, %v1008
    %s1010 = smul.u32 1, 4
    %s1011 = smul.addr %s1010, 8
    %s1012 = scalar_lea.vmem [#allocation2], %s1011
    %v1013 = vld [vmem:[%s1012] sm:$0xff]
    %v1014 = vld [vmem:[%s1012 + $0x8] sm:$0xff]
    %v1015 = vld [vmem:[%s1012 + $0x10] sm:$0xff]
    %v1016 = vld [vmem:[%s1012 + $0x18] sm:$0xff]
    %1017 = vmatprep.subr.mxu0 %v830
    %1018 = vmatpush1.msra.mxu0 %v829
    %1019 = vmatprep.subr.mxu0 %v826
    %1020 = vmatpush1.msra.mxu0 %v825
    %1021 = vmatprep.subr.mxu0 %v822
    %1022 = vmatpush1.msra.mxu0 %v821
    %1023 = vmatprep.subr.mxu0 %v818
    %1024 = vmatpush1.msra.mxu0 %v817
    %1025 = vmatprep.subr.mxu0 %v814
    %1026 = vmatpush1.msra.mxu0 %v813
    %1027 = vmatprep.subr.mxu0 %v810
    %1028 = vmatpush1.msra.mxu0 %v809
    %1029 = vmatprep.subr.mxu0 %v806
    %1030 = vmatpush1.msra.mxu0 %v805
    %1031 = vmatprep.subr.mxu0 %v802
    %1032 = vmatpush1.msra.mxu0 %v801
    %1033 = vmatprep.subr.mxu0 %v798
    %1034 = vmatpush1.msra.mxu0 %v797
    %1035 = vmatprep.subr.mxu0 %v794
    %1036 = vmatpush1.msra.mxu0 %v793
    %1037 = vmatprep.subr.mxu0 %v790
    %1038 = vmatpush1.msra.mxu0 %v789
    %1039 = vmatprep.subr.mxu0 %v786
    %1040 = vmatpush1.msra.mxu0 %v785
    %1041 = vmatprep.subr.mxu0 %v782
    %1042 = vmatpush1.msra.mxu0 %v781
    %1043 = vmatprep.subr.mxu0 %v778
    %1044 = vmatpush1.msra.mxu0 %v777
    %1045 = vmatprep.subr.mxu0 %v774
    %1046 = vmatpush1.msra.mxu0 %v773
    %1047 = vmatprep.subr.mxu0 %v770
    %1048 = vmatpush1.msra.mxu0 %v769
    %1049 = vmatprep.subr.mxu0 0.0
    %1050 = vmatpush2.msra.mxu0 0.0
    %1051 = vmatprep.subr.mxu0 0.0
    %1052 = vmatpush2.msra.mxu0 0.0
    %1053 = vmatprep.subr.mxu0 0.0
    %1054 = vmatpush2.msra.mxu0 0.0
    %1055 = vmatprep.subr.mxu0 0.0
    %1056 = vmatpush2.msra.mxu0 0.0
    %1057 = vmatprep.subr.mxu0 0.0
    %1058 = vmatpush2.msra.mxu0 0.0
    %1059 = vmatprep.subr.mxu0 0.0
    %1060 = vmatpush2.msra.mxu0 0.0
    %1061 = vmatprep.subr.mxu0 0.0
    %1062 = vmatpush2.msra.mxu0 0.0
    %1063 = vmatprep.subr.mxu0 0.0
    %1064 = vmatpush2.msra.mxu0 0.0
    %1065 = vmatprep.subr.mxu0 0.0
    %1066 = vmatpush2.msra.mxu0 0.0
    %1067 = vmatprep.subr.mxu0 0.0
    %1068 = vmatpush2.msra.mxu0 0.0
    %1069 = vmatprep.subr.mxu0 0.0
    %1070 = vmatpush2.msra.mxu0 0.0
    %1071 = vmatprep.subr.mxu0 0.0
    %1072 = vmatpush2.msra.mxu0 0.0
    %1073 = vmatprep.subr.mxu0 0.0
    %1074 = vmatpush2.msra.mxu0 0.0
    %1075 = vmatprep.subr.mxu0 0.0
    %1076 = vmatpush2.msra.mxu0 0.0
    %1077 = vmatprep.subr.mxu0 0.0
    %1078 = vmatpush2.msra.mxu0 0.0
    %1079 = vmatprep.subr.mxu0 0.0
    %1080 = vmatpush2.msra.mxu0 0.0
    %1081 = vmatprep.mubr.f32.mxu0 0.0
    %1082 = vmatmul.mubr.f32.gmra.mxu0 %v1009
    %v1083 = vpop.f32.mrf.mxu0
    %v1084 = vadd.f32 0.0, %v1083
    %v1085 = vpop.f32.mrf.mxu0
    %v1086 = vadd.f32 0.0, %v1085
    %1087 = vdwg.mxu0
    %1088 = vmatprep.subr.mxu0 %v832
    %1089 = vmatpush1.msra.mxu0 %v831
    %1090 = vmatprep.subr.mxu0 %v828
    %1091 = vmatpush1.msra.mxu0 %v827
    %1092 = vmatprep.subr.mxu0 %v824
    %1093 = vmatpush1.msra.mxu0 %v823
    %1094 = vmatprep.subr.mxu0 %v820
    %1095 = vmatpush1.msra.mxu0 %v819
    %1096 = vmatprep.subr.mxu0 %v816
    %1097 = vmatpush1.msra.mxu0 %v815
    %1098 = vmatprep.subr.mxu0 %v812
    %1099 = vmatpush1.msra.mxu0 %v811
    %1100 = vmatprep.subr.mxu0 %v808
    %1101 = vmatpush1.msra.mxu0 %v807
    %1102 = vmatprep.subr.mxu0 %v804
    %1103 = vmatpush1.msra.mxu0 %v803
    %1104 = vmatprep.subr.mxu0 %v800
    %1105 = vmatpush1.msra.mxu0 %v799
    %1106 = vmatprep.subr.mxu0 %v796
    %1107 = vmatpush1.msra.mxu0 %v795
    %1108 = vmatprep.subr.mxu0 %v792
    %1109 = vmatpush1.msra.mxu0 %v791
    %1110 = vmatprep.subr.mxu0 %v788
    %1111 = vmatpush1.msra.mxu0 %v787
    %1112 = vmatprep.subr.mxu0 %v784
    %1113 = vmatpush1.msra.mxu0 %v783
    %1114 = vmatprep.subr.mxu0 %v780
    %1115 = vmatpush1.msra.mxu0 %v779
    %1116 = vmatprep.subr.mxu0 %v776
    %1117 = vmatpush1.msra.mxu0 %v775
    %1118 = vmatprep.subr.mxu0 %v772
    %1119 = vmatpush1.msra.mxu0 %v771
    %1120 = vmatprep.subr.mxu0 0.0
    %1121 = vmatpush2.msra.mxu0 0.0
    %1122 = vmatprep.subr.mxu0 0.0
    %1123 = vmatpush2.msra.mxu0 0.0
    %1124 = vmatprep.subr.mxu0 0.0
    %1125 = vmatpush2.msra.mxu0 0.0
    %1126 = vmatprep.subr.mxu0 0.0
    %1127 = vmatpush2.msra.mxu0 0.0
    %1128 = vmatprep.subr.mxu0 0.0
    %1129 = vmatpush2.msra.mxu0 0.0
    %1130 = vmatprep.subr.mxu0 0.0
    %1131 = vmatpush2.msra.mxu0 0.0
    %1132 = vmatprep.subr.mxu0 0.0
    %1133 = vmatpush2.msra.mxu0 0.0
    %1134 = vmatprep.subr.mxu0 0.0
    %1135 = vmatpush2.msra.mxu0 0.0
    %1136 = vmatprep.subr.mxu0 0.0
    %1137 = vmatpush2.msra.mxu0 0.0
    %1138 = vmatprep.subr.mxu0 0.0
    %1139 = vmatpush2.msra.mxu0 0.0
    %1140 = vmatprep.subr.mxu0 0.0
    %1141 = vmatpush2.msra.mxu0 0.0
    %1142 = vmatprep.subr.mxu0 0.0
    %1143 = vmatpush2.msra.mxu0 0.0
    %1144 = vmatprep.subr.mxu0 0.0
    %1145 = vmatpush2.msra.mxu0 0.0
    %1146 = vmatprep.subr.mxu0 0.0
    %1147 = vmatpush2.msra.mxu0 0.0
    %1148 = vmatprep.subr.mxu0 0.0
    %1149 = vmatpush2.msra.mxu0 0.0
    %1150 = vmatprep.subr.mxu0 0.0
    %1151 = vmatpush2.msra.mxu0 0.0
    %1152 = vmatprep.mubr.f32.mxu0 0.0
    %1153 = vmatmul.mubr.f32.gmra.mxu0 %v1009
    %v1154 = vpop.f32.mrf.mxu0
    %v1155 = vadd.f32 0.0, %v1154
    %v1156 = vpop.f32.mrf.mxu0
    %v1157 = vadd.f32 0.0, %v1156
    %1158 = vdwg.mxu0
    %v1159 = vadd.f32 %v1013, %v1084
    %v1160 = vadd.f32 %v1014, %v1086
    %v1161 = vadd.f32 %v1015, %v1155
    %v1162 = vadd.f32 %v1016, %v1157
    %v1163 = vxor.u32 %v1159, 2147483648
    %v1164 = vmul.f32 %v1163, 1.442695
    %v1165 = vpow.pop %v1164
    %v1166 = vadd.f32 %v1165, 1.0
    %v1167 = vrcp.pop %v1166
    %v1168 = vmul.f32 1.0, %v1167
    %v1169 = vxor.u32 %v1160, 2147483648
    %v1170 = vmul.f32 %v1169, 1.442695
    %v1171 = vpow.pop %v1170
    %v1172 = vadd.f32 %v1171, 1.0
    %v1173 = vrcp.pop %v1172
    %v1174 = vmul.f32 1.0, %v1173
    %v1175 = vtanh.pop %v1161
    %v1176 = vxor.u32 %v1162, 2147483648
    %v1177 = vmul.f32 %v1176, 1.442695
    %v1178 = vpow.pop %v1177
    %v1179 = vadd.f32 %v1178, 1.0
    %v1180 = vrcp.pop %v1179
    %v1181 = vmul.f32 1.0, %v1180
    %v1182 = vmul.f32 %v1174, %v1007
    %v1183 = vmul.f32 %v1168, %v1175
    %v1184 = vadd.f32 %v1182, %v1183
    %v1185 = vtanh.pop %v1184
    %v1186 = vmul.f32 %v1181, %v1185
    %s1187 = smul.u32 2, 4
    %s1188 = smul.addr %s1187, 8
    %s1189 = scalar_lea.vmem [#allocation2], %s1188
    %v1190 = vld [vmem:[%s1189] sm:$0xff]
    %v1191 = vld [vmem:[%s1189 + $0x8] sm:$0xff]
    %v1192 = vld [vmem:[%s1189 + $0x10] sm:$0xff]
    %v1193 = vld [vmem:[%s1189 + $0x18] sm:$0xff]
    %1194 = vmatprep.subr.mxu0 %v830
    %1195 = vmatpush1.msra.mxu0 %v829
    %1196 = vmatprep.subr.mxu0 %v826
    %1197 = vmatpush1.msra.mxu0 %v825
    %1198 = vmatprep.subr.mxu0 %v822
    %1199 = vmatpush1.msra.mxu0 %v821
    %1200 = vmatprep.subr.mxu0 %v818
    %1201 = vmatpush1.msra.mxu0 %v817
    %1202 = vmatprep.subr.mxu0 %v814
    %1203 = vmatpush1.msra.mxu0 %v813
    %1204 = vmatprep.subr.mxu0 %v810
    %1205 = vmatpush1.msra.mxu0 %v809
    %1206 = vmatprep.subr.mxu0 %v806
    %1207 = vmatpush1.msra.mxu0 %v805
    %1208 = vmatprep.subr.mxu0 %v802
    %1209 = vmatpush1.msra.mxu0 %v801
    %1210 = vmatprep.subr.mxu0 %v798
    %1211 = vmatpush1.msra.mxu0 %v797
    %1212 = vmatprep.subr.mxu0 %v794
    %1213 = vmatpush1.msra.mxu0 %v793
    %1214 = vmatprep.subr.mxu0 %v790
    %1215 = vmatpush1.msra.mxu0 %v789
    %1216 = vmatprep.subr.mxu0 %v786
    %1217 = vmatpush1.msra.mxu0 %v785
    %1218 = vmatprep.subr.mxu0 %v782
    %1219 = vmatpush1.msra.mxu0 %v781
    %1220 = vmatprep.subr.mxu0 %v778
    %1221 = vmatpush1.msra.mxu0 %v777
    %1222 = vmatprep.subr.mxu0 %v774
    %1223 = vmatpush1.msra.mxu0 %v773
    %1224 = vmatprep.subr.mxu0 %v770
    %1225 = vmatpush1.msra.mxu0 %v769
    %1226 = vmatprep.subr.mxu0 0.0
    %1227 = vmatpush2.msra.mxu0 0.0
    %1228 = vmatprep.subr.mxu0 0.0
    %1229 = vmatpush2.msra.mxu0 0.0
    %1230 = vmatprep.subr.mxu0 0.0
    %1231 = vmatpush2.msra.mxu0 0.0
    %1232 = vmatprep.subr.mxu0 0.0
    %1233 = vmatpush2.msra.mxu0 0.0
    %1234 = vmatprep.subr.mxu0 0.0
    %1235 = vmatpush2.msra.mxu0 0.0
    %1236 = vmatprep.subr.mxu0 0.0
    %1237 = vmatpush2.msra.mxu0 0.0
    %1238 = vmatprep.subr.mxu0 0.0
    %1239 = vmatpush2.msra.mxu0 0.0
    %1240 = vmatprep.subr.mxu0 0.0
    %1241 = vmatpush2.msra.mxu0 0.0
    %1242 = vmatprep.subr.mxu0 0.0
    %1243 = vmatpush2.msra.mxu0 0.0
    %1244 = vmatprep.subr.mxu0 0.0
    %1245 = vmatpush2.msra.mxu0 0.0
    %1246 = vmatprep.subr.mxu0 0.0
    %1247 = vmatpush2.msra.mxu0 0.0
    %1248 = vmatprep.subr.mxu0 0.0
    %1249 = vmatpush2.msra.mxu0 0.0
    %1250 = vmatprep.subr.mxu0 0.0
    %1251 = vmatpush2.msra.mxu0 0.0
    %1252 = vmatprep.subr.mxu0 0.0
    %1253 = vmatpush2.msra.mxu0 0.0
    %1254 = vmatprep.subr.mxu0 0.0
    %1255 = vmatpush2.msra.mxu0 0.0
    %1256 = vmatprep.subr.mxu0 0.0
    %1257 = vmatpush2.msra.mxu0 0.0
    %1258 = vmatprep.mubr.f32.mxu0 0.0
    %1259 = vmatmul.mubr.f32.gmra.mxu0 %v1186
    %v1260 = vpop.f32.mrf.mxu0
    %v1261 = vadd.f32 0.0, %v1260
    %v1262 = vpop.f32.mrf.mxu0
    %v1263 = vadd.f32 0.0, %v1262
    %1264 = vdwg.mxu0
    %1265 = vmatprep.subr.mxu0 %v832
    %1266 = vmatpush1.msra.mxu0 %v831
    %1267 = vmatprep.subr.mxu0 %v828
    %1268 = vmatpush1.msra.mxu0 %v827
    %1269 = vmatprep.subr.mxu0 %v824
    %1270 = vmatpush1.msra.mxu0 %v823
    %1271 = vmatprep.subr.mxu0 %v820
    %1272 = vmatpush1.msra.mxu0 %v819
    %1273 = vmatprep.subr.mxu0 %v816
    %1274 = vmatpush1.msra.mxu0 %v815
    %1275 = vmatprep.subr.mxu0 %v812
    %1276 = vmatpush1.msra.mxu0 %v811
    %1277 = vmatprep.subr.mxu0 %v808
    %1278 = vmatpush1.msra.mxu0 %v807
    %1279 = vmatprep.subr.mxu0 %v804
    %1280 = vmatpush1.msra.mxu0 %v803
    %1281 = vmatprep.subr.mxu0 %v800
    %1282 = vmatpush1.msra.mxu0 %v799
    %1283 = vmatprep.subr.mxu0 %v796
    %1284 = vmatpush1.msra.mxu0 %v795
    %1285 = vmatprep.subr.mxu0 %v792
    %1286 = vmatpush1.msra.mxu0 %v791
    %1287 = vmatprep.subr.mxu0 %v788
    %1288 = vmatpush1.msra.mxu0 %v787
    %1289 = vmatprep.subr.mxu0 %v784
    %1290 = vmatpush1.msra.mxu0 %v783
    %1291 = vmatprep.subr.mxu0 %v780
    %1292 = vmatpush1.msra.mxu0 %v779
    %1293 = vmatprep.subr.mxu0 %v776
    %1294 = vmatpush1.msra.mxu0 %v775
    %1295 = vmatprep.subr.mxu0 %v772
    %1296 = vmatpush1.msra.mxu0 %v771
    %1297 = vmatprep.subr.mxu0 0.0
    %1298 = vmatpush2.msra.mxu0 0.0
    %1299 = vmatprep.subr.mxu0 0.0
    %1300 = vmatpush2.msra.mxu0 0.0
    %1301 = vmatprep.subr.mxu0 0.0
    %1302 = vmatpush2.msra.mxu0 0.0
    %1303 = vmatprep.subr.mxu0 0.0
    %1304 = vmatpush2.msra.mxu0 0.0
    %1305 = vmatprep.subr.mxu0 0.0
    %1306 = vmatpush2.msra.mxu0 0.0
    %1307 = vmatprep.subr.mxu0 0.0
    %1308 = vmatpush2.msra.mxu0 0.0
    %1309 = vmatprep.subr.mxu0 0.0
    %1310 = vmatpush2.msra.mxu0 0.0
    %1311 = vmatprep.subr.mxu0 0.0
    %1312 = vmatpush2.msra.mxu0 0.0
    %1313 = vmatprep.subr.mxu0 0.0
    %1314 = vmatpush2.msra.mxu0 0.0
    %1315 = vmatprep.subr.mxu0 0.0
    %1316 = vmatpush2.msra.mxu0 0.0
    %1317 = vmatprep.subr.mxu0 0.0
    %1318 = vmatpush2.msra.mxu0 0.0
    %1319 = vmatprep.subr.mxu0 0.0
    %1320 = vmatpush2.msra.mxu0 0.0
    %1321 = vmatprep.subr.mxu0 0.0
    %1322 = vmatpush2.msra.mxu0 0.0
    %1323 = vmatprep.subr.mxu0 0.0
    %1324 = vmatpush2.msra.mxu0 0.0
    %1325 = vmatprep.subr.mxu0 0.0
    %1326 = vmatpush2.msra.mxu0 0.0
    %1327 = vmatprep.subr.mxu0 0.0
    %1328 = vmatpush2.msra.mxu0 0.0
    %1329 = vmatprep.mubr.f32.mxu0 0.0
    %1330 = vmatmul.mubr.f32.gmra.mxu0 %v1186
    %v1331 = vpop.f32.mrf.mxu0
    %v1332 = vadd.f32 0.0, %v1331
    %v1333 = vpop.f32.mrf.mxu0
    %v1334 = vadd.f32 0.0, %v1333
    %1335 = vdwg.mxu0
    %v1336 = vadd.f32 %v1190, %v1261
    %v1337 = vadd.f32 %v1191, %v1263
    %v1338 = vadd.f32 %v1192, %v1332
    %v1339 = vadd.f32 %v1193, %v1334
    %v1340 = vxor.u32 %v1336, 2147483648
    %v1341 = vmul.f32 %v1340, 1.442695
    %v1342 = vpow.pop %v1341
    %v1343 = vadd.f32 %v1342, 1.0
    %v1344 = vrcp.pop %v1343
    %v1345 = vmul.f32 1.0, %v1344
    %v1346 = vxor.u32 %v1337, 2147483648
    %v1347 = vmul.f32 %v1346, 1.442695
    %v1348 = vpow.pop %v1347
    %v1349 = vadd.f32 %v1348, 1.0
    %v1350 = vrcp.pop %v1349
    %v1351 = vmul.f32 1.0, %v1350
    %v1352 = vtanh.pop %v1338
    %v1353 = vxor.u32 %v1339, 2147483648
    %v1354 = vmul.f32 %v1353, 1.442695
    %v1355 = vpow.pop %v1354
    %v1356 = vadd.f32 %v1355, 1.0
    %v1357 = vrcp.pop %v1356
    %v1358 = vmul.f32 1.0, %v1357
    %v1359 = vmul.f32 %v1351, %v1184
    %v1360 = vmul.f32 %v1345, %v1352
    %v1361 = vadd.f32 %v1359, %v1360
    %v1362 = vtanh.pop %v1361
    %v1363 = vmul.f32 %v1358, %v1362
    %s1364 = smul.u32 3, 4
    %s1365 = smul.addr %s1364, 8
    %s1366 = scalar_lea.vmem [#allocation2], %s1365
    %v1367 = vld [vmem:[%s1366] sm:$0xff]
    %v1368 = vld [vmem:[%s1366 + $0x8] sm:$0xff]
    %v1369 = vld [vmem:[%s1366 + $0x10] sm:$0xff]
    %v1370 = vld [vmem:[%s1366 + $0x18] sm:$0xff]
    %1371 = vmatprep.subr.mxu0 %v830
    %1372 = vmatpush1.msra.mxu0 %v829
    %1373 = vmatprep.subr.mxu0 %v826
    %1374 = vmatpush1.msra.mxu0 %v825
    %1375 = vmatprep.subr.mxu0 %v822
    %1376 = vmatpush1.msra.mxu0 %v821
    %1377 = vmatprep.subr.mxu0 %v818
    %1378 = vmatpush1.msra.mxu0 %v817
    %1379 = vmatprep.subr.mxu0 %v814
    %1380 = vmatpush1.msra.mxu0 %v813
    %1381 = vmatprep.subr.mxu0 %v810
    %1382 = vmatpush1.msra.mxu0 %v809
    %1383 = vmatprep.subr.mxu0 %v806
    %1384 = vmatpush1.msra.mxu0 %v805
    %1385 = vmatprep.subr.mxu0 %v802
    %1386 = vmatpush1.msra.mxu0 %v801
    %1387 = vmatprep.subr.mxu0 %v798
    %1388 = vmatpush1.msra.mxu0 %v797
    %1389 = vmatprep.subr.mxu0 %v794
    %1390 = vmatpush1.msra.mxu0 %v793
    %1391 = vmatprep.subr.mxu0 %v790
    %1392 = vmatpush1.msra.mxu0 %v789
    %1393 = vmatprep.subr.mxu0 %v786
    %1394 = vmatpush1.msra.mxu0 %v785
    %1395 = vmatprep.subr.mxu0 %v782
    %1396 = vmatpush1.msra.mxu0 %v781
    %1397 = vmatprep.subr.mxu0 %v778
    %1398 = vmatpush1.msra.mxu0 %v777
    %1399 = vmatprep.subr.mxu0 %v774
    %1400 = vmatpush1.msra.mxu0 %v773
    %1401 = vmatprep.subr.mxu0 %v770
    %1402 = vmatpush1.msra.mxu0 %v769
    %1403 = vmatprep.subr.mxu0 0.0
    %1404 = vmatpush2.msra.mxu0 0.0
    %1405 = vmatprep.subr.mxu0 0.0
    %1406 = vmatpush2.msra.mxu0 0.0
    %1407 = vmatprep.subr.mxu0 0.0
    %1408 = vmatpush2.msra.mxu0 0.0
    %1409 = vmatprep.subr.mxu0 0.0
    %1410 = vmatpush2.msra.mxu0 0.0
    %1411 = vmatprep.subr.mxu0 0.0
    %1412 = vmatpush2.msra.mxu0 0.0
    %1413 = vmatprep.subr.mxu0 0.0
    %1414 = vmatpush2.msra.mxu0 0.0
    %1415 = vmatprep.subr.mxu0 0.0
    %1416 = vmatpush2.msra.mxu0 0.0
    %1417 = vmatprep.subr.mxu0 0.0
    %1418 = vmatpush2.msra.mxu0 0.0
    %1419 = vmatprep.subr.mxu0 0.0
    %1420 = vmatpush2.msra.mxu0 0.0
    %1421 = vmatprep.subr.mxu0 0.0
    %1422 = vmatpush2.msra.mxu0 0.0
    %1423 = vmatprep.subr.mxu0 0.0
    %1424 = vmatpush2.msra.mxu0 0.0
    %1425 = vmatprep.subr.mxu0 0.0
    %1426 = vmatpush2.msra.mxu0 0.0
    %1427 = vmatprep.subr.mxu0 0.0
    %1428 = vmatpush2.msra.mxu0 0.0
    %1429 = vmatprep.subr.mxu0 0.0
    %1430 = vmatpush2.msra.mxu0 0.0
    %1431 = vmatprep.subr.mxu0 0.0
    %1432 = vmatpush2.msra.mxu0 0.0
    %1433 = vmatprep.subr.mxu0 0.0
    %1434 = vmatpush2.msra.mxu0 0.0
    %1435 = vmatprep.mubr.f32.mxu0 0.0
    %1436 = vmatmul.mubr.f32.gmra.mxu0 %v1363
    %v1437 = vpop.f32.mrf.mxu0
    %v1438 = vadd.f32 0.0, %v1437
    %v1439 = vpop.f32.mrf.mxu0
    %v1440 = vadd.f32 0.0, %v1439
    %1441 = vdwg.mxu0
    %1442 = vmatprep.subr.mxu0 %v832
    %1443 = vmatpush1.msra.mxu0 %v831
    %1444 = vmatprep.subr.mxu0 %v828
    %1445 = vmatpush1.msra.mxu0 %v827
    %1446 = vmatprep.subr.mxu0 %v824
    %1447 = vmatpush1.msra.mxu0 %v823
    %1448 = vmatprep.subr.mxu0 %v820
    %1449 = vmatpush1.msra.mxu0 %v819
    %1450 = vmatprep.subr.mxu0 %v816
    %1451 = vmatpush1.msra.mxu0 %v815
    %1452 = vmatprep.subr.mxu0 %v812
    %1453 = vmatpush1.msra.mxu0 %v811
    %1454 = vmatprep.subr.mxu0 %v808
    %1455 = vmatpush1.msra.mxu0 %v807
    %1456 = vmatprep.subr.mxu0 %v804
    %1457 = vmatpush1.msra.mxu0 %v803
    %1458 = vmatprep.subr.mxu0 %v800
    %1459 = vmatpush1.msra.mxu0 %v799
    %1460 = vmatprep.subr.mxu0 %v796
    %1461 = vmatpush1.msra.mxu0 %v795
    %1462 = vmatprep.subr.mxu0 %v792
    %1463 = vmatpush1.msra.mxu0 %v791
    %1464 = vmatprep.subr.mxu0 %v788
    %1465 = vmatpush1.msra.mxu0 %v787
    %1466 = vmatprep.subr.mxu0 %v784
    %1467 = vmatpush1.msra.mxu0 %v783
    %1468 = vmatprep.subr.mxu0 %v780
    %1469 = vmatpush1.msra.mxu0 %v779
    %1470 = vmatprep.subr.mxu0 %v776
    %1471 = vmatpush1.msra.mxu0 %v775
    %1472 = vmatprep.subr.mxu0 %v772
    %1473 = vmatpush1.msra.mxu0 %v771
    %1474 = vmatprep.subr.mxu0 0.0
    %1475 = vmatpush2.msra.mxu0 0.0
    %1476 = vmatprep.subr.mxu0 0.0
    %1477 = vmatpush2.msra.mxu0 0.0
    %1478 = vmatprep.subr.mxu0 0.0
    %1479 = vmatpush2.msra.mxu0 0.0
    %1480 = vmatprep.subr.mxu0 0.0
    %1481 = vmatpush2.msra.mxu0 0.0
    %1482 = vmatprep.subr.mxu0 0.0
    %1483 = vmatpush2.msra.mxu0 0.0
    %1484 = vmatprep.subr.mxu0 0.0
    %1485 = vmatpush2.msra.mxu0 0.0
    %1486 = vmatprep.subr.mxu0 0.0
    %1487 = vmatpush2.msra.mxu0 0.0
    %1488 = vmatprep.subr.mxu0 0.0
    %1489 = vmatpush2.msra.mxu0 0.0
    %1490 = vmatprep.subr.mxu0 0.0
    %1491 = vmatpush2.msra.mxu0 0.0
    %1492 = vmatprep.subr.mxu0 0.0
    %1493 = vmatpush2.msra.mxu0 0.0
    %1494 = vmatprep.subr.mxu0 0.0
    %1495 = vmatpush2.msra.mxu0 0.0
    %1496 = vmatprep.subr.mxu0 0.0
    %1497 = vmatpush2.msra.mxu0 0.0
    %1498 = vmatprep.subr.mxu0 0.0
    %1499 = vmatpush2.msra.mxu0 0.0
    %1500 = vmatprep.subr.mxu0 0.0
    %1501 = vmatpush2.msra.mxu0 0.0
    %1502 = vmatprep.subr.mxu0 0.0
    %1503 = vmatpush2.msra.mxu0 0.0
    %1504 = vmatprep.subr.mxu0 0.0
    %1505 = vmatpush2.msra.mxu0 0.0
    %1506 = vmatprep.mubr.f32.mxu0 0.0
    %1507 = vmatmul.mubr.f32.gmra.mxu0 %v1363
    %v1508 = vpop.f32.mrf.mxu0
    %v1509 = vadd.f32 0.0, %v1508
    %v1510 = vpop.f32.mrf.mxu0
    %v1511 = vadd.f32 0.0, %v1510
    %1512 = vdwg.mxu0
    %v1513 = vadd.f32 %v1367, %v1438
    %v1514 = vadd.f32 %v1368, %v1440
    %v1515 = vadd.f32 %v1369, %v1509
    %v1516 = vadd.f32 %v1370, %v1511
    %v1517 = vxor.u32 %v1513, 2147483648
    %v1518 = vmul.f32 %v1517, 1.442695
    %v1519 = vpow.pop %v1518
    %v1520 = vadd.f32 %v1519, 1.0
    %v1521 = vrcp.pop %v1520
    %v1522 = vmul.f32 1.0, %v1521
    %v1523 = vxor.u32 %v1514, 2147483648
    %v1524 = vmul.f32 %v1523, 1.442695
    %v1525 = vpow.pop %v1524
    %v1526 = vadd.f32 %v1525, 1.0
    %v1527 = vrcp.pop %v1526
    %v1528 = vmul.f32 1.0, %v1527
    %v1529 = vtanh.pop %v1515
    %v1530 = vxor.u32 %v1516, 2147483648
    %v1531 = vmul.f32 %v1530, 1.442695
    %v1532 = vpow.pop %v1531
    %v1533 = vadd.f32 %v1532, 1.0
    %v1534 = vrcp.pop %v1533
    %v1535 = vmul.f32 1.0, %v1534
    %v1536 = vmul.f32 %v1528, %v1361
    %v1537 = vmul.f32 %v1522, %v1529
    %v1538 = vadd.f32 %v1536, %v1537
    %v1539 = vtanh.pop %v1538
    %v1540 = vmul.f32 %v1535, %v1539
    %s1541 = smul.u32 4, 4
    %s1542 = smul.addr %s1541, 8
    %s1543 = scalar_lea.vmem [#allocation2], %s1542
    %v1544 = vld [vmem:[%s1543] sm:$0xff]
    %v1545 = vld [vmem:[%s1543 + $0x8] sm:$0xff]
    %v1546 = vld [vmem:[%s1543 + $0x10] sm:$0xff]
    %v1547 = vld [vmem:[%s1543 + $0x18] sm:$0xff]
    %1548 = vmatprep.subr.mxu0 %v830
    %1549 = vmatpush1.msra.mxu0 %v829
    %1550 = vmatprep.subr.mxu0 %v826
    %1551 = vmatpush1.msra.mxu0 %v825
    %1552 = vmatprep.subr.mxu0 %v822
    %1553 = vmatpush1.msra.mxu0 %v821
    %1554 = vmatprep.subr.mxu0 %v818
    %1555 = vmatpush1.msra.mxu0 %v817
    %1556 = vmatprep.subr.mxu0 %v814
    %1557 = vmatpush1.msra.mxu0 %v813
    %1558 = vmatprep.subr.mxu0 %v810
    %1559 = vmatpush1.msra.mxu0 %v809
    %1560 = vmatprep.subr.mxu0 %v806
    %1561 = vmatpush1.msra.mxu0 %v805
    %1562 = vmatprep.subr.mxu0 %v802
    %1563 = vmatpush1.msra.mxu0 %v801
    %1564 = vmatprep.subr.mxu0 %v798
    %1565 = vmatpush1.msra.mxu0 %v797
    %1566 = vmatprep.subr.mxu0 %v794
    %1567 = vmatpush1.msra.mxu0 %v793
    %1568 = vmatprep.subr.mxu0 %v790
    %1569 = vmatpush1.msra.mxu0 %v789
    %1570 = vmatprep.subr.mxu0 %v786
    %1571 = vmatpush1.msra.mxu0 %v785
    %1572 = vmatprep.subr.mxu0 %v782
    %1573 = vmatpush1.msra.mxu0 %v781
    %1574 = vmatprep.subr.mxu0 %v778
    %1575 = vmatpush1.msra.mxu0 %v777
    %1576 = vmatprep.subr.mxu0 %v774
    %1577 = vmatpush1.msra.mxu0 %v773
    %1578 = vmatprep.subr.mxu0 %v770
    %1579 = vmatpush1.msra.mxu0 %v769
    %1580 = vmatprep.subr.mxu0 0.0
    %1581 = vmatpush2.msra.mxu0 0.0
    %1582 = vmatprep.subr.mxu0 0.0
    %1583 = vmatpush2.msra.mxu0 0.0
    %1584 = vmatprep.subr.mxu0 0.0
    %1585 = vmatpush2.msra.mxu0 0.0
    %1586 = vmatprep.subr.mxu0 0.0
    %1587 = vmatpush2.msra.mxu0 0.0
    %1588 = vmatprep.subr.mxu0 0.0
    %1589 = vmatpush2.msra.mxu0 0.0
    %1590 = vmatprep.subr.mxu0 0.0
    %1591 = vmatpush2.msra.mxu0 0.0
    %1592 = vmatprep.subr.mxu0 0.0
    %1593 = vmatpush2.msra.mxu0 0.0
    %1594 = vmatprep.subr.mxu0 0.0
    %1595 = vmatpush2.msra.mxu0 0.0
    %1596 = vmatprep.subr.mxu0 0.0
    %1597 = vmatpush2.msra.mxu0 0.0
    %1598 = vmatprep.subr.mxu0 0.0
    %1599 = vmatpush2.msra.mxu0 0.0
    %1600 = vmatprep.subr.mxu0 0.0
    %1601 = vmatpush2.msra.mxu0 0.0
    %1602 = vmatprep.subr.mxu0 0.0
    %1603 = vmatpush2.msra.mxu0 0.0
    %1604 = vmatprep.subr.mxu0 0.0
    %1605 = vmatpush2.msra.mxu0 0.0
    %1606 = vmatprep.subr.mxu0 0.0
    %1607 = vmatpush2.msra.mxu0 0.0
    %1608 = vmatprep.subr.mxu0 0.0
    %1609 = vmatpush2.msra.mxu0 0.0
    %1610 = vmatprep.subr.mxu0 0.0
    %1611 = vmatpush2.msra.mxu0 0.0
    %1612 = vmatprep.mubr.f32.mxu0 0.0
    %1613 = vmatmul.mubr.f32.gmra.mxu0 %v1540
    %v1614 = vpop.f32.mrf.mxu0
    %v1615 = vadd.f32 0.0, %v1614
    %v1616 = vpop.f32.mrf.mxu0
    %v1617 = vadd.f32 0.0, %v1616
    %1618 = vdwg.mxu0
    %1619 = vmatprep.subr.mxu0 %v832
    %1620 = vmatpush1.msra.mxu0 %v831
    %1621 = vmatprep.subr.mxu0 %v828
    %1622 = vmatpush1.msra.mxu0 %v827
    %1623 = vmatprep.subr.mxu0 %v824
    %1624 = vmatpush1.msra.mxu0 %v823
    %1625 = vmatprep.subr.mxu0 %v820
    %1626 = vmatpush1.msra.mxu0 %v819
    %1627 = vmatprep.subr.mxu0 %v816
    %1628 = vmatpush1.msra.mxu0 %v815
    %1629 = vmatprep.subr.mxu0 %v812
    %1630 = vmatpush1.msra.mxu0 %v811
    %1631 = vmatprep.subr.mxu0 %v808
    %1632 = vmatpush1.msra.mxu0 %v807
    %1633 = vmatprep.subr.mxu0 %v804
    %1634 = vmatpush1.msra.mxu0 %v803
    %1635 = vmatprep.subr.mxu0 %v800
    %1636 = vmatpush1.msra.mxu0 %v799
    %1637 = vmatprep.subr.mxu0 %v796
    %1638 = vmatpush1.msra.mxu0 %v795
    %1639 = vmatprep.subr.mxu0 %v792
    %1640 = vmatpush1.msra.mxu0 %v791
    %1641 = vmatprep.subr.mxu0 %v788
    %1642 = vmatpush1.msra.mxu0 %v787
    %1643 = vmatprep.subr.mxu0 %v784
    %1644 = vmatpush1.msra.mxu0 %v783
    %1645 = vmatprep.subr.mxu0 %v780
    %1646 = vmatpush1.msra.mxu0 %v779
    %1647 = vmatprep.subr.mxu0 %v776
    %1648 = vmatpush1.msra.mxu0 %v775
    %1649 = vmatprep.subr.mxu0 %v772
    %1650 = vmatpush1.msra.mxu0 %v771
    %1651 = vmatprep.subr.mxu0 0.0
    %1652 = vmatpush2.msra.mxu0 0.0
    %1653 = vmatprep.subr.mxu0 0.0
    %1654 = vmatpush2.msra.mxu0 0.0
    %1655 = vmatprep.subr.mxu0 0.0
    %1656 = vmatpush2.msra.mxu0 0.0
    %1657 = vmatprep.subr.mxu0 0.0
    %1658 = vmatpush2.msra.mxu0 0.0
    %1659 = vmatprep.subr.mxu0 0.0
    %1660 = vmatpush2.msra.mxu0 0.0
    %1661 = vmatprep.subr.mxu0 0.0
    %1662 = vmatpush2.msra.mxu0 0.0
    %1663 = vmatprep.subr.mxu0 0.0
    %1664 = vmatpush2.msra.mxu0 0.0
    %1665 = vmatprep.subr.mxu0 0.0
    %1666 = vmatpush2.msra.mxu0 0.0
    %1667 = vmatprep.subr.mxu0 0.0
    %1668 = vmatpush2.msra.mxu0 0.0
    %1669 = vmatprep.subr.mxu0 0.0
    %1670 = vmatpush2.msra.mxu0 0.0
    %1671 = vmatprep.subr.mxu0 0.0
    %1672 = vmatpush2.msra.mxu0 0.0
    %1673 = vmatprep.subr.mxu0 0.0
    %1674 = vmatpush2.msra.mxu0 0.0
    %1675 = vmatprep.subr.mxu0 0.0
    %1676 = vmatpush2.msra.mxu0 0.0
    %1677 = vmatprep.subr.mxu0 0.0
    %1678 = vmatpush2.msra.mxu0 0.0
    %1679 = vmatprep.subr.mxu0 0.0
    %1680 = vmatpush2.msra.mxu0 0.0
    %1681 = vmatprep.subr.mxu0 0.0
    %1682 = vmatpush2.msra.mxu0 0.0
    %1683 = vmatprep.mubr.f32.mxu0 0.0
    %1684 = vmatmul.mubr.f32.gmra.mxu0 %v1540
    %v1685 = vpop.f32.mrf.mxu0
    %v1686 = vadd.f32 0.0, %v1685
    %v1687 = vpop.f32.mrf.mxu0
    %v1688 = vadd.f32 0.0, %v1687
    %1689 = vdwg.mxu0
    %v1690 = vadd.f32 %v1544, %v1615
    %v1691 = vadd.f32 %v1545, %v1617
    %v1692 = vadd.f32 %v1546, %v1686
    %v1693 = vadd.f32 %v1547, %v1688
    %v1694 = vxor.u32 %v1690, 2147483648
    %v1695 = vmul.f32 %v1694, 1.442695
    %v1696 = vpow.pop %v1695
    %v1697 = vadd.f32 %v1696, 1.0
    %v1698 = vrcp.pop %v1697
    %v1699 = vmul.f32 1.0, %v1698
    %v1700 = vxor.u32 %v1691, 2147483648
    %v1701 = vmul.f32 %v1700, 1.442695
    %v1702 = vpow.pop %v1701
    %v1703 = vadd.f32 %v1702, 1.0
    %v1704 = vrcp.pop %v1703
    %v1705 = vmul.f32 1.0, %v1704
    %v1706 = vtanh.pop %v1692
    %v1707 = vxor.u32 %v1693, 2147483648
    %v1708 = vmul.f32 %v1707, 1.442695
    %v1709 = vpow.pop %v1708
    %v1710 = vadd.f32 %v1709, 1.0
    %v1711 = vrcp.pop %v1710
    %v1712 = vmul.f32 1.0, %v1711
    %v1713 = vmul.f32 %v1705, %v1538
    %v1714 = vmul.f32 %v1699, %v1706
    %v1715 = vadd.f32 %v1713, %v1714
    %v1716 = vtanh.pop %v1715
    %v1717 = vmul.f32 %v1712, %v1716
    %s1718 = smul.u32 5, 4
    %s1719 = smul.addr %s1718, 8
    %s1720 = scalar_lea.vmem [#allocation2], %s1719
    %v1721 = vld [vmem:[%s1720] sm:$0xff]
    %v1722 = vld [vmem:[%s1720 + $0x8] sm:$0xff]
    %v1723 = vld [vmem:[%s1720 + $0x10] sm:$0xff]
    %v1724 = vld [vmem:[%s1720 + $0x18] sm:$0xff]
    %1725 = vmatprep.subr.mxu0 %v830
    %1726 = vmatpush1.msra.mxu0 %v829
    %1727 = vmatprep.subr.mxu0 %v826
    %1728 = vmatpush1.msra.mxu0 %v825
    %1729 = vmatprep.subr.mxu0 %v822
    %1730 = vmatpush1.msra.mxu0 %v821
    %1731 = vmatprep.subr.mxu0 %v818
    %1732 = vmatpush1.msra.mxu0 %v817
    %1733 = vmatprep.subr.mxu0 %v814
    %1734 = vmatpush1.msra.mxu0 %v813
    %1735 = vmatprep.subr.mxu0 %v810
    %1736 = vmatpush1.msra.mxu0 %v809
    %1737 = vmatprep.subr.mxu0 %v806
    %1738 = vmatpush1.msra.mxu0 %v805
    %1739 = vmatprep.subr.mxu0 %v802
    %1740 = vmatpush1.msra.mxu0 %v801
    %1741 = vmatprep.subr.mxu0 %v798
    %1742 = vmatpush1.msra.mxu0 %v797
    %1743 = vmatprep.subr.mxu0 %v794
    %1744 = vmatpush1.msra.mxu0 %v793
    %1745 = vmatprep.subr.mxu0 %v790
    %1746 = vmatpush1.msra.mxu0 %v789
    %1747 = vmatprep.subr.mxu0 %v786
    %1748 = vmatpush1.msra.mxu0 %v785
    %1749 = vmatprep.subr.mxu0 %v782
    %1750 = vmatpush1.msra.mxu0 %v781
    %1751 = vmatprep.subr.mxu0 %v778
    %1752 = vmatpush1.msra.mxu0 %v777
    %1753 = vmatprep.subr.mxu0 %v774
    %1754 = vmatpush1.msra.mxu0 %v773
    %1755 = vmatprep.subr.mxu0 %v770
    %1756 = vmatpush1.msra.mxu0 %v769
    %1757 = vmatprep.subr.mxu0 0.0
    %1758 = vmatpush2.msra.mxu0 0.0
    %1759 = vmatprep.subr.mxu0 0.0
    %1760 = vmatpush2.msra.mxu0 0.0
    %1761 = vmatprep.subr.mxu0 0.0
    %1762 = vmatpush2.msra.mxu0 0.0
    %1763 = vmatprep.subr.mxu0 0.0
    %1764 = vmatpush2.msra.mxu0 0.0
    %1765 = vmatprep.subr.mxu0 0.0
    %1766 = vmatpush2.msra.mxu0 0.0
    %1767 = vmatprep.subr.mxu0 0.0
    %1768 = vmatpush2.msra.mxu0 0.0
    %1769 = vmatprep.subr.mxu0 0.0
    %1770 = vmatpush2.msra.mxu0 0.0
    %1771 = vmatprep.subr.mxu0 0.0
    %1772 = vmatpush2.msra.mxu0 0.0
    %1773 = vmatprep.subr.mxu0 0.0
    %1774 = vmatpush2.msra.mxu0 0.0
    %1775 = vmatprep.subr.mxu0 0.0
    %1776 = vmatpush2.msra.mxu0 0.0
    %1777 = vmatprep.subr.mxu0 0.0
    %1778 = vmatpush2.msra.mxu0 0.0
    %1779 = vmatprep.subr.mxu0 0.0
    %1780 = vmatpush2.msra.mxu0 0.0
    %1781 = vmatprep.subr.mxu0 0.0
    %1782 = vmatpush2.msra.mxu0 0.0
    %1783 = vmatprep.subr.mxu0 0.0
    %1784 = vmatpush2.msra.mxu0 0.0
    %1785 = vmatprep.subr.mxu0 0.0
    %1786 = vmatpush2.msra.mxu0 0.0
    %1787 = vmatprep.subr.mxu0 0.0
    %1788 = vmatpush2.msra.mxu0 0.0
    %1789 = vmatprep.mubr.f32.mxu0 0.0
    %1790 = vmatmul.mubr.f32.gmra.mxu0 %v1717
    %v1791 = vpop.f32.mrf.mxu0
    %v1792 = vadd.f32 0.0, %v1791
    %v1793 = vpop.f32.mrf.mxu0
    %v1794 = vadd.f32 0.0, %v1793
    %1795 = vdwg.mxu0
    %1796 = vmatprep.subr.mxu0 %v832
    %1797 = vmatpush1.msra.mxu0 %v831
    %1798 = vmatprep.subr.mxu0 %v828
    %1799 = vmatpush1.msra.mxu0 %v827
    %1800 = vmatprep.subr.mxu0 %v824
    %1801 = vmatpush1.msra.mxu0 %v823
    %1802 = vmatprep.subr.mxu0 %v820
    %1803 = vmatpush1.msra.mxu0 %v819
    %1804 = vmatprep.subr.mxu0 %v816
    %1805 = vmatpush1.msra.mxu0 %v815
    %1806 = vmatprep.subr.mxu0 %v812
    %1807 = vmatpush1.msra.mxu0 %v811
    %1808 = vmatprep.subr.mxu0 %v808
    %1809 = vmatpush1.msra.mxu0 %v807
    %1810 = vmatprep.subr.mxu0 %v804
    %1811 = vmatpush1.msra.mxu0 %v803
    %1812 = vmatprep.subr.mxu0 %v800
    %1813 = vmatpush1.msra.mxu0 %v799
    %1814 = vmatprep.subr.mxu0 %v796
    %1815 = vmatpush1.msra.mxu0 %v795
    %1816 = vmatprep.subr.mxu0 %v792
    %1817 = vmatpush1.msra.mxu0 %v791
    %1818 = vmatprep.subr.mxu0 %v788
    %1819 = vmatpush1.msra.mxu0 %v787
    %1820 = vmatprep.subr.mxu0 %v784
    %1821 = vmatpush1.msra.mxu0 %v783
    %1822 = vmatprep.subr.mxu0 %v780
    %1823 = vmatpush1.msra.mxu0 %v779
    %1824 = vmatprep.subr.mxu0 %v776
    %1825 = vmatpush1.msra.mxu0 %v775
    %1826 = vmatprep.subr.mxu0 %v772
    %1827 = vmatpush1.msra.mxu0 %v771
    %1828 = vmatprep.subr.mxu0 0.0
    %1829 = vmatpush2.msra.mxu0 0.0
    %1830 = vmatprep.subr.mxu0 0.0
    %1831 = vmatpush2.msra.mxu0 0.0
    %1832 = vmatprep.subr.mxu0 0.0
    %1833 = vmatpush2.msra.mxu0 0.0
    %1834 = vmatprep.subr.mxu0 0.0
    %1835 = vmatpush2.msra.mxu0 0.0
    %1836 = vmatprep.subr.mxu0 0.0
    %1837 = vmatpush2.msra.mxu0 0.0
    %1838 = vmatprep.subr.mxu0 0.0
    %1839 = vmatpush2.msra.mxu0 0.0
    %1840 = vmatprep.subr.mxu0 0.0
    %1841 = vmatpush2.msra.mxu0 0.0
    %1842 = vmatprep.subr.mxu0 0.0
    %1843 = vmatpush2.msra.mxu0 0.0
    %1844 = vmatprep.subr.mxu0 0.0
    %1845 = vmatpush2.msra.mxu0 0.0
    %1846 = vmatprep.subr.mxu0 0.0
    %1847 = vmatpush2.msra.mxu0 0.0
    %1848 = vmatprep.subr.mxu0 0.0
    %1849 = vmatpush2.msra.mxu0 0.0
    %1850 = vmatprep.subr.mxu0 0.0
    %1851 = vmatpush2.msra.mxu0 0.0
    %1852 = vmatprep.subr.mxu0 0.0
    %1853 = vmatpush2.msra.mxu0 0.0
    %1854 = vmatprep.subr.mxu0 0.0
    %1855 = vmatpush2.msra.mxu0 0.0
    %1856 = vmatprep.subr.mxu0 0.0
    %1857 = vmatpush2.msra.mxu0 0.0
    %1858 = vmatprep.subr.mxu0 0.0
    %1859 = vmatpush2.msra.mxu0 0.0
    %1860 = vmatprep.mubr.f32.mxu0 0.0
    %1861 = vmatmul.mubr.f32.gmra.mxu0 %v1717
    %v1862 = vpop.f32.mrf.mxu0
    %v1863 = vadd.f32 0.0, %v1862
    %v1864 = vpop.f32.mrf.mxu0
    %v1865 = vadd.f32 0.0, %v1864
    %1866 = vdwg.mxu0
    %v1867 = vadd.f32 %v1721, %v1792
    %v1868 = vadd.f32 %v1722, %v1794
    %v1869 = vadd.f32 %v1723, %v1863
    %v1870 = vadd.f32 %v1724, %v1865
    %v1871 = vxor.u32 %v1867, 2147483648
    %v1872 = vmul.f32 %v1871, 1.442695
    %v1873 = vpow.pop %v1872
    %v1874 = vadd.f32 %v1873, 1.0
    %v1875 = vrcp.pop %v1874
    %v1876 = vmul.f32 1.0, %v1875
    %v1877 = vxor.u32 %v1868, 2147483648
    %v1878 = vmul.f32 %v1877, 1.442695
    %v1879 = vpow.pop %v1878
    %v1880 = vadd.f32 %v1879, 1.0
    %v1881 = vrcp.pop %v1880
    %v1882 = vmul.f32 1.0, %v1881
    %v1883 = vtanh.pop %v1869
    %v1884 = vxor.u32 %v1870, 2147483648
    %v1885 = vmul.f32 %v1884, 1.442695
    %v1886 = vpow.pop %v1885
    %v1887 = vadd.f32 %v1886, 1.0
    %v1888 = vrcp.pop %v1887
    %v1889 = vmul.f32 1.0, %v1888
    %v1890 = vmul.f32 %v1882, %v1715
    %v1891 = vmul.f32 %v1876, %v1883
    %v1892 = vadd.f32 %v1890, %v1891
    %v1893 = vtanh.pop %v1892
    %v1894 = vmul.f32 %v1889, %v1893
    %s1895 = smul.u32 6, 4
    %s1896 = smul.addr %s1895, 8
    %s1897 = scalar_lea.vmem [#allocation2], %s1896
    %v1898 = vld [vmem:[%s1897] sm:$0xff]
    %v1899 = vld [vmem:[%s1897 + $0x8] sm:$0xff]
    %v1900 = vld [vmem:[%s1897 + $0x10] sm:$0xff]
    %v1901 = vld [vmem:[%s1897 + $0x18] sm:$0xff]
    %1902 = vmatprep.subr.mxu0 %v830
    %1903 = vmatpush1.msra.mxu0 %v829
    %1904 = vmatprep.subr.mxu0 %v826
    %1905 = vmatpush1.msra.mxu0 %v825
    %1906 = vmatprep.subr.mxu0 %v822
    %1907 = vmatpush1.msra.mxu0 %v821
    %1908 = vmatprep.subr.mxu0 %v818
    %1909 = vmatpush1.msra.mxu0 %v817
    %1910 = vmatprep.subr.mxu0 %v814
    %1911 = vmatpush1.msra.mxu0 %v813
    %1912 = vmatprep.subr.mxu0 %v810
    %1913 = vmatpush1.msra.mxu0 %v809
    %1914 = vmatprep.subr.mxu0 %v806
    %1915 = vmatpush1.msra.mxu0 %v805
    %1916 = vmatprep.subr.mxu0 %v802
    %1917 = vmatpush1.msra.mxu0 %v801
    %1918 = vmatprep.subr.mxu0 %v798
    %1919 = vmatpush1.msra.mxu0 %v797
    %1920 = vmatprep.subr.mxu0 %v794
    %1921 = vmatpush1.msra.mxu0 %v793
    %1922 = vmatprep.subr.mxu0 %v790
    %1923 = vmatpush1.msra.mxu0 %v789
    %1924 = vmatprep.subr.mxu0 %v786
    %1925 = vmatpush1.msra.mxu0 %v785
    %1926 = vmatprep.subr.mxu0 %v782
    %1927 = vmatpush1.msra.mxu0 %v781
    %1928 = vmatprep.subr.mxu0 %v778
    %1929 = vmatpush1.msra.mxu0 %v777
    %1930 = vmatprep.subr.mxu0 %v774
    %1931 = vmatpush1.msra.mxu0 %v773
    %1932 = vmatprep.subr.mxu0 %v770
    %1933 = vmatpush1.msra.mxu0 %v769
    %1934 = vmatprep.subr.mxu0 0.0
    %1935 = vmatpush2.msra.mxu0 0.0
    %1936 = vmatprep.subr.mxu0 0.0
    %1937 = vmatpush2.msra.mxu0 0.0
    %1938 = vmatprep.subr.mxu0 0.0
    %1939 = vmatpush2.msra.mxu0 0.0
    %1940 = vmatprep.subr.mxu0 0.0
    %1941 = vmatpush2.msra.mxu0 0.0
    %1942 = vmatprep.subr.mxu0 0.0
    %1943 = vmatpush2.msra.mxu0 0.0
    %1944 = vmatprep.subr.mxu0 0.0
    %1945 = vmatpush2.msra.mxu0 0.0
    %1946 = vmatprep.subr.mxu0 0.0
    %1947 = vmatpush2.msra.mxu0 0.0
    %1948 = vmatprep.subr.mxu0 0.0
    %1949 = vmatpush2.msra.mxu0 0.0
    %1950 = vmatprep.subr.mxu0 0.0
    %1951 = vmatpush2.msra.mxu0 0.0
    %1952 = vmatprep.subr.mxu0 0.0
    %1953 = vmatpush2.msra.mxu0 0.0
    %1954 = vmatprep.subr.mxu0 0.0
    %1955 = vmatpush2.msra.mxu0 0.0
    %1956 = vmatprep.subr.mxu0 0.0
    %1957 = vmatpush2.msra.mxu0 0.0
    %1958 = vmatprep.subr.mxu0 0.0
    %1959 = vmatpush2.msra.mxu0 0.0
    %1960 = vmatprep.subr.mxu0 0.0
    %1961 = vmatpush2.msra.mxu0 0.0
    %1962 = vmatprep.subr.mxu0 0.0
    %1963 = vmatpush2.msra.mxu0 0.0
    %1964 = vmatprep.subr.mxu0 0.0
    %1965 = vmatpush2.msra.mxu0 0.0
    %1966 = vmatprep.mubr.f32.mxu0 0.0
    %1967 = vmatmul.mubr.f32.gmra.mxu0 %v1894
    %v1968 = vpop.f32.mrf.mxu0
    %v1969 = vadd.f32 0.0, %v1968
    %v1970 = vpop.f32.mrf.mxu0
    %v1971 = vadd.f32 0.0, %v1970
    %1972 = vdwg.mxu0
    %1973 = vmatprep.subr.mxu0 %v832
    %1974 = vmatpush1.msra.mxu0 %v831
    %1975 = vmatprep.subr.mxu0 %v828
    %1976 = vmatpush1.msra.mxu0 %v827
    %1977 = vmatprep.subr.mxu0 %v824
    %1978 = vmatpush1.msra.mxu0 %v823
    %1979 = vmatprep.subr.mxu0 %v820
    %1980 = vmatpush1.msra.mxu0 %v819
    %1981 = vmatprep.subr.mxu0 %v816
    %1982 = vmatpush1.msra.mxu0 %v815
    %1983 = vmatprep.subr.mxu0 %v812
    %1984 = vmatpush1.msra.mxu0 %v811
    %1985 = vmatprep.subr.mxu0 %v808
    %1986 = vmatpush1.msra.mxu0 %v807
    %1987 = vmatprep.subr.mxu0 %v804
    %1988 = vmatpush1.msra.mxu0 %v803
    %1989 = vmatprep.subr.mxu0 %v800
    %1990 = vmatpush1.msra.mxu0 %v799
    %1991 = vmatprep.subr.mxu0 %v796
    %1992 = vmatpush1.msra.mxu0 %v795
    %1993 = vmatprep.subr.mxu0 %v792
    %1994 = vmatpush1.msra.mxu0 %v791
    %1995 = vmatprep.subr.mxu0 %v788
    %1996 = vmatpush1.msra.mxu0 %v787
    %1997 = vmatprep.subr.mxu0 %v784
    %1998 = vmatpush1.msra.mxu0 %v783
    %1999 = vmatprep.subr.mxu0 %v780
    %2000 = vmatpush1.msra.mxu0 %v779
    %2001 = vmatprep.subr.mxu0 %v776
    %2002 = vmatpush1.msra.mxu0 %v775
    %2003 = vmatprep.subr.mxu0 %v772
    %2004 = vmatpush1.msra.mxu0 %v771
    %2005 = vmatprep.subr.mxu0 0.0
    %2006 = vmatpush2.msra.mxu0 0.0
    %2007 = vmatprep.subr.mxu0 0.0
    %2008 = vmatpush2.msra.mxu0 0.0
    %2009 = vmatprep.subr.mxu0 0.0
    %2010 = vmatpush2.msra.mxu0 0.0
    %2011 = vmatprep.subr.mxu0 0.0
    %2012 = vmatpush2.msra.mxu0 0.0
    %2013 = vmatprep.subr.mxu0 0.0
    %2014 = vmatpush2.msra.mxu0 0.0
    %2015 = vmatprep.subr.mxu0 0.0
    %2016 = vmatpush2.msra.mxu0 0.0
    %2017 = vmatprep.subr.mxu0 0.0
    %2018 = vmatpush2.msra.mxu0 0.0
    %2019 = vmatprep.subr.mxu0 0.0
    %2020 = vmatpush2.msra.mxu0 0.0
    %2021 = vmatprep.subr.mxu0 0.0
    %2022 = vmatpush2.msra.mxu0 0.0
    %2023 = vmatprep.subr.mxu0 0.0
    %2024 = vmatpush2.msra.mxu0 0.0
    %2025 = vmatprep.subr.mxu0 0.0
    %2026 = vmatpush2.msra.mxu0 0.0
    %2027 = vmatprep.subr.mxu0 0.0
    %2028 = vmatpush2.msra.mxu0 0.0
    %2029 = vmatprep.subr.mxu0 0.0
    %2030 = vmatpush2.msra.mxu0 0.0
    %2031 = vmatprep.subr.mxu0 0.0
    %2032 = vmatpush2.msra.mxu0 0.0
    %2033 = vmatprep.subr.mxu0 0.0
    %2034 = vmatpush2.msra.mxu0 0.0
    %2035 = vmatprep.subr.mxu0 0.0
    %2036 = vmatpush2.msra.mxu0 0.0
    %2037 = vmatprep.mubr.f32.mxu0 0.0
    %2038 = vmatmul.mubr.f32.gmra.mxu0 %v1894
    %v2039 = vpop.f32.mrf.mxu0
    %v2040 = vadd.f32 0.0, %v2039
    %v2041 = vpop.f32.mrf.mxu0
    %v2042 = vadd.f32 0.0, %v2041
    %2043 = vdwg.mxu0
    %v2044 = vadd.f32 %v1898, %v1969
    %v2045 = vadd.f32 %v1899, %v1971
    %v2046 = vadd.f32 %v1900, %v2040
    %v2047 = vadd.f32 %v1901, %v2042
    %v2048 = vxor.u32 %v2044, 2147483648
    %v2049 = vmul.f32 %v2048, 1.442695
    %v2050 = vpow.pop %v2049
    %v2051 = vadd.f32 %v2050, 1.0
    %v2052 = vrcp.pop %v2051
    %v2053 = vmul.f32 1.0, %v2052
    %v2054 = vxor.u32 %v2045, 2147483648
    %v2055 = vmul.f32 %v2054, 1.442695
    %v2056 = vpow.pop %v2055
    %v2057 = vadd.f32 %v2056, 1.0
    %v2058 = vrcp.pop %v2057
    %v2059 = vmul.f32 1.0, %v2058
    %v2060 = vtanh.pop %v2046
    %v2061 = vxor.u32 %v2047, 2147483648
    %v2062 = vmul.f32 %v2061, 1.442695
    %v2063 = vpow.pop %v2062
    %v2064 = vadd.f32 %v2063, 1.0
    %v2065 = vrcp.pop %v2064
    %v2066 = vmul.f32 1.0, %v2065
    %v2067 = vmul.f32 %v2059, %v1892
    %v2068 = vmul.f32 %v2053, %v2060
    %v2069 = vadd.f32 %v2067, %v2068
    %v2070 = vtanh.pop %v2069
    %v2071 = vmul.f32 %v2066, %v2070
    %s2072 = smul.u32 7, 4
    %s2073 = smul.addr %s2072, 8
    %s2074 = scalar_lea.vmem [#allocation2], %s2073
    %v2075 = vld [vmem:[%s2074] sm:$0xff]
    %v2076 = vld [vmem:[%s2074 + $0x8] sm:$0xff]
    %v2077 = vld [vmem:[%s2074 + $0x10] sm:$0xff]
    %v2078 = vld [vmem:[%s2074 + $0x18] sm:$0xff]
    %2079 = vmatprep.subr.mxu0 %v830
    %2080 = vmatpush1.msra.mxu0 %v829
    %2081 = vmatprep.subr.mxu0 %v826
    %2082 = vmatpush1.msra.mxu0 %v825
    %2083 = vmatprep.subr.mxu0 %v822
    %2084 = vmatpush1.msra.mxu0 %v821
    %2085 = vmatprep.subr.mxu0 %v818
    %2086 = vmatpush1.msra.mxu0 %v817
    %2087 = vmatprep.subr.mxu0 %v814
    %2088 = vmatpush1.msra.mxu0 %v813
    %2089 = vmatprep.subr.mxu0 %v810
    %2090 = vmatpush1.msra.mxu0 %v809
    %2091 = vmatprep.subr.mxu0 %v806
    %2092 = vmatpush1.msra.mxu0 %v805
    %2093 = vmatprep.subr.mxu0 %v802
    %2094 = vmatpush1.msra.mxu0 %v801
    %2095 = vmatprep.subr.mxu0 %v798
    %2096 = vmatpush1.msra.mxu0 %v797
    %2097 = vmatprep.subr.mxu0 %v794
    %2098 = vmatpush1.msra.mxu0 %v793
    %2099 = vmatprep.subr.mxu0 %v790
    %2100 = vmatpush1.msra.mxu0 %v789
    %2101 = vmatprep.subr.mxu0 %v786
    %2102 = vmatpush1.msra.mxu0 %v785
    %2103 = vmatprep.subr.mxu0 %v782
    %2104 = vmatpush1.msra.mxu0 %v781
    %2105 = vmatprep.subr.mxu0 %v778
    %2106 = vmatpush1.msra.mxu0 %v777
    %2107 = vmatprep.subr.mxu0 %v774
    %2108 = vmatpush1.msra.mxu0 %v773
    %2109 = vmatprep.subr.mxu0 %v770
    %2110 = vmatpush1.msra.mxu0 %v769
    %2111 = vmatprep.subr.mxu0 0.0
    %2112 = vmatpush2.msra.mxu0 0.0
    %2113 = vmatprep.subr.mxu0 0.0
    %2114 = vmatpush2.msra.mxu0 0.0
    %2115 = vmatprep.subr.mxu0 0.0
    %2116 = vmatpush2.msra.mxu0 0.0
    %2117 = vmatprep.subr.mxu0 0.0
    %2118 = vmatpush2.msra.mxu0 0.0
    %2119 = vmatprep.subr.mxu0 0.0
    %2120 = vmatpush2.msra.mxu0 0.0
    %2121 = vmatprep.subr.mxu0 0.0
    %2122 = vmatpush2.msra.mxu0 0.0
    %2123 = vmatprep.subr.mxu0 0.0
    %2124 = vmatpush2.msra.mxu0 0.0
    %2125 = vmatprep.subr.mxu0 0.0
    %2126 = vmatpush2.msra.mxu0 0.0
    %2127 = vmatprep.subr.mxu0 0.0
    %2128 = vmatpush2.msra.mxu0 0.0
    %2129 = vmatprep.subr.mxu0 0.0
    %2130 = vmatpush2.msra.mxu0 0.0
    %2131 = vmatprep.subr.mxu0 0.0
    %2132 = vmatpush2.msra.mxu0 0.0
    %2133 = vmatprep.subr.mxu0 0.0
    %2134 = vmatpush2.msra.mxu0 0.0
    %2135 = vmatprep.subr.mxu0 0.0
    %2136 = vmatpush2.msra.mxu0 0.0
    %2137 = vmatprep.subr.mxu0 0.0
    %2138 = vmatpush2.msra.mxu0 0.0
    %2139 = vmatprep.subr.mxu0 0.0
    %2140 = vmatpush2.msra.mxu0 0.0
    %2141 = vmatprep.subr.mxu0 0.0
    %2142 = vmatpush2.msra.mxu0 0.0
    %2143 = vmatprep.mubr.f32.mxu0 0.0
    %2144 = vmatmul.mubr.f32.gmra.mxu0 %v2071
    %v2145 = vpop.f32.mrf.mxu0
    %v2146 = vadd.f32 0.0, %v2145
    %v2147 = vpop.f32.mrf.mxu0
    %v2148 = vadd.f32 0.0, %v2147
    %2149 = vdwg.mxu0
    %2150 = vmatprep.subr.mxu0 %v832
    %2151 = vmatpush1.msra.mxu0 %v831
    %2152 = vmatprep.subr.mxu0 %v828
    %2153 = vmatpush1.msra.mxu0 %v827
    %2154 = vmatprep.subr.mxu0 %v824
    %2155 = vmatpush1.msra.mxu0 %v823
    %2156 = vmatprep.subr.mxu0 %v820
    %2157 = vmatpush1.msra.mxu0 %v819
    %2158 = vmatprep.subr.mxu0 %v816
    %2159 = vmatpush1.msra.mxu0 %v815
    %2160 = vmatprep.subr.mxu0 %v812
    %2161 = vmatpush1.msra.mxu0 %v811
    %2162 = vmatprep.subr.mxu0 %v808
    %2163 = vmatpush1.msra.mxu0 %v807
    %2164 = vmatprep.subr.mxu0 %v804
    %2165 = vmatpush1.msra.mxu0 %v803
    %2166 = vmatprep.subr.mxu0 %v800
    %2167 = vmatpush1.msra.mxu0 %v799
    %2168 = vmatprep.subr.mxu0 %v796
    %2169 = vmatpush1.msra.mxu0 %v795
    %2170 = vmatprep.subr.mxu0 %v792
    %2171 = vmatpush1.msra.mxu0 %v791
    %2172 = vmatprep.subr.mxu0 %v788
    %2173 = vmatpush1.msra.mxu0 %v787
    %2174 = vmatprep.subr.mxu0 %v784
    %2175 = vmatpush1.msra.mxu0 %v783
    %2176 = vmatprep.subr.mxu0 %v780
    %2177 = vmatpush1.msra.mxu0 %v779
    %2178 = vmatprep.subr.mxu0 %v776
    %2179 = vmatpush1.msra.mxu0 %v775
    %2180 = vmatprep.subr.mxu0 %v772
    %2181 = vmatpush1.msra.mxu0 %v771
    %2182 = vmatprep.subr.mxu0 0.0
    %2183 = vmatpush2.msra.mxu0 0.0
    %2184 = vmatprep.subr.mxu0 0.0
    %2185 = vmatpush2.msra.mxu0 0.0
    %2186 = vmatprep.subr.mxu0 0.0
    %2187 = vmatpush2.msra.mxu0 0.0
    %2188 = vmatprep.subr.mxu0 0.0
    %2189 = vmatpush2.msra.mxu0 0.0
    %2190 = vmatprep.subr.mxu0 0.0
    %2191 = vmatpush2.msra.mxu0 0.0
    %2192 = vmatprep.subr.mxu0 0.0
    %2193 = vmatpush2.msra.mxu0 0.0
    %2194 = vmatprep.subr.mxu0 0.0
    %2195 = vmatpush2.msra.mxu0 0.0
    %2196 = vmatprep.subr.mxu0 0.0
    %2197 = vmatpush2.msra.mxu0 0.0
    %2198 = vmatprep.subr.mxu0 0.0
    %2199 = vmatpush2.msra.mxu0 0.0
    %2200 = vmatprep.subr.mxu0 0.0
    %2201 = vmatpush2.msra.mxu0 0.0
    %2202 = vmatprep.subr.mxu0 0.0
    %2203 = vmatpush2.msra.mxu0 0.0
    %2204 = vmatprep.subr.mxu0 0.0
    %2205 = vmatpush2.msra.mxu0 0.0
    %2206 = vmatprep.subr.mxu0 0.0
    %2207 = vmatpush2.msra.mxu0 0.0
    %2208 = vmatprep.subr.mxu0 0.0
    %2209 = vmatpush2.msra.mxu0 0.0
    %2210 = vmatprep.subr.mxu0 0.0
    %2211 = vmatpush2.msra.mxu0 0.0
    %2212 = vmatprep.subr.mxu0 0.0
    %2213 = vmatpush2.msra.mxu0 0.0
    %2214 = vmatprep.mubr.f32.mxu0 0.0
    %2215 = vmatmul.mubr.f32.gmra.mxu0 %v2071
    %v2216 = vpop.f32.mrf.mxu0
    %v2217 = vadd.f32 0.0, %v2216
    %v2218 = vpop.f32.mrf.mxu0
    %v2219 = vadd.f32 0.0, %v2218
    %2220 = vdwg.mxu0
    %v2221 = vadd.f32 %v2075, %v2146
    %v2222 = vadd.f32 %v2076, %v2148
    %v2223 = vadd.f32 %v2077, %v2217
    %v2224 = vadd.f32 %v2078, %v2219
    %v2225 = vxor.u32 %v2221, 2147483648
    %v2226 = vmul.f32 %v2225, 1.442695
    %v2227 = vpow.pop %v2226
    %v2228 = vadd.f32 %v2227, 1.0
    %v2229 = vrcp.pop %v2228
    %v2230 = vmul.f32 1.0, %v2229
    %v2231 = vxor.u32 %v2222, 2147483648
    %v2232 = vmul.f32 %v2231, 1.442695
    %v2233 = vpow.pop %v2232
    %v2234 = vadd.f32 %v2233, 1.0
    %v2235 = vrcp.pop %v2234
    %v2236 = vmul.f32 1.0, %v2235
    %v2237 = vtanh.pop %v2223
    %v2238 = vxor.u32 %v2224, 2147483648
    %v2239 = vmul.f32 %v2238, 1.442695
    %v2240 = vpow.pop %v2239
    %v2241 = vadd.f32 %v2240, 1.0
    %v2242 = vrcp.pop %v2241
    %v2243 = vmul.f32 1.0, %v2242
    %v2244 = vmul.f32 %v2236, %v2069
    %v2245 = vmul.f32 %v2230, %v2237
    %v2246 = vadd.f32 %v2244, %v2245
    %v2247 = vtanh.pop %v2246
    %v2248 = vmul.f32 %v2243, %v2247
    %s2249 = smul.u32 8, 4
    %s2250 = smul.addr %s2249, 8
    %s2251 = scalar_lea.vmem [#allocation2], %s2250
    %v2252 = vld [vmem:[%s2251] sm:$0xff]
    %v2253 = vld [vmem:[%s2251 + $0x8] sm:$0xff]
    %v2254 = vld [vmem:[%s2251 + $0x10] sm:$0xff]
    %v2255 = vld [vmem:[%s2251 + $0x18] sm:$0xff]
    %2256 = vmatprep.subr.mxu0 %v830
    %2257 = vmatpush1.msra.mxu0 %v829
    %2258 = vmatprep.subr.mxu0 %v826
    %2259 = vmatpush1.msra.mxu0 %v825
    %2260 = vmatprep.subr.mxu0 %v822
    %2261 = vmatpush1.msra.mxu0 %v821
    %2262 = vmatprep.subr.mxu0 %v818
    %2263 = vmatpush1.msra.mxu0 %v817
    %2264 = vmatprep.subr.mxu0 %v814
    %2265 = vmatpush1.msra.mxu0 %v813
    %2266 = vmatprep.subr.mxu0 %v810
    %2267 = vmatpush1.msra.mxu0 %v809
    %2268 = vmatprep.subr.mxu0 %v806
    %2269 = vmatpush1.msra.mxu0 %v805
    %2270 = vmatprep.subr.mxu0 %v802
    %2271 = vmatpush1.msra.mxu0 %v801
    %2272 = vmatprep.subr.mxu0 %v798
    %2273 = vmatpush1.msra.mxu0 %v797
    %2274 = vmatprep.subr.mxu0 %v794
    %2275 = vmatpush1.msra.mxu0 %v793
    %2276 = vmatprep.subr.mxu0 %v790
    %2277 = vmatpush1.msra.mxu0 %v789
    %2278 = vmatprep.subr.mxu0 %v786
    %2279 = vmatpush1.msra.mxu0 %v785
    %2280 = vmatprep.subr.mxu0 %v782
    %2281 = vmatpush1.msra.mxu0 %v781
    %2282 = vmatprep.subr.mxu0 %v778
    %2283 = vmatpush1.msra.mxu0 %v777
    %2284 = vmatprep.subr.mxu0 %v774
    %2285 = vmatpush1.msra.mxu0 %v773
    %2286 = vmatprep.subr.mxu0 %v770
    %2287 = vmatpush1.msra.mxu0 %v769
    %2288 = vmatprep.subr.mxu0 0.0
    %2289 = vmatpush2.msra.mxu0 0.0
    %2290 = vmatprep.subr.mxu0 0.0
    %2291 = vmatpush2.msra.mxu0 0.0
    %2292 = vmatprep.subr.mxu0 0.0
    %2293 = vmatpush2.msra.mxu0 0.0
    %2294 = vmatprep.subr.mxu0 0.0
    %2295 = vmatpush2.msra.mxu0 0.0
    %2296 = vmatprep.subr.mxu0 0.0
    %2297 = vmatpush2.msra.mxu0 0.0
    %2298 = vmatprep.subr.mxu0 0.0
    %2299 = vmatpush2.msra.mxu0 0.0
    %2300 = vmatprep.subr.mxu0 0.0
    %2301 = vmatpush2.msra.mxu0 0.0
    %2302 = vmatprep.subr.mxu0 0.0
    %2303 = vmatpush2.msra.mxu0 0.0
    %2304 = vmatprep.subr.mxu0 0.0
    %2305 = vmatpush2.msra.mxu0 0.0
    %2306 = vmatprep.subr.mxu0 0.0
    %2307 = vmatpush2.msra.mxu0 0.0
    %2308 = vmatprep.subr.mxu0 0.0
    %2309 = vmatpush2.msra.mxu0 0.0
    %2310 = vmatprep.subr.mxu0 0.0
    %2311 = vmatpush2.msra.mxu0 0.0
    %2312 = vmatprep.subr.mxu0 0.0
    %2313 = vmatpush2.msra.mxu0 0.0
    %2314 = vmatprep.subr.mxu0 0.0
    %2315 = vmatpush2.msra.mxu0 0.0
    %2316 = vmatprep.subr.mxu0 0.0
    %2317 = vmatpush2.msra.mxu0 0.0
    %2318 = vmatprep.subr.mxu0 0.0
    %2319 = vmatpush2.msra.mxu0 0.0
    %2320 = vmatprep.mubr.f32.mxu0 0.0
    %2321 = vmatmul.mubr.f32.gmra.mxu0 %v2248
    %v2322 = vpop.f32.mrf.mxu0
    %v2323 = vadd.f32 0.0, %v2322
    %v2324 = vpop.f32.mrf.mxu0
    %v2325 = vadd.f32 0.0, %v2324
    %2326 = vdwg.mxu0
    %2327 = vmatprep.subr.mxu0 %v832
    %2328 = vmatpush1.msra.mxu0 %v831
    %2329 = vmatprep.subr.mxu0 %v828
    %2330 = vmatpush1.msra.mxu0 %v827
    %2331 = vmatprep.subr.mxu0 %v824
    %2332 = vmatpush1.msra.mxu0 %v823
    %2333 = vmatprep.subr.mxu0 %v820
    %2334 = vmatpush1.msra.mxu0 %v819
    %2335 = vmatprep.subr.mxu0 %v816
    %2336 = vmatpush1.msra.mxu0 %v815
    %2337 = vmatprep.subr.mxu0 %v812
    %2338 = vmatpush1.msra.mxu0 %v811
    %2339 = vmatprep.subr.mxu0 %v808
    %2340 = vmatpush1.msra.mxu0 %v807
    %2341 = vmatprep.subr.mxu0 %v804
    %2342 = vmatpush1.msra.mxu0 %v803
    %2343 = vmatprep.subr.mxu0 %v800
    %2344 = vmatpush1.msra.mxu0 %v799
    %2345 = vmatprep.subr.mxu0 %v796
    %2346 = vmatpush1.msra.mxu0 %v795
    %2347 = vmatprep.subr.mxu0 %v792
    %2348 = vmatpush1.msra.mxu0 %v791
    %2349 = vmatprep.subr.mxu0 %v788
    %2350 = vmatpush1.msra.mxu0 %v787
    %2351 = vmatprep.subr.mxu0 %v784
    %2352 = vmatpush1.msra.mxu0 %v783
    %2353 = vmatprep.subr.mxu0 %v780
    %2354 = vmatpush1.msra.mxu0 %v779
    %2355 = vmatprep.subr.mxu0 %v776
    %2356 = vmatpush1.msra.mxu0 %v775
    %2357 = vmatprep.subr.mxu0 %v772
    %2358 = vmatpush1.msra.mxu0 %v771
    %2359 = vmatprep.subr.mxu0 0.0
    %2360 = vmatpush2.msra.mxu0 0.0
    %2361 = vmatprep.subr.mxu0 0.0
    %2362 = vmatpush2.msra.mxu0 0.0
    %2363 = vmatprep.subr.mxu0 0.0
    %2364 = vmatpush2.msra.mxu0 0.0
    %2365 = vmatprep.subr.mxu0 0.0
    %2366 = vmatpush2.msra.mxu0 0.0
    %2367 = vmatprep.subr.mxu0 0.0
    %2368 = vmatpush2.msra.mxu0 0.0
    %2369 = vmatprep.subr.mxu0 0.0
    %2370 = vmatpush2.msra.mxu0 0.0
    %2371 = vmatprep.subr.mxu0 0.0
    %2372 = vmatpush2.msra.mxu0 0.0
    %2373 = vmatprep.subr.mxu0 0.0
    %2374 = vmatpush2.msra.mxu0 0.0
    %2375 = vmatprep.subr.mxu0 0.0
    %2376 = vmatpush2.msra.mxu0 0.0
    %2377 = vmatprep.subr.mxu0 0.0
    %2378 = vmatpush2.msra.mxu0 0.0
    %2379 = vmatprep.subr.mxu0 0.0
    %2380 = vmatpush2.msra.mxu0 0.0
    %2381 = vmatprep.subr.mxu0 0.0
    %2382 = vmatpush2.msra.mxu0 0.0
    %2383 = vmatprep.subr.mxu0 0.0
    %2384 = vmatpush2.msra.mxu0 0.0
    %2385 = vmatprep.subr.mxu0 0.0
    %2386 = vmatpush2.msra.mxu0 0.0
    %2387 = vmatprep.subr.mxu0 0.0
    %2388 = vmatpush2.msra.mxu0 0.0
    %2389 = vmatprep.subr.mxu0 0.0
    %2390 = vmatpush2.msra.mxu0 0.0
    %2391 = vmatprep.mubr.f32.mxu0 0.0
    %2392 = vmatmul.mubr.f32.gmra.mxu0 %v2248
    %v2393 = vpop.f32.mrf.mxu0
    %v2394 = vadd.f32 0.0, %v2393
    %v2395 = vpop.f32.mrf.mxu0
    %v2396 = vadd.f32 0.0, %v2395
    %2397 = vdwg.mxu0
    %v2398 = vadd.f32 %v2252, %v2323
    %v2399 = vadd.f32 %v2253, %v2325
    %v2400 = vadd.f32 %v2254, %v2394
    %v2401 = vadd.f32 %v2255, %v2396
    %v2402 = vxor.u32 %v2398, 2147483648
    %v2403 = vmul.f32 %v2402, 1.442695
    %v2404 = vpow.pop %v2403
    %v2405 = vadd.f32 %v2404, 1.0
    %v2406 = vrcp.pop %v2405
    %v2407 = vmul.f32 1.0, %v2406
    %v2408 = vxor.u32 %v2399, 2147483648
    %v2409 = vmul.f32 %v2408, 1.442695
    %v2410 = vpow.pop %v2409
    %v2411 = vadd.f32 %v2410, 1.0
    %v2412 = vrcp.pop %v2411
    %v2413 = vmul.f32 1.0, %v2412
    %v2414 = vtanh.pop %v2400
    %v2415 = vxor.u32 %v2401, 2147483648
    %v2416 = vmul.f32 %v2415, 1.442695
    %v2417 = vpow.pop %v2416
    %v2418 = vadd.f32 %v2417, 1.0
    %v2419 = vrcp.pop %v2418
    %v2420 = vmul.f32 1.0, %v2419
    %v2421 = vmul.f32 %v2413, %v2246
    %v2422 = vmul.f32 %v2407, %v2414
    %v2423 = vadd.f32 %v2421, %v2422
    %v2424 = vtanh.pop %v2423
    %v2425 = vmul.f32 %v2420, %v2424
    %s2426 = smul.u32 9, 4
    %s2427 = smul.addr %s2426, 8
    %s2428 = scalar_lea.vmem [#allocation2], %s2427
    %v2429 = vld [vmem:[%s2428] sm:$0xff]
    %v2430 = vld [vmem:[%s2428 + $0x8] sm:$0xff]
    %v2431 = vld [vmem:[%s2428 + $0x10] sm:$0xff]
    %v2432 = vld [vmem:[%s2428 + $0x18] sm:$0xff]
    %2433 = vmatprep.subr.mxu0 %v830
    %2434 = vmatpush1.msra.mxu0 %v829
    %2435 = vmatprep.subr.mxu0 %v826
    %2436 = vmatpush1.msra.mxu0 %v825
    %2437 = vmatprep.subr.mxu0 %v822
    %2438 = vmatpush1.msra.mxu0 %v821
    %2439 = vmatprep.subr.mxu0 %v818
    %2440 = vmatpush1.msra.mxu0 %v817
    %2441 = vmatprep.subr.mxu0 %v814
    %2442 = vmatpush1.msra.mxu0 %v813
    %2443 = vmatprep.subr.mxu0 %v810
    %2444 = vmatpush1.msra.mxu0 %v809
    %2445 = vmatprep.subr.mxu0 %v806
    %2446 = vmatpush1.msra.mxu0 %v805
    %2447 = vmatprep.subr.mxu0 %v802
    %2448 = vmatpush1.msra.mxu0 %v801
    %2449 = vmatprep.subr.mxu0 %v798
    %2450 = vmatpush1.msra.mxu0 %v797
    %2451 = vmatprep.subr.mxu0 %v794
    %2452 = vmatpush1.msra.mxu0 %v793
    %2453 = vmatprep.subr.mxu0 %v790
    %2454 = vmatpush1.msra.mxu0 %v789
    %2455 = vmatprep.subr.mxu0 %v786
    %2456 = vmatpush1.msra.mxu0 %v785
    %2457 = vmatprep.subr.mxu0 %v782
    %2458 = vmatpush1.msra.mxu0 %v781
    %2459 = vmatprep.subr.mxu0 %v778
    %2460 = vmatpush1.msra.mxu0 %v777
    %2461 = vmatprep.subr.mxu0 %v774
    %2462 = vmatpush1.msra.mxu0 %v773
    %2463 = vmatprep.subr.mxu0 %v770
    %2464 = vmatpush1.msra.mxu0 %v769
    %2465 = vmatprep.subr.mxu0 0.0
    %2466 = vmatpush2.msra.mxu0 0.0
    %2467 = vmatprep.subr.mxu0 0.0
    %2468 = vmatpush2.msra.mxu0 0.0
    %2469 = vmatprep.subr.mxu0 0.0
    %2470 = vmatpush2.msra.mxu0 0.0
    %2471 = vmatprep.subr.mxu0 0.0
    %2472 = vmatpush2.msra.mxu0 0.0
    %2473 = vmatprep.subr.mxu0 0.0
    %2474 = vmatpush2.msra.mxu0 0.0
    %2475 = vmatprep.subr.mxu0 0.0
    %2476 = vmatpush2.msra.mxu0 0.0
    %2477 = vmatprep.subr.mxu0 0.0
    %2478 = vmatpush2.msra.mxu0 0.0
    %2479 = vmatprep.subr.mxu0 0.0
    %2480 = vmatpush2.msra.mxu0 0.0
    %2481 = vmatprep.subr.mxu0 0.0
    %2482 = vmatpush2.msra.mxu0 0.0
    %2483 = vmatprep.subr.mxu0 0.0
    %2484 = vmatpush2.msra.mxu0 0.0
    %2485 = vmatprep.subr.mxu0 0.0
    %2486 = vmatpush2.msra.mxu0 0.0
    %2487 = vmatprep.subr.mxu0 0.0
    %2488 = vmatpush2.msra.mxu0 0.0
    %2489 = vmatprep.subr.mxu0 0.0
    %2490 = vmatpush2.msra.mxu0 0.0
    %2491 = vmatprep.subr.mxu0 0.0
    %2492 = vmatpush2.msra.mxu0 0.0
    %2493 = vmatprep.subr.mxu0 0.0
    %2494 = vmatpush2.msra.mxu0 0.0
    %2495 = vmatprep.subr.mxu0 0.0
    %2496 = vmatpush2.msra.mxu0 0.0
    %2497 = vmatprep.mubr.f32.mxu0 0.0
    %2498 = vmatmul.mubr.f32.gmra.mxu0 %v2425
    %v2499 = vpop.f32.mrf.mxu0
    %v2500 = vadd.f32 0.0, %v2499
    %v2501 = vpop.f32.mrf.mxu0
    %v2502 = vadd.f32 0.0, %v2501
    %2503 = vdwg.mxu0
    %2504 = vmatprep.subr.mxu0 %v832
    %2505 = vmatpush1.msra.mxu0 %v831
    %2506 = vmatprep.subr.mxu0 %v828
    %2507 = vmatpush1.msra.mxu0 %v827
    %2508 = vmatprep.subr.mxu0 %v824
    %2509 = vmatpush1.msra.mxu0 %v823
    %2510 = vmatprep.subr.mxu0 %v820
    %2511 = vmatpush1.msra.mxu0 %v819
    %2512 = vmatprep.subr.mxu0 %v816
    %2513 = vmatpush1.msra.mxu0 %v815
    %2514 = vmatprep.subr.mxu0 %v812
    %2515 = vmatpush1.msra.mxu0 %v811
    %2516 = vmatprep.subr.mxu0 %v808
    %2517 = vmatpush1.msra.mxu0 %v807
    %2518 = vmatprep.subr.mxu0 %v804
    %2519 = vmatpush1.msra.mxu0 %v803
    %2520 = vmatprep.subr.mxu0 %v800
    %2521 = vmatpush1.msra.mxu0 %v799
    %2522 = vmatprep.subr.mxu0 %v796
    %2523 = vmatpush1.msra.mxu0 %v795
    %2524 = vmatprep.subr.mxu0 %v792
    %2525 = vmatpush1.msra.mxu0 %v791
    %2526 = vmatprep.subr.mxu0 %v788
    %2527 = vmatpush1.msra.mxu0 %v787
    %2528 = vmatprep.subr.mxu0 %v784
    %2529 = vmatpush1.msra.mxu0 %v783
    %2530 = vmatprep.subr.mxu0 %v780
    %2531 = vmatpush1.msra.mxu0 %v779
    %2532 = vmatprep.subr.mxu0 %v776
    %2533 = vmatpush1.msra.mxu0 %v775
    %2534 = vmatprep.subr.mxu0 %v772
    %2535 = vmatpush1.msra.mxu0 %v771
    %2536 = vmatprep.subr.mxu0 0.0
    %2537 = vmatpush2.msra.mxu0 0.0
    %2538 = vmatprep.subr.mxu0 0.0
    %2539 = vmatpush2.msra.mxu0 0.0
    %2540 = vmatprep.subr.mxu0 0.0
    %2541 = vmatpush2.msra.mxu0 0.0
    %2542 = vmatprep.subr.mxu0 0.0
    %2543 = vmatpush2.msra.mxu0 0.0
    %2544 = vmatprep.subr.mxu0 0.0
    %2545 = vmatpush2.msra.mxu0 0.0
    %2546 = vmatprep.subr.mxu0 0.0
    %2547 = vmatpush2.msra.mxu0 0.0
    %2548 = vmatprep.subr.mxu0 0.0
    %2549 = vmatpush2.msra.mxu0 0.0
    %2550 = vmatprep.subr.mxu0 0.0
    %2551 = vmatpush2.msra.mxu0 0.0
    %2552 = vmatprep.subr.mxu0 0.0
    %2553 = vmatpush2.msra.mxu0 0.0
    %2554 = vmatprep.subr.mxu0 0.0
    %2555 = vmatpush2.msra.mxu0 0.0
    %2556 = vmatprep.subr.mxu0 0.0
    %2557 = vmatpush2.msra.mxu0 0.0
    %2558 = vmatprep.subr.mxu0 0.0
    %2559 = vmatpush2.msra.mxu0 0.0
    %2560 = vmatprep.subr.mxu0 0.0
    %2561 = vmatpush2.msra.mxu0 0.0
    %2562 = vmatprep.subr.mxu0 0.0
    %2563 = vmatpush2.msra.mxu0 0.0
    %2564 = vmatprep.subr.mxu0 0.0
    %2565 = vmatpush2.msra.mxu0 0.0
    %2566 = vmatprep.subr.mxu0 0.0
    %2567 = vmatpush2.msra.mxu0 0.0
    %2568 = vmatprep.mubr.f32.mxu0 0.0
    %2569 = vmatmul.mubr.f32.gmra.mxu0 %v2425
    %v2570 = vpop.f32.mrf.mxu0
    %v2571 = vadd.f32 0.0, %v2570
    %v2572 = vpop.f32.mrf.mxu0
    %v2573 = vadd.f32 0.0, %v2572
    %2574 = vdwg.mxu0
    %v2575 = vadd.f32 %v2429, %v2500
    %v2576 = vadd.f32 %v2430, %v2502
    %v2577 = vadd.f32 %v2431, %v2571
    %v2578 = vadd.f32 %v2432, %v2573
    %v2579 = vxor.u32 %v2575, 2147483648
    %v2580 = vmul.f32 %v2579, 1.442695
    %v2581 = vpow.pop %v2580
    %v2582 = vadd.f32 %v2581, 1.0
    %v2583 = vrcp.pop %v2582
    %v2584 = vmul.f32 1.0, %v2583
    %v2585 = vxor.u32 %v2576, 2147483648
    %v2586 = vmul.f32 %v2585, 1.442695
    %v2587 = vpow.pop %v2586
    %v2588 = vadd.f32 %v2587, 1.0
    %v2589 = vrcp.pop %v2588
    %v2590 = vmul.f32 1.0, %v2589
    %v2591 = vtanh.pop %v2577
    %v2592 = vxor.u32 %v2578, 2147483648
    %v2593 = vmul.f32 %v2592, 1.442695
    %v2594 = vpow.pop %v2593
    %v2595 = vadd.f32 %v2594, 1.0
    %v2596 = vrcp.pop %v2595
    %v2597 = vmul.f32 1.0, %v2596
    %v2598 = vmul.f32 %v2590, %v2423
    %v2599 = vmul.f32 %v2584, %v2591
    %v2600 = vadd.f32 %v2598, %v2599
    %v2601 = vtanh.pop %v2600
    %v2602 = vmul.f32 %v2597, %v2601
    %s2603 = smul.u32 10, 4
    %s2604 = smul.addr %s2603, 8
    %s2605 = scalar_lea.vmem [#allocation2], %s2604
    %v2606 = vld [vmem:[%s2605] sm:$0xff]
    %v2607 = vld [vmem:[%s2605 + $0x8] sm:$0xff]
    %v2608 = vld [vmem:[%s2605 + $0x10] sm:$0xff]
    %v2609 = vld [vmem:[%s2605 + $0x18] sm:$0xff]
    %2610 = vmatprep.subr.mxu0 %v830
    %2611 = vmatpush1.msra.mxu0 %v829
    %2612 = vmatprep.subr.mxu0 %v826
    %2613 = vmatpush1.msra.mxu0 %v825
    %2614 = vmatprep.subr.mxu0 %v822
    %2615 = vmatpush1.msra.mxu0 %v821
    %2616 = vmatprep.subr.mxu0 %v818
    %2617 = vmatpush1.msra.mxu0 %v817
    %2618 = vmatprep.subr.mxu0 %v814
    %2619 = vmatpush1.msra.mxu0 %v813
    %2620 = vmatprep.subr.mxu0 %v810
    %2621 = vmatpush1.msra.mxu0 %v809
    %2622 = vmatprep.subr.mxu0 %v806
    %2623 = vmatpush1.msra.mxu0 %v805
    %2624 = vmatprep.subr.mxu0 %v802
    %2625 = vmatpush1.msra.mxu0 %v801
    %2626 = vmatprep.subr.mxu0 %v798
    %2627 = vmatpush1.msra.mxu0 %v797
    %2628 = vmatprep.subr.mxu0 %v794
    %2629 = vmatpush1.msra.mxu0 %v793
    %2630 = vmatprep.subr.mxu0 %v790
    %2631 = vmatpush1.msra.mxu0 %v789
    %2632 = vmatprep.subr.mxu0 %v786
    %2633 = vmatpush1.msra.mxu0 %v785
    %2634 = vmatprep.subr.mxu0 %v782
    %2635 = vmatpush1.msra.mxu0 %v781
    %2636 = vmatprep.subr.mxu0 %v778
    %2637 = vmatpush1.msra.mxu0 %v777
    %2638 = vmatprep.subr.mxu0 %v774
    %2639 = vmatpush1.msra.mxu0 %v773
    %2640 = vmatprep.subr.mxu0 %v770
    %2641 = vmatpush1.msra.mxu0 %v769
    %2642 = vmatprep.subr.mxu0 0.0
    %2643 = vmatpush2.msra.mxu0 0.0
    %2644 = vmatprep.subr.mxu0 0.0
    %2645 = vmatpush2.msra.mxu0 0.0
    %2646 = vmatprep.subr.mxu0 0.0
    %2647 = vmatpush2.msra.mxu0 0.0
    %2648 = vmatprep.subr.mxu0 0.0
    %2649 = vmatpush2.msra.mxu0 0.0
    %2650 = vmatprep.subr.mxu0 0.0
    %2651 = vmatpush2.msra.mxu0 0.0
    %2652 = vmatprep.subr.mxu0 0.0
    %2653 = vmatpush2.msra.mxu0 0.0
    %2654 = vmatprep.subr.mxu0 0.0
    %2655 = vmatpush2.msra.mxu0 0.0
    %2656 = vmatprep.subr.mxu0 0.0
    %2657 = vmatpush2.msra.mxu0 0.0
    %2658 = vmatprep.subr.mxu0 0.0
    %2659 = vmatpush2.msra.mxu0 0.0
    %2660 = vmatprep.subr.mxu0 0.0
    %2661 = vmatpush2.msra.mxu0 0.0
    %2662 = vmatprep.subr.mxu0 0.0
    %2663 = vmatpush2.msra.mxu0 0.0
    %2664 = vmatprep.subr.mxu0 0.0
    %2665 = vmatpush2.msra.mxu0 0.0
    %2666 = vmatprep.subr.mxu0 0.0
    %2667 = vmatpush2.msra.mxu0 0.0
    %2668 = vmatprep.subr.mxu0 0.0
    %2669 = vmatpush2.msra.mxu0 0.0
    %2670 = vmatprep.subr.mxu0 0.0
    %2671 = vmatpush2.msra.mxu0 0.0
    %2672 = vmatprep.subr.mxu0 0.0
    %2673 = vmatpush2.msra.mxu0 0.0
    %2674 = vmatprep.mubr.f32.mxu0 0.0
    %2675 = vmatmul.mubr.f32.gmra.mxu0 %v2602
    %v2676 = vpop.f32.mrf.mxu0
    %v2677 = vadd.f32 0.0, %v2676
    %v2678 = vpop.f32.mrf.mxu0
    %v2679 = vadd.f32 0.0, %v2678
    %2680 = vdwg.mxu0
    %2681 = vmatprep.subr.mxu0 %v832
    %2682 = vmatpush1.msra.mxu0 %v831
    %2683 = vmatprep.subr.mxu0 %v828
    %2684 = vmatpush1.msra.mxu0 %v827
    %2685 = vmatprep.subr.mxu0 %v824
    %2686 = vmatpush1.msra.mxu0 %v823
    %2687 = vmatprep.subr.mxu0 %v820
    %2688 = vmatpush1.msra.mxu0 %v819
    %2689 = vmatprep.subr.mxu0 %v816
    %2690 = vmatpush1.msra.mxu0 %v815
    %2691 = vmatprep.subr.mxu0 %v812
    %2692 = vmatpush1.msra.mxu0 %v811
    %2693 = vmatprep.subr.mxu0 %v808
    %2694 = vmatpush1.msra.mxu0 %v807
    %2695 = vmatprep.subr.mxu0 %v804
    %2696 = vmatpush1.msra.mxu0 %v803
    %2697 = vmatprep.subr.mxu0 %v800
    %2698 = vmatpush1.msra.mxu0 %v799
    %2699 = vmatprep.subr.mxu0 %v796
    %2700 = vmatpush1.msra.mxu0 %v795
    %2701 = vmatprep.subr.mxu0 %v792
    %2702 = vmatpush1.msra.mxu0 %v791
    %2703 = vmatprep.subr.mxu0 %v788
    %2704 = vmatpush1.msra.mxu0 %v787
    %2705 = vmatprep.subr.mxu0 %v784
    %2706 = vmatpush1.msra.mxu0 %v783
    %2707 = vmatprep.subr.mxu0 %v780
    %2708 = vmatpush1.msra.mxu0 %v779
    %2709 = vmatprep.subr.mxu0 %v776
    %2710 = vmatpush1.msra.mxu0 %v775
    %2711 = vmatprep.subr.mxu0 %v772
    %2712 = vmatpush1.msra.mxu0 %v771
    %2713 = vmatprep.subr.mxu0 0.0
    %2714 = vmatpush2.msra.mxu0 0.0
    %2715 = vmatprep.subr.mxu0 0.0
    %2716 = vmatpush2.msra.mxu0 0.0
    %2717 = vmatprep.subr.mxu0 0.0
    %2718 = vmatpush2.msra.mxu0 0.0
    %2719 = vmatprep.subr.mxu0 0.0
    %2720 = vmatpush2.msra.mxu0 0.0
    %2721 = vmatprep.subr.mxu0 0.0
    %2722 = vmatpush2.msra.mxu0 0.0
    %2723 = vmatprep.subr.mxu0 0.0
    %2724 = vmatpush2.msra.mxu0 0.0
    %2725 = vmatprep.subr.mxu0 0.0
    %2726 = vmatpush2.msra.mxu0 0.0
    %2727 = vmatprep.subr.mxu0 0.0
    %2728 = vmatpush2.msra.mxu0 0.0
    %2729 = vmatprep.subr.mxu0 0.0
    %2730 = vmatpush2.msra.mxu0 0.0
    %2731 = vmatprep.subr.mxu0 0.0
    %2732 = vmatpush2.msra.mxu0 0.0
    %2733 = vmatprep.subr.mxu0 0.0
    %2734 = vmatpush2.msra.mxu0 0.0
    %2735 = vmatprep.subr.mxu0 0.0
    %2736 = vmatpush2.msra.mxu0 0.0
    %2737 = vmatprep.subr.mxu0 0.0
    %2738 = vmatpush2.msra.mxu0 0.0
    %2739 = vmatprep.subr.mxu0 0.0
    %2740 = vmatpush2.msra.mxu0 0.0
    %2741 = vmatprep.subr.mxu0 0.0
    %2742 = vmatpush2.msra.mxu0 0.0
    %2743 = vmatprep.subr.mxu0 0.0
    %2744 = vmatpush2.msra.mxu0 0.0
    %2745 = vmatprep.mubr.f32.mxu0 0.0
    %2746 = vmatmul.mubr.f32.gmra.mxu0 %v2602
    %v2747 = vpop.f32.mrf.mxu0
    %v2748 = vadd.f32 0.0, %v2747
    %v2749 = vpop.f32.mrf.mxu0
    %v2750 = vadd.f32 0.0, %v2749
    %2751 = vdwg.mxu0
    %v2752 = vadd.f32 %v2606, %v2677
    %v2753 = vadd.f32 %v2607, %v2679
    %v2754 = vadd.f32 %v2608, %v2748
    %v2755 = vadd.f32 %v2609, %v2750
    %v2756 = vxor.u32 %v2752, 2147483648
    %v2757 = vmul.f32 %v2756, 1.442695
    %v2758 = vpow.pop %v2757
    %v2759 = vadd.f32 %v2758, 1.0
    %v2760 = vrcp.pop %v2759
    %v2761 = vmul.f32 1.0, %v2760
    %v2762 = vxor.u32 %v2753, 2147483648
    %v2763 = vmul.f32 %v2762, 1.442695
    %v2764 = vpow.pop %v2763
    %v2765 = vadd.f32 %v2764, 1.0
    %v2766 = vrcp.pop %v2765
    %v2767 = vmul.f32 1.0, %v2766
    %v2768 = vtanh.pop %v2754
    %v2769 = vxor.u32 %v2755, 2147483648
    %v2770 = vmul.f32 %v2769, 1.442695
    %v2771 = vpow.pop %v2770
    %v2772 = vadd.f32 %v2771, 1.0
    %v2773 = vrcp.pop %v2772
    %v2774 = vmul.f32 1.0, %v2773
    %v2775 = vmul.f32 %v2767, %v2600
    %v2776 = vmul.f32 %v2761, %v2768
    %v2777 = vadd.f32 %v2775, %v2776
    %v2778 = vtanh.pop %v2777
    %v2779 = vmul.f32 %v2774, %v2778
    %s2780 = smul.u32 11, 4
    %s2781 = smul.addr %s2780, 8
    %s2782 = scalar_lea.vmem [#allocation2], %s2781
    %v2783 = vld [vmem:[%s2782] sm:$0xff]
    %v2784 = vld [vmem:[%s2782 + $0x8] sm:$0xff]
    %v2785 = vld [vmem:[%s2782 + $0x10] sm:$0xff]
    %v2786 = vld [vmem:[%s2782 + $0x18] sm:$0xff]
    %2787 = vmatprep.subr.mxu0 %v830
    %2788 = vmatpush1.msra.mxu0 %v829
    %2789 = vmatprep.subr.mxu0 %v826
    %2790 = vmatpush1.msra.mxu0 %v825
    %2791 = vmatprep.subr.mxu0 %v822
    %2792 = vmatpush1.msra.mxu0 %v821
    %2793 = vmatprep.subr.mxu0 %v818
    %2794 = vmatpush1.msra.mxu0 %v817
    %2795 = vmatprep.subr.mxu0 %v814
    %2796 = vmatpush1.msra.mxu0 %v813
    %2797 = vmatprep.subr.mxu0 %v810
    %2798 = vmatpush1.msra.mxu0 %v809
    %2799 = vmatprep.subr.mxu0 %v806
    %2800 = vmatpush1.msra.mxu0 %v805
    %2801 = vmatprep.subr.mxu0 %v802
    %2802 = vmatpush1.msra.mxu0 %v801
    %2803 = vmatprep.subr.mxu0 %v798
    %2804 = vmatpush1.msra.mxu0 %v797
    %2805 = vmatprep.subr.mxu0 %v794
    %2806 = vmatpush1.msra.mxu0 %v793
    %2807 = vmatprep.subr.mxu0 %v790
    %2808 = vmatpush1.msra.mxu0 %v789
    %2809 = vmatprep.subr.mxu0 %v786
    %2810 = vmatpush1.msra.mxu0 %v785
    %2811 = vmatprep.subr.mxu0 %v782
    %2812 = vmatpush1.msra.mxu0 %v781
    %2813 = vmatprep.subr.mxu0 %v778
    %2814 = vmatpush1.msra.mxu0 %v777
    %2815 = vmatprep.subr.mxu0 %v774
    %2816 = vmatpush1.msra.mxu0 %v773
    %2817 = vmatprep.subr.mxu0 %v770
    %2818 = vmatpush1.msra.mxu0 %v769
    %2819 = vmatprep.subr.mxu0 0.0
    %2820 = vmatpush2.msra.mxu0 0.0
    %2821 = vmatprep.subr.mxu0 0.0
    %2822 = vmatpush2.msra.mxu0 0.0
    %2823 = vmatprep.subr.mxu0 0.0
    %2824 = vmatpush2.msra.mxu0 0.0
    %2825 = vmatprep.subr.mxu0 0.0
    %2826 = vmatpush2.msra.mxu0 0.0
    %2827 = vmatprep.subr.mxu0 0.0
    %2828 = vmatpush2.msra.mxu0 0.0
    %2829 = vmatprep.subr.mxu0 0.0
    %2830 = vmatpush2.msra.mxu0 0.0
    %2831 = vmatprep.subr.mxu0 0.0
    %2832 = vmatpush2.msra.mxu0 0.0
    %2833 = vmatprep.subr.mxu0 0.0
    %2834 = vmatpush2.msra.mxu0 0.0
    %2835 = vmatprep.subr.mxu0 0.0
    %2836 = vmatpush2.msra.mxu0 0.0
    %2837 = vmatprep.subr.mxu0 0.0
    %2838 = vmatpush2.msra.mxu0 0.0
    %2839 = vmatprep.subr.mxu0 0.0
    %2840 = vmatpush2.msra.mxu0 0.0
    %2841 = vmatprep.subr.mxu0 0.0
    %2842 = vmatpush2.msra.mxu0 0.0
    %2843 = vmatprep.subr.mxu0 0.0
    %2844 = vmatpush2.msra.mxu0 0.0
    %2845 = vmatprep.subr.mxu0 0.0
    %2846 = vmatpush2.msra.mxu0 0.0
    %2847 = vmatprep.subr.mxu0 0.0
    %2848 = vmatpush2.msra.mxu0 0.0
    %2849 = vmatprep.subr.mxu0 0.0
    %2850 = vmatpush2.msra.mxu0 0.0
    %2851 = vmatprep.mubr.f32.mxu0 0.0
    %2852 = vmatmul.mubr.f32.gmra.mxu0 %v2779
    %v2853 = vpop.f32.mrf.mxu0
    %v2854 = vadd.f32 0.0, %v2853
    %v2855 = vpop.f32.mrf.mxu0
    %v2856 = vadd.f32 0.0, %v2855
    %2857 = vdwg.mxu0
    %2858 = vmatprep.subr.mxu0 %v832
    %2859 = vmatpush1.msra.mxu0 %v831
    %2860 = vmatprep.subr.mxu0 %v828
    %2861 = vmatpush1.msra.mxu0 %v827
    %2862 = vmatprep.subr.mxu0 %v824
    %2863 = vmatpush1.msra.mxu0 %v823
    %2864 = vmatprep.subr.mxu0 %v820
    %2865 = vmatpush1.msra.mxu0 %v819
    %2866 = vmatprep.subr.mxu0 %v816
    %2867 = vmatpush1.msra.mxu0 %v815
    %2868 = vmatprep.subr.mxu0 %v812
    %2869 = vmatpush1.msra.mxu0 %v811
    %2870 = vmatprep.subr.mxu0 %v808
    %2871 = vmatpush1.msra.mxu0 %v807
    %2872 = vmatprep.subr.mxu0 %v804
    %2873 = vmatpush1.msra.mxu0 %v803
    %2874 = vmatprep.subr.mxu0 %v800
    %2875 = vmatpush1.msra.mxu0 %v799
    %2876 = vmatprep.subr.mxu0 %v796
    %2877 = vmatpush1.msra.mxu0 %v795
    %2878 = vmatprep.subr.mxu0 %v792
    %2879 = vmatpush1.msra.mxu0 %v791
    %2880 = vmatprep.subr.mxu0 %v788
    %2881 = vmatpush1.msra.mxu0 %v787
    %2882 = vmatprep.subr.mxu0 %v784
    %2883 = vmatpush1.msra.mxu0 %v783
    %2884 = vmatprep.subr.mxu0 %v780
    %2885 = vmatpush1.msra.mxu0 %v779
    %2886 = vmatprep.subr.mxu0 %v776
    %2887 = vmatpush1.msra.mxu0 %v775
    %2888 = vmatprep.subr.mxu0 %v772
    %2889 = vmatpush1.msra.mxu0 %v771
    %2890 = vmatprep.subr.mxu0 0.0
    %2891 = vmatpush2.msra.mxu0 0.0
    %2892 = vmatprep.subr.mxu0 0.0
    %2893 = vmatpush2.msra.mxu0 0.0
    %2894 = vmatprep.subr.mxu0 0.0
    %2895 = vmatpush2.msra.mxu0 0.0
    %2896 = vmatprep.subr.mxu0 0.0
    %2897 = vmatpush2.msra.mxu0 0.0
    %2898 = vmatprep.subr.mxu0 0.0
    %2899 = vmatpush2.msra.mxu0 0.0
    %2900 = vmatprep.subr.mxu0 0.0
    %2901 = vmatpush2.msra.mxu0 0.0
    %2902 = vmatprep.subr.mxu0 0.0
    %2903 = vmatpush2.msra.mxu0 0.0
    %2904 = vmatprep.subr.mxu0 0.0
    %2905 = vmatpush2.msra.mxu0 0.0
    %2906 = vmatprep.subr.mxu0 0.0
    %2907 = vmatpush2.msra.mxu0 0.0
    %2908 = vmatprep.subr.mxu0 0.0
    %2909 = vmatpush2.msra.mxu0 0.0
    %2910 = vmatprep.subr.mxu0 0.0
    %2911 = vmatpush2.msra.mxu0 0.0
    %2912 = vmatprep.subr.mxu0 0.0
    %2913 = vmatpush2.msra.mxu0 0.0
    %2914 = vmatprep.subr.mxu0 0.0
    %2915 = vmatpush2.msra.mxu0 0.0
    %2916 = vmatprep.subr.mxu0 0.0
    %2917 = vmatpush2.msra.mxu0 0.0
    %2918 = vmatprep.subr.mxu0 0.0
    %2919 = vmatpush2.msra.mxu0 0.0
    %2920 = vmatprep.subr.mxu0 0.0
    %2921 = vmatpush2.msra.mxu0 0.0
    %2922 = vmatprep.mubr.f32.mxu0 0.0
    %2923 = vmatmul.mubr.f32.gmra.mxu0 %v2779
    %v2924 = vpop.f32.mrf.mxu0
    %v2925 = vadd.f32 0.0, %v2924
    %v2926 = vpop.f32.mrf.mxu0
    %v2927 = vadd.f32 0.0, %v2926
    %2928 = vdwg.mxu0
    %v2929 = vadd.f32 %v2783, %v2854
    %v2930 = vadd.f32 %v2784, %v2856
    %v2931 = vadd.f32 %v2785, %v2925
    %v2932 = vadd.f32 %v2786, %v2927
    %v2933 = vxor.u32 %v2929, 2147483648
    %v2934 = vmul.f32 %v2933, 1.442695
    %v2935 = vpow.pop %v2934
    %v2936 = vadd.f32 %v2935, 1.0
    %v2937 = vrcp.pop %v2936
    %v2938 = vmul.f32 1.0, %v2937
    %v2939 = vxor.u32 %v2930, 2147483648
    %v2940 = vmul.f32 %v2939, 1.442695
    %v2941 = vpow.pop %v2940
    %v2942 = vadd.f32 %v2941, 1.0
    %v2943 = vrcp.pop %v2942
    %v2944 = vmul.f32 1.0, %v2943
    %v2945 = vtanh.pop %v2931
    %v2946 = vxor.u32 %v2932, 2147483648
    %v2947 = vmul.f32 %v2946, 1.442695
    %v2948 = vpow.pop %v2947
    %v2949 = vadd.f32 %v2948, 1.0
    %v2950 = vrcp.pop %v2949
    %v2951 = vmul.f32 1.0, %v2950
    %v2952 = vmul.f32 %v2944, %v2777
    %v2953 = vmul.f32 %v2938, %v2945
    %v2954 = vadd.f32 %v2952, %v2953
    %v2955 = vtanh.pop %v2954
    %v2956 = vmul.f32 %v2951, %v2955
    %s2957 = smul.u32 12, 4
    %s2958 = smul.addr %s2957, 8
    %s2959 = scalar_lea.vmem [#allocation2], %s2958
    %v2960 = vld [vmem:[%s2959] sm:$0xff]
    %v2961 = vld [vmem:[%s2959 + $0x8] sm:$0xff]
    %v2962 = vld [vmem:[%s2959 + $0x10] sm:$0xff]
    %v2963 = vld [vmem:[%s2959 + $0x18] sm:$0xff]
    %2964 = vmatprep.subr.mxu0 %v830
    %2965 = vmatpush1.msra.mxu0 %v829
    %2966 = vmatprep.subr.mxu0 %v826
    %2967 = vmatpush1.msra.mxu0 %v825
    %2968 = vmatprep.subr.mxu0 %v822
    %2969 = vmatpush1.msra.mxu0 %v821
    %2970 = vmatprep.subr.mxu0 %v818
    %2971 = vmatpush1.msra.mxu0 %v817
    %2972 = vmatprep.subr.mxu0 %v814
    %2973 = vmatpush1.msra.mxu0 %v813
    %2974 = vmatprep.subr.mxu0 %v810
    %2975 = vmatpush1.msra.mxu0 %v809
    %2976 = vmatprep.subr.mxu0 %v806
    %2977 = vmatpush1.msra.mxu0 %v805
    %2978 = vmatprep.subr.mxu0 %v802
    %2979 = vmatpush1.msra.mxu0 %v801
    %2980 = vmatprep.subr.mxu0 %v798
    %2981 = vmatpush1.msra.mxu0 %v797
    %2982 = vmatprep.subr.mxu0 %v794
    %2983 = vmatpush1.msra.mxu0 %v793
    %2984 = vmatprep.subr.mxu0 %v790
    %2985 = vmatpush1.msra.mxu0 %v789
    %2986 = vmatprep.subr.mxu0 %v786
    %2987 = vmatpush1.msra.mxu0 %v785
    %2988 = vmatprep.subr.mxu0 %v782
    %2989 = vmatpush1.msra.mxu0 %v781
    %2990 = vmatprep.subr.mxu0 %v778
    %2991 = vmatpush1.msra.mxu0 %v777
    %2992 = vmatprep.subr.mxu0 %v774
    %2993 = vmatpush1.msra.mxu0 %v773
    %2994 = vmatprep.subr.mxu0 %v770
    %2995 = vmatpush1.msra.mxu0 %v769
    %2996 = vmatprep.subr.mxu0 0.0
    %2997 = vmatpush2.msra.mxu0 0.0
    %2998 = vmatprep.subr.mxu0 0.0
    %2999 = vmatpush2.msra.mxu0 0.0
    %3000 = vmatprep.subr.mxu0 0.0
    %3001 = vmatpush2.msra.mxu0 0.0
    %3002 = vmatprep.subr.mxu0 0.0
    %3003 = vmatpush2.msra.mxu0 0.0
    %3004 = vmatprep.subr.mxu0 0.0
    %3005 = vmatpush2.msra.mxu0 0.0
    %3006 = vmatprep.subr.mxu0 0.0
    %3007 = vmatpush2.msra.mxu0 0.0
    %3008 = vmatprep.subr.mxu0 0.0
    %3009 = vmatpush2.msra.mxu0 0.0
    %3010 = vmatprep.subr.mxu0 0.0
    %3011 = vmatpush2.msra.mxu0 0.0
    %3012 = vmatprep.subr.mxu0 0.0
    %3013 = vmatpush2.msra.mxu0 0.0
    %3014 = vmatprep.subr.mxu0 0.0
    %3015 = vmatpush2.msra.mxu0 0.0
    %3016 = vmatprep.subr.mxu0 0.0
    %3017 = vmatpush2.msra.mxu0 0.0
    %3018 = vmatprep.subr.mxu0 0.0
    %3019 = vmatpush2.msra.mxu0 0.0
    %3020 = vmatprep.subr.mxu0 0.0
    %3021 = vmatpush2.msra.mxu0 0.0
    %3022 = vmatprep.subr.mxu0 0.0
    %3023 = vmatpush2.msra.mxu0 0.0
    %3024 = vmatprep.subr.mxu0 0.0
    %3025 = vmatpush2.msra.mxu0 0.0
    %3026 = vmatprep.subr.mxu0 0.0
    %3027 = vmatpush2.msra.mxu0 0.0
    %3028 = vmatprep.mubr.f32.mxu0 0.0
    %3029 = vmatmul.mubr.f32.gmra.mxu0 %v2956
    %v3030 = vpop.f32.mrf.mxu0
    %v3031 = vadd.f32 0.0, %v3030
    %v3032 = vpop.f32.mrf.mxu0
    %v3033 = vadd.f32 0.0, %v3032
    %3034 = vdwg.mxu0
    %3035 = vmatprep.subr.mxu0 %v832
    %3036 = vmatpush1.msra.mxu0 %v831
    %3037 = vmatprep.subr.mxu0 %v828
    %3038 = vmatpush1.msra.mxu0 %v827
    %3039 = vmatprep.subr.mxu0 %v824
    %3040 = vmatpush1.msra.mxu0 %v823
    %3041 = vmatprep.subr.mxu0 %v820
    %3042 = vmatpush1.msra.mxu0 %v819
    %3043 = vmatprep.subr.mxu0 %v816
    %3044 = vmatpush1.msra.mxu0 %v815
    %3045 = vmatprep.subr.mxu0 %v812
    %3046 = vmatpush1.msra.mxu0 %v811
    %3047 = vmatprep.subr.mxu0 %v808
    %3048 = vmatpush1.msra.mxu0 %v807
    %3049 = vmatprep.subr.mxu0 %v804
    %3050 = vmatpush1.msra.mxu0 %v803
    %3051 = vmatprep.subr.mxu0 %v800
    %3052 = vmatpush1.msra.mxu0 %v799
    %3053 = vmatprep.subr.mxu0 %v796
    %3054 = vmatpush1.msra.mxu0 %v795
    %3055 = vmatprep.subr.mxu0 %v792
    %3056 = vmatpush1.msra.mxu0 %v791
    %3057 = vmatprep.subr.mxu0 %v788
    %3058 = vmatpush1.msra.mxu0 %v787
    %3059 = vmatprep.subr.mxu0 %v784
    %3060 = vmatpush1.msra.mxu0 %v783
    %3061 = vmatprep.subr.mxu0 %v780
    %3062 = vmatpush1.msra.mxu0 %v779
    %3063 = vmatprep.subr.mxu0 %v776
    %3064 = vmatpush1.msra.mxu0 %v775
    %3065 = vmatprep.subr.mxu0 %v772
    %3066 = vmatpush1.msra.mxu0 %v771
    %3067 = vmatprep.subr.mxu0 0.0
    %3068 = vmatpush2.msra.mxu0 0.0
    %3069 = vmatprep.subr.mxu0 0.0
    %3070 = vmatpush2.msra.mxu0 0.0
    %3071 = vmatprep.subr.mxu0 0.0
    %3072 = vmatpush2.msra.mxu0 0.0
    %3073 = vmatprep.subr.mxu0 0.0
    %3074 = vmatpush2.msra.mxu0 0.0
    %3075 = vmatprep.subr.mxu0 0.0
    %3076 = vmatpush2.msra.mxu0 0.0
    %3077 = vmatprep.subr.mxu0 0.0
    %3078 = vmatpush2.msra.mxu0 0.0
    %3079 = vmatprep.subr.mxu0 0.0
    %3080 = vmatpush2.msra.mxu0 0.0
    %3081 = vmatprep.subr.mxu0 0.0
    %3082 = vmatpush2.msra.mxu0 0.0
    %3083 = vmatprep.subr.mxu0 0.0
    %3084 = vmatpush2.msra.mxu0 0.0
    %3085 = vmatprep.subr.mxu0 0.0
    %3086 = vmatpush2.msra.mxu0 0.0
    %3087 = vmatprep.subr.mxu0 0.0
    %3088 = vmatpush2.msra.mxu0 0.0
    %3089 = vmatprep.subr.mxu0 0.0
    %3090 = vmatpush2.msra.mxu0 0.0
    %3091 = vmatprep.subr.mxu0 0.0
    %3092 = vmatpush2.msra.mxu0 0.0
    %3093 = vmatprep.subr.mxu0 0.0
    %3094 = vmatpush2.msra.mxu0 0.0
    %3095 = vmatprep.subr.mxu0 0.0
    %3096 = vmatpush2.msra.mxu0 0.0
    %3097 = vmatprep.subr.mxu0 0.0
    %3098 = vmatpush2.msra.mxu0 0.0
    %3099 = vmatprep.mubr.f32.mxu0 0.0
    %3100 = vmatmul.mubr.f32.gmra.mxu0 %v2956
    %v3101 = vpop.f32.mrf.mxu0
    %v3102 = vadd.f32 0.0, %v3101
    %v3103 = vpop.f32.mrf.mxu0
    %v3104 = vadd.f32 0.0, %v3103
    %3105 = vdwg.mxu0
    %v3106 = vadd.f32 %v2960, %v3031
    %v3107 = vadd.f32 %v2961, %v3033
    %v3108 = vadd.f32 %v2962, %v3102
    %v3109 = vadd.f32 %v2963, %v3104
    %v3110 = vxor.u32 %v3106, 2147483648
    %v3111 = vmul.f32 %v3110, 1.442695
    %v3112 = vpow.pop %v3111
    %v3113 = vadd.f32 %v3112, 1.0
    %v3114 = vrcp.pop %v3113
    %v3115 = vmul.f32 1.0, %v3114
    %v3116 = vxor.u32 %v3107, 2147483648
    %v3117 = vmul.f32 %v3116, 1.442695
    %v3118 = vpow.pop %v3117
    %v3119 = vadd.f32 %v3118, 1.0
    %v3120 = vrcp.pop %v3119
    %v3121 = vmul.f32 1.0, %v3120
    %v3122 = vtanh.pop %v3108
    %v3123 = vxor.u32 %v3109, 2147483648
    %v3124 = vmul.f32 %v3123, 1.442695
    %v3125 = vpow.pop %v3124
    %v3126 = vadd.f32 %v3125, 1.0
    %v3127 = vrcp.pop %v3126
    %v3128 = vmul.f32 1.0, %v3127
    %v3129 = vmul.f32 %v3121, %v2954
    %v3130 = vmul.f32 %v3115, %v3122
    %v3131 = vadd.f32 %v3129, %v3130
    %v3132 = vtanh.pop %v3131
    %v3133 = vmul.f32 %v3128, %v3132
    %s3134 = smul.u32 13, 4
    %s3135 = smul.addr %s3134, 8
    %s3136 = scalar_lea.vmem [#allocation2], %s3135
    %v3137 = vld [vmem:[%s3136] sm:$0xff]
    %v3138 = vld [vmem:[%s3136 + $0x8] sm:$0xff]
    %v3139 = vld [vmem:[%s3136 + $0x10] sm:$0xff]
    %v3140 = vld [vmem:[%s3136 + $0x18] sm:$0xff]
    %3141 = vmatprep.subr.mxu0 %v830
    %3142 = vmatpush1.msra.mxu0 %v829
    %3143 = vmatprep.subr.mxu0 %v826
    %3144 = vmatpush1.msra.mxu0 %v825
    %3145 = vmatprep.subr.mxu0 %v822
    %3146 = vmatpush1.msra.mxu0 %v821
    %3147 = vmatprep.subr.mxu0 %v818
    %3148 = vmatpush1.msra.mxu0 %v817
    %3149 = vmatprep.subr.mxu0 %v814
    %3150 = vmatpush1.msra.mxu0 %v813
    %3151 = vmatprep.subr.mxu0 %v810
    %3152 = vmatpush1.msra.mxu0 %v809
    %3153 = vmatprep.subr.mxu0 %v806
    %3154 = vmatpush1.msra.mxu0 %v805
    %3155 = vmatprep.subr.mxu0 %v802
    %3156 = vmatpush1.msra.mxu0 %v801
    %3157 = vmatprep.subr.mxu0 %v798
    %3158 = vmatpush1.msra.mxu0 %v797
    %3159 = vmatprep.subr.mxu0 %v794
    %3160 = vmatpush1.msra.mxu0 %v793
    %3161 = vmatprep.subr.mxu0 %v790
    %3162 = vmatpush1.msra.mxu0 %v789
    %3163 = vmatprep.subr.mxu0 %v786
    %3164 = vmatpush1.msra.mxu0 %v785
    %3165 = vmatprep.subr.mxu0 %v782
    %3166 = vmatpush1.msra.mxu0 %v781
    %3167 = vmatprep.subr.mxu0 %v778
    %3168 = vmatpush1.msra.mxu0 %v777
    %3169 = vmatprep.subr.mxu0 %v774
    %3170 = vmatpush1.msra.mxu0 %v773
    %3171 = vmatprep.subr.mxu0 %v770
    %3172 = vmatpush1.msra.mxu0 %v769
    %3173 = vmatprep.subr.mxu0 0.0
    %3174 = vmatpush2.msra.mxu0 0.0
    %3175 = vmatprep.subr.mxu0 0.0
    %3176 = vmatpush2.msra.mxu0 0.0
    %3177 = vmatprep.subr.mxu0 0.0
    %3178 = vmatpush2.msra.mxu0 0.0
    %3179 = vmatprep.subr.mxu0 0.0
    %3180 = vmatpush2.msra.mxu0 0.0
    %3181 = vmatprep.subr.mxu0 0.0
    %3182 = vmatpush2.msra.mxu0 0.0
    %3183 = vmatprep.subr.mxu0 0.0
    %3184 = vmatpush2.msra.mxu0 0.0
    %3185 = vmatprep.subr.mxu0 0.0
    %3186 = vmatpush2.msra.mxu0 0.0
    %3187 = vmatprep.subr.mxu0 0.0
    %3188 = vmatpush2.msra.mxu0 0.0
    %3189 = vmatprep.subr.mxu0 0.0
    %3190 = vmatpush2.msra.mxu0 0.0
    %3191 = vmatprep.subr.mxu0 0.0
    %3192 = vmatpush2.msra.mxu0 0.0
    %3193 = vmatprep.subr.mxu0 0.0
    %3194 = vmatpush2.msra.mxu0 0.0
    %3195 = vmatprep.subr.mxu0 0.0
    %3196 = vmatpush2.msra.mxu0 0.0
    %3197 = vmatprep.subr.mxu0 0.0
    %3198 = vmatpush2.msra.mxu0 0.0
    %3199 = vmatprep.subr.mxu0 0.0
    %3200 = vmatpush2.msra.mxu0 0.0
    %3201 = vmatprep.subr.mxu0 0.0
    %3202 = vmatpush2.msra.mxu0 0.0
    %3203 = vmatprep.subr.mxu0 0.0
    %3204 = vmatpush2.msra.mxu0 0.0
    %3205 = vmatprep.mubr.f32.mxu0 0.0
    %3206 = vmatmul.mubr.f32.gmra.mxu0 %v3133
    %v3207 = vpop.f32.mrf.mxu0
    %v3208 = vadd.f32 0.0, %v3207
    %v3209 = vpop.f32.mrf.mxu0
    %v3210 = vadd.f32 0.0, %v3209
    %3211 = vdwg.mxu0
    %3212 = vmatprep.subr.mxu0 %v832
    %3213 = vmatpush1.msra.mxu0 %v831
    %3214 = vmatprep.subr.mxu0 %v828
    %3215 = vmatpush1.msra.mxu0 %v827
    %3216 = vmatprep.subr.mxu0 %v824
    %3217 = vmatpush1.msra.mxu0 %v823
    %3218 = vmatprep.subr.mxu0 %v820
    %3219 = vmatpush1.msra.mxu0 %v819
    %3220 = vmatprep.subr.mxu0 %v816
    %3221 = vmatpush1.msra.mxu0 %v815
    %3222 = vmatprep.subr.mxu0 %v812
    %3223 = vmatpush1.msra.mxu0 %v811
    %3224 = vmatprep.subr.mxu0 %v808
    %3225 = vmatpush1.msra.mxu0 %v807
    %3226 = vmatprep.subr.mxu0 %v804
    %3227 = vmatpush1.msra.mxu0 %v803
    %3228 = vmatprep.subr.mxu0 %v800
    %3229 = vmatpush1.msra.mxu0 %v799
    %3230 = vmatprep.subr.mxu0 %v796
    %3231 = vmatpush1.msra.mxu0 %v795
    %3232 = vmatprep.subr.mxu0 %v792
    %3233 = vmatpush1.msra.mxu0 %v791
    %3234 = vmatprep.subr.mxu0 %v788
    %3235 = vmatpush1.msra.mxu0 %v787
    %3236 = vmatprep.subr.mxu0 %v784
    %3237 = vmatpush1.msra.mxu0 %v783
    %3238 = vmatprep.subr.mxu0 %v780
    %3239 = vmatpush1.msra.mxu0 %v779
    %3240 = vmatprep.subr.mxu0 %v776
    %3241 = vmatpush1.msra.mxu0 %v775
    %3242 = vmatprep.subr.mxu0 %v772
    %3243 = vmatpush1.msra.mxu0 %v771
    %3244 = vmatprep.subr.mxu0 0.0
    %3245 = vmatpush2.msra.mxu0 0.0
    %3246 = vmatprep.subr.mxu0 0.0
    %3247 = vmatpush2.msra.mxu0 0.0
    %3248 = vmatprep.subr.mxu0 0.0
    %3249 = vmatpush2.msra.mxu0 0.0
    %3250 = vmatprep.subr.mxu0 0.0
    %3251 = vmatpush2.msra.mxu0 0.0
    %3252 = vmatprep.subr.mxu0 0.0
    %3253 = vmatpush2.msra.mxu0 0.0
    %3254 = vmatprep.subr.mxu0 0.0
    %3255 = vmatpush2.msra.mxu0 0.0
    %3256 = vmatprep.subr.mxu0 0.0
    %3257 = vmatpush2.msra.mxu0 0.0
    %3258 = vmatprep.subr.mxu0 0.0
    %3259 = vmatpush2.msra.mxu0 0.0
    %3260 = vmatprep.subr.mxu0 0.0
    %3261 = vmatpush2.msra.mxu0 0.0
    %3262 = vmatprep.subr.mxu0 0.0
    %3263 = vmatpush2.msra.mxu0 0.0
    %3264 = vmatprep.subr.mxu0 0.0
    %3265 = vmatpush2.msra.mxu0 0.0
    %3266 = vmatprep.subr.mxu0 0.0
    %3267 = vmatpush2.msra.mxu0 0.0
    %3268 = vmatprep.subr.mxu0 0.0
    %3269 = vmatpush2.msra.mxu0 0.0
    %3270 = vmatprep.subr.mxu0 0.0
    %3271 = vmatpush2.msra.mxu0 0.0
    %3272 = vmatprep.subr.mxu0 0.0
    %3273 = vmatpush2.msra.mxu0 0.0
    %3274 = vmatprep.subr.mxu0 0.0
    %3275 = vmatpush2.msra.mxu0 0.0
    %3276 = vmatprep.mubr.f32.mxu0 0.0
    %3277 = vmatmul.mubr.f32.gmra.mxu0 %v3133
    %v3278 = vpop.f32.mrf.mxu0
    %v3279 = vadd.f32 0.0, %v3278
    %v3280 = vpop.f32.mrf.mxu0
    %v3281 = vadd.f32 0.0, %v3280
    %3282 = vdwg.mxu0
    %v3283 = vadd.f32 %v3137, %v3208
    %v3284 = vadd.f32 %v3138, %v3210
    %v3285 = vadd.f32 %v3139, %v3279
    %v3286 = vadd.f32 %v3140, %v3281
    %v3287 = vxor.u32 %v3283, 2147483648
    %v3288 = vmul.f32 %v3287, 1.442695
    %v3289 = vpow.pop %v3288
    %v3290 = vadd.f32 %v3289, 1.0
    %v3291 = vrcp.pop %v3290
    %v3292 = vmul.f32 1.0, %v3291
    %v3293 = vxor.u32 %v3284, 2147483648
    %v3294 = vmul.f32 %v3293, 1.442695
    %v3295 = vpow.pop %v3294
    %v3296 = vadd.f32 %v3295, 1.0
    %v3297 = vrcp.pop %v3296
    %v3298 = vmul.f32 1.0, %v3297
    %v3299 = vtanh.pop %v3285
    %v3300 = vxor.u32 %v3286, 2147483648
    %v3301 = vmul.f32 %v3300, 1.442695
    %v3302 = vpow.pop %v3301
    %v3303 = vadd.f32 %v3302, 1.0
    %v3304 = vrcp.pop %v3303
    %v3305 = vmul.f32 1.0, %v3304
    %v3306 = vmul.f32 %v3298, %v3131
    %v3307 = vmul.f32 %v3292, %v3299
    %v3308 = vadd.f32 %v3306, %v3307
    %v3309 = vtanh.pop %v3308
    %v3310 = vmul.f32 %v3305, %v3309
    %s3311 = smul.u32 14, 4
    %s3312 = smul.addr %s3311, 8
    %s3313 = scalar_lea.vmem [#allocation2], %s3312
    %v3314 = vld [vmem:[%s3313] sm:$0xff]
    %v3315 = vld [vmem:[%s3313 + $0x8] sm:$0xff]
    %v3316 = vld [vmem:[%s3313 + $0x10] sm:$0xff]
    %v3317 = vld [vmem:[%s3313 + $0x18] sm:$0xff]
    %3318 = vmatprep.subr.mxu0 %v830
    %3319 = vmatpush1.msra.mxu0 %v829
    %3320 = vmatprep.subr.mxu0 %v826
    %3321 = vmatpush1.msra.mxu0 %v825
    %3322 = vmatprep.subr.mxu0 %v822
    %3323 = vmatpush1.msra.mxu0 %v821
    %3324 = vmatprep.subr.mxu0 %v818
    %3325 = vmatpush1.msra.mxu0 %v817
    %3326 = vmatprep.subr.mxu0 %v814
    %3327 = vmatpush1.msra.mxu0 %v813
    %3328 = vmatprep.subr.mxu0 %v810
    %3329 = vmatpush1.msra.mxu0 %v809
    %3330 = vmatprep.subr.mxu0 %v806
    %3331 = vmatpush1.msra.mxu0 %v805
    %3332 = vmatprep.subr.mxu0 %v802
    %3333 = vmatpush1.msra.mxu0 %v801
    %3334 = vmatprep.subr.mxu0 %v798
    %3335 = vmatpush1.msra.mxu0 %v797
    %3336 = vmatprep.subr.mxu0 %v794
    %3337 = vmatpush1.msra.mxu0 %v793
    %3338 = vmatprep.subr.mxu0 %v790
    %3339 = vmatpush1.msra.mxu0 %v789
    %3340 = vmatprep.subr.mxu0 %v786
    %3341 = vmatpush1.msra.mxu0 %v785
    %3342 = vmatprep.subr.mxu0 %v782
    %3343 = vmatpush1.msra.mxu0 %v781
    %3344 = vmatprep.subr.mxu0 %v778
    %3345 = vmatpush1.msra.mxu0 %v777
    %3346 = vmatprep.subr.mxu0 %v774
    %3347 = vmatpush1.msra.mxu0 %v773
    %3348 = vmatprep.subr.mxu0 %v770
    %3349 = vmatpush1.msra.mxu0 %v769
    %3350 = vmatprep.subr.mxu0 0.0
    %3351 = vmatpush2.msra.mxu0 0.0
    %3352 = vmatprep.subr.mxu0 0.0
    %3353 = vmatpush2.msra.mxu0 0.0
    %3354 = vmatprep.subr.mxu0 0.0
    %3355 = vmatpush2.msra.mxu0 0.0
    %3356 = vmatprep.subr.mxu0 0.0
    %3357 = vmatpush2.msra.mxu0 0.0
    %3358 = vmatprep.subr.mxu0 0.0
    %3359 = vmatpush2.msra.mxu0 0.0
    %3360 = vmatprep.subr.mxu0 0.0
    %3361 = vmatpush2.msra.mxu0 0.0
    %3362 = vmatprep.subr.mxu0 0.0
    %3363 = vmatpush2.msra.mxu0 0.0
    %3364 = vmatprep.subr.mxu0 0.0
    %3365 = vmatpush2.msra.mxu0 0.0
    %3366 = vmatprep.subr.mxu0 0.0
    %3367 = vmatpush2.msra.mxu0 0.0
    %3368 = vmatprep.subr.mxu0 0.0
    %3369 = vmatpush2.msra.mxu0 0.0
    %3370 = vmatprep.subr.mxu0 0.0
    %3371 = vmatpush2.msra.mxu0 0.0
    %3372 = vmatprep.subr.mxu0 0.0
    %3373 = vmatpush2.msra.mxu0 0.0
    %3374 = vmatprep.subr.mxu0 0.0
    %3375 = vmatpush2.msra.mxu0 0.0
    %3376 = vmatprep.subr.mxu0 0.0
    %3377 = vmatpush2.msra.mxu0 0.0
    %3378 = vmatprep.subr.mxu0 0.0
    %3379 = vmatpush2.msra.mxu0 0.0
    %3380 = vmatprep.subr.mxu0 0.0
    %3381 = vmatpush2.msra.mxu0 0.0
    %3382 = vmatprep.mubr.f32.mxu0 0.0
    %3383 = vmatmul.mubr.f32.gmra.mxu0 %v3310
    %v3384 = vpop.f32.mrf.mxu0
    %v3385 = vadd.f32 0.0, %v3384
    %v3386 = vpop.f32.mrf.mxu0
    %v3387 = vadd.f32 0.0, %v3386
    %3388 = vdwg.mxu0
    %3389 = vmatprep.subr.mxu0 %v832
    %3390 = vmatpush1.msra.mxu0 %v831
    %3391 = vmatprep.subr.mxu0 %v828
    %3392 = vmatpush1.msra.mxu0 %v827
    %3393 = vmatprep.subr.mxu0 %v824
    %3394 = vmatpush1.msra.mxu0 %v823
    %3395 = vmatprep.subr.mxu0 %v820
    %3396 = vmatpush1.msra.mxu0 %v819
    %3397 = vmatprep.subr.mxu0 %v816
    %3398 = vmatpush1.msra.mxu0 %v815
    %3399 = vmatprep.subr.mxu0 %v812
    %3400 = vmatpush1.msra.mxu0 %v811
    %3401 = vmatprep.subr.mxu0 %v808
    %3402 = vmatpush1.msra.mxu0 %v807
    %3403 = vmatprep.subr.mxu0 %v804
    %3404 = vmatpush1.msra.mxu0 %v803
    %3405 = vmatprep.subr.mxu0 %v800
    %3406 = vmatpush1.msra.mxu0 %v799
    %3407 = vmatprep.subr.mxu0 %v796
    %3408 = vmatpush1.msra.mxu0 %v795
    %3409 = vmatprep.subr.mxu0 %v792
    %3410 = vmatpush1.msra.mxu0 %v791
    %3411 = vmatprep.subr.mxu0 %v788
    %3412 = vmatpush1.msra.mxu0 %v787
    %3413 = vmatprep.subr.mxu0 %v784
    %3414 = vmatpush1.msra.mxu0 %v783
    %3415 = vmatprep.subr.mxu0 %v780
    %3416 = vmatpush1.msra.mxu0 %v779
    %3417 = vmatprep.subr.mxu0 %v776
    %3418 = vmatpush1.msra.mxu0 %v775
    %3419 = vmatprep.subr.mxu0 %v772
    %3420 = vmatpush1.msra.mxu0 %v771
    %3421 = vmatprep.subr.mxu0 0.0
    %3422 = vmatpush2.msra.mxu0 0.0
    %3423 = vmatprep.subr.mxu0 0.0
    %3424 = vmatpush2.msra.mxu0 0.0
    %3425 = vmatprep.subr.mxu0 0.0
    %3426 = vmatpush2.msra.mxu0 0.0
    %3427 = vmatprep.subr.mxu0 0.0
    %3428 = vmatpush2.msra.mxu0 0.0
    %3429 = vmatprep.subr.mxu0 0.0
    %3430 = vmatpush2.msra.mxu0 0.0
    %3431 = vmatprep.subr.mxu0 0.0
    %3432 = vmatpush2.msra.mxu0 0.0
    %3433 = vmatprep.subr.mxu0 0.0
    %3434 = vmatpush2.msra.mxu0 0.0
    %3435 = vmatprep.subr.mxu0 0.0
    %3436 = vmatpush2.msra.mxu0 0.0
    %3437 = vmatprep.subr.mxu0 0.0
    %3438 = vmatpush2.msra.mxu0 0.0
    %3439 = vmatprep.subr.mxu0 0.0
    %3440 = vmatpush2.msra.mxu0 0.0
    %3441 = vmatprep.subr.mxu0 0.0
    %3442 = vmatpush2.msra.mxu0 0.0
    %3443 = vmatprep.subr.mxu0 0.0
    %3444 = vmatpush2.msra.mxu0 0.0
    %3445 = vmatprep.subr.mxu0 0.0
    %3446 = vmatpush2.msra.mxu0 0.0
    %3447 = vmatprep.subr.mxu0 0.0
    %3448 = vmatpush2.msra.mxu0 0.0
    %3449 = vmatprep.subr.mxu0 0.0
    %3450 = vmatpush2.msra.mxu0 0.0
    %3451 = vmatprep.subr.mxu0 0.0
    %3452 = vmatpush2.msra.mxu0 0.0
    %3453 = vmatprep.mubr.f32.mxu0 0.0
    %3454 = vmatmul.mubr.f32.gmra.mxu0 %v3310
    %v3455 = vpop.f32.mrf.mxu0
    %v3456 = vadd.f32 0.0, %v3455
    %v3457 = vpop.f32.mrf.mxu0
    %v3458 = vadd.f32 0.0, %v3457
    %3459 = vdwg.mxu0
    %v3460 = vadd.f32 %v3314, %v3385
    %v3461 = vadd.f32 %v3315, %v3387
    %v3462 = vadd.f32 %v3316, %v3456
    %v3463 = vadd.f32 %v3317, %v3458
    %v3464 = vxor.u32 %v3460, 2147483648
    %v3465 = vmul.f32 %v3464, 1.442695
    %v3466 = vpow.pop %v3465
    %v3467 = vadd.f32 %v3466, 1.0
    %v3468 = vrcp.pop %v3467
    %v3469 = vmul.f32 1.0, %v3468
    %v3470 = vxor.u32 %v3461, 2147483648
    %v3471 = vmul.f32 %v3470, 1.442695
    %v3472 = vpow.pop %v3471
    %v3473 = vadd.f32 %v3472, 1.0
    %v3474 = vrcp.pop %v3473
    %v3475 = vmul.f32 1.0, %v3474
    %v3476 = vtanh.pop %v3462
    %v3477 = vxor.u32 %v3463, 2147483648
    %v3478 = vmul.f32 %v3477, 1.442695
    %v3479 = vpow.pop %v3478
    %v3480 = vadd.f32 %v3479, 1.0
    %v3481 = vrcp.pop %v3480
    %v3482 = vmul.f32 1.0, %v3481
    %v3483 = vmul.f32 %v3475, %v3308
    %v3484 = vmul.f32 %v3469, %v3476
    %v3485 = vadd.f32 %v3483, %v3484
    %v3486 = vtanh.pop %v3485
    %v3487 = vmul.f32 %v3482, %v3486
    %s3488 = smul.u32 15, 4
    %s3489 = smul.addr %s3488, 8
    %s3490 = scalar_lea.vmem [#allocation2], %s3489
    %v3491 = vld [vmem:[%s3490] sm:$0xff]
    %v3492 = vld [vmem:[%s3490 + $0x8] sm:$0xff]
    %v3493 = vld [vmem:[%s3490 + $0x10] sm:$0xff]
    %v3494 = vld [vmem:[%s3490 + $0x18] sm:$0xff]
    %3495 = vmatprep.subr.mxu0 %v830
    %3496 = vmatpush1.msra.mxu0 %v829
    %3497 = vmatprep.subr.mxu0 %v826
    %3498 = vmatpush1.msra.mxu0 %v825
    %3499 = vmatprep.subr.mxu0 %v822
    %3500 = vmatpush1.msra.mxu0 %v821
    %3501 = vmatprep.subr.mxu0 %v818
    %3502 = vmatpush1.msra.mxu0 %v817
    %3503 = vmatprep.subr.mxu0 %v814
    %3504 = vmatpush1.msra.mxu0 %v813
    %3505 = vmatprep.subr.mxu0 %v810
    %3506 = vmatpush1.msra.mxu0 %v809
    %3507 = vmatprep.subr.mxu0 %v806
    %3508 = vmatpush1.msra.mxu0 %v805
    %3509 = vmatprep.subr.mxu0 %v802
    %3510 = vmatpush1.msra.mxu0 %v801
    %3511 = vmatprep.subr.mxu0 %v798
    %3512 = vmatpush1.msra.mxu0 %v797
    %3513 = vmatprep.subr.mxu0 %v794
    %3514 = vmatpush1.msra.mxu0 %v793
    %3515 = vmatprep.subr.mxu0 %v790
    %3516 = vmatpush1.msra.mxu0 %v789
    %3517 = vmatprep.subr.mxu0 %v786
    %3518 = vmatpush1.msra.mxu0 %v785
    %3519 = vmatprep.subr.mxu0 %v782
    %3520 = vmatpush1.msra.mxu0 %v781
    %3521 = vmatprep.subr.mxu0 %v778
    %3522 = vmatpush1.msra.mxu0 %v777
    %3523 = vmatprep.subr.mxu0 %v774
    %3524 = vmatpush1.msra.mxu0 %v773
    %3525 = vmatprep.subr.mxu0 %v770
    %3526 = vmatpush1.msra.mxu0 %v769
    %3527 = vmatprep.subr.mxu0 0.0
    %3528 = vmatpush2.msra.mxu0 0.0
    %3529 = vmatprep.subr.mxu0 0.0
    %3530 = vmatpush2.msra.mxu0 0.0
    %3531 = vmatprep.subr.mxu0 0.0
    %3532 = vmatpush2.msra.mxu0 0.0
    %3533 = vmatprep.subr.mxu0 0.0
    %3534 = vmatpush2.msra.mxu0 0.0
    %3535 = vmatprep.subr.mxu0 0.0
    %3536 = vmatpush2.msra.mxu0 0.0
    %3537 = vmatprep.subr.mxu0 0.0
    %3538 = vmatpush2.msra.mxu0 0.0
    %3539 = vmatprep.subr.mxu0 0.0
    %3540 = vmatpush2.msra.mxu0 0.0
    %3541 = vmatprep.subr.mxu0 0.0
    %3542 = vmatpush2.msra.mxu0 0.0
    %3543 = vmatprep.subr.mxu0 0.0
    %3544 = vmatpush2.msra.mxu0 0.0
    %3545 = vmatprep.subr.mxu0 0.0
    %3546 = vmatpush2.msra.mxu0 0.0
    %3547 = vmatprep.subr.mxu0 0.0
    %3548 = vmatpush2.msra.mxu0 0.0
    %3549 = vmatprep.subr.mxu0 0.0
    %3550 = vmatpush2.msra.mxu0 0.0
    %3551 = vmatprep.subr.mxu0 0.0
    %3552 = vmatpush2.msra.mxu0 0.0
    %3553 = vmatprep.subr.mxu0 0.0
    %3554 = vmatpush2.msra.mxu0 0.0
    %3555 = vmatprep.subr.mxu0 0.0
    %3556 = vmatpush2.msra.mxu0 0.0
    %3557 = vmatprep.subr.mxu0 0.0
    %3558 = vmatpush2.msra.mxu0 0.0
    %3559 = vmatprep.mubr.f32.mxu0 0.0
    %3560 = vmatmul.mubr.f32.gmra.mxu0 %v3487
    %v3561 = vpop.f32.mrf.mxu0
    %v3562 = vadd.f32 0.0, %v3561
    %v3563 = vpop.f32.mrf.mxu0
    %v3564 = vadd.f32 0.0, %v3563
    %3565 = vdwg.mxu0
    %3566 = vmatprep.subr.mxu0 %v832
    %3567 = vmatpush1.msra.mxu0 %v831
    %3568 = vmatprep.subr.mxu0 %v828
    %3569 = vmatpush1.msra.mxu0 %v827
    %3570 = vmatprep.subr.mxu0 %v824
    %3571 = vmatpush1.msra.mxu0 %v823
    %3572 = vmatprep.subr.mxu0 %v820
    %3573 = vmatpush1.msra.mxu0 %v819
    %3574 = vmatprep.subr.mxu0 %v816
    %3575 = vmatpush1.msra.mxu0 %v815
    %3576 = vmatprep.subr.mxu0 %v812
    %3577 = vmatpush1.msra.mxu0 %v811
    %3578 = vmatprep.subr.mxu0 %v808
    %3579 = vmatpush1.msra.mxu0 %v807
    %3580 = vmatprep.subr.mxu0 %v804
    %3581 = vmatpush1.msra.mxu0 %v803
    %3582 = vmatprep.subr.mxu0 %v800
    %3583 = vmatpush1.msra.mxu0 %v799
    %3584 = vmatprep.subr.mxu0 %v796
    %3585 = vmatpush1.msra.mxu0 %v795
    %3586 = vmatprep.subr.mxu0 %v792
    %3587 = vmatpush1.msra.mxu0 %v791
    %3588 = vmatprep.subr.mxu0 %v788
    %3589 = vmatpush1.msra.mxu0 %v787
    %3590 = vmatprep.subr.mxu0 %v784
    %3591 = vmatpush1.msra.mxu0 %v783
    %3592 = vmatprep.subr.mxu0 %v780
    %3593 = vmatpush1.msra.mxu0 %v779
    %3594 = vmatprep.subr.mxu0 %v776
    %3595 = vmatpush1.msra.mxu0 %v775
    %3596 = vmatprep.subr.mxu0 %v772
    %3597 = vmatpush1.msra.mxu0 %v771
    %3598 = vmatprep.subr.mxu0 0.0
    %3599 = vmatpush2.msra.mxu0 0.0
    %3600 = vmatprep.subr.mxu0 0.0
    %3601 = vmatpush2.msra.mxu0 0.0
    %3602 = vmatprep.subr.mxu0 0.0
    %3603 = vmatpush2.msra.mxu0 0.0
    %3604 = vmatprep.subr.mxu0 0.0
    %3605 = vmatpush2.msra.mxu0 0.0
    %3606 = vmatprep.subr.mxu0 0.0
    %3607 = vmatpush2.msra.mxu0 0.0
    %3608 = vmatprep.subr.mxu0 0.0
    %3609 = vmatpush2.msra.mxu0 0.0
    %3610 = vmatprep.subr.mxu0 0.0
    %3611 = vmatpush2.msra.mxu0 0.0
    %3612 = vmatprep.subr.mxu0 0.0
    %3613 = vmatpush2.msra.mxu0 0.0
    %3614 = vmatprep.subr.mxu0 0.0
    %3615 = vmatpush2.msra.mxu0 0.0
    %3616 = vmatprep.subr.mxu0 0.0
    %3617 = vmatpush2.msra.mxu0 0.0
    %3618 = vmatprep.subr.mxu0 0.0
    %3619 = vmatpush2.msra.mxu0 0.0
    %3620 = vmatprep.subr.mxu0 0.0
    %3621 = vmatpush2.msra.mxu0 0.0
    %3622 = vmatprep.subr.mxu0 0.0
    %3623 = vmatpush2.msra.mxu0 0.0
    %3624 = vmatprep.subr.mxu0 0.0
    %3625 = vmatpush2.msra.mxu0 0.0
    %3626 = vmatprep.subr.mxu0 0.0
    %3627 = vmatpush2.msra.mxu0 0.0
    %3628 = vmatprep.subr.mxu0 0.0
    %3629 = vmatpush2.msra.mxu0 0.0
    %3630 = vmatprep.mubr.f32.mxu0 0.0
    %3631 = vmatmul.mubr.f32.gmra.mxu0 %v3487
    %v3632 = vpop.f32.mrf.mxu0
    %v3633 = vadd.f32 0.0, %v3632
    %v3634 = vpop.f32.mrf.mxu0
    %v3635 = vadd.f32 0.0, %v3634
    %3636 = vdwg.mxu0
    %v3637 = vadd.f32 %v3491, %v3562
    %v3638 = vadd.f32 %v3492, %v3564
    %v3639 = vadd.f32 %v3493, %v3633
    %v3640 = vadd.f32 %v3494, %v3635
    %v3641 = vxor.u32 %v3637, 2147483648
    %v3642 = vmul.f32 %v3641, 1.442695
    %v3643 = vpow.pop %v3642
    %v3644 = vadd.f32 %v3643, 1.0
    %v3645 = vrcp.pop %v3644
    %v3646 = vmul.f32 1.0, %v3645
    %v3647 = vxor.u32 %v3638, 2147483648
    %v3648 = vmul.f32 %v3647, 1.442695
    %v3649 = vpow.pop %v3648
    %v3650 = vadd.f32 %v3649, 1.0
    %v3651 = vrcp.pop %v3650
    %v3652 = vmul.f32 1.0, %v3651
    %v3653 = vtanh.pop %v3639
    %v3654 = vxor.u32 %v3640, 2147483648
    %v3655 = vmul.f32 %v3654, 1.442695
    %v3656 = vpow.pop %v3655
    %v3657 = vadd.f32 %v3656, 1.0
    %v3658 = vrcp.pop %v3657
    %v3659 = vmul.f32 1.0, %v3658
    %v3660 = vmul.f32 %v3652, %v3485
    %v3661 = vmul.f32 %v3646, %v3653
    %v3662 = vadd.f32 %v3660, %v3661
    %v3663 = vtanh.pop %v3662
    %v3664 = vmul.f32 %v3659, %v3663
    %v3665 = vld [vmem:[#allocation6] sm:$0xff]
    %v3666 = vld [vmem:[#allocation6 + $0x8] sm:$0xff]
    %v3667 = vld [vmem:[#allocation6 + $0x10] sm:$0xff]
    %v3668 = vld [vmem:[#allocation6 + $0x18] sm:$0xff]
    %v3669 = vld [vmem:[#allocation6 + $0x20] sm:$0xff]
    %v3670 = vld [vmem:[#allocation6 + $0x28] sm:$0xff]
    %v3671 = vld [vmem:[#allocation6 + $0x30] sm:$0xff]
    %v3672 = vld [vmem:[#allocation6 + $0x38] sm:$0xff]
    %v3673 = vld [vmem:[#allocation6 + $0x40] sm:$0xff]
    %v3674 = vld [vmem:[#allocation6 + $0x48] sm:$0xff]
    %v3675 = vld [vmem:[#allocation6 + $0x50] sm:$0xff]
    %v3676 = vld [vmem:[#allocation6 + $0x58] sm:$0xff]
    %v3677 = vld [vmem:[#allocation6 + $0x60] sm:$0xff]
    %v3678 = vld [vmem:[#allocation6 + $0x68] sm:$0xff]
    %v3679 = vld [vmem:[#allocation6 + $0x70] sm:$0xff]
    %v3680 = vld [vmem:[#allocation6 + $0x78] sm:$0xff]
    %v3681 = vld [vmem:[%s7] sm:$0x1]
    %v3683 = vlaneseq
    %v3684 = vshrl.u32 %v3683, 7
    %v3685 = vsub.s32 0, %v3684
    %v3686 = vrot.slane %v3681, %v3685
    %3688 = vmatprep.subr.mxu0 0.0
    %3689 = vmatpush1.msra.mxu0 %v3680
    %3690 = vmatprep.subr.mxu0 0.0
    %3691 = vmatpush1.msra.mxu0 %v3679
    %3692 = vmatprep.subr.mxu0 0.0
    %3693 = vmatpush1.msra.mxu0 %v3678
    %3694 = vmatprep.subr.mxu0 0.0
    %3695 = vmatpush1.msra.mxu0 %v3677
    %3696 = vmatprep.subr.mxu0 0.0
    %3697 = vmatpush1.msra.mxu0 %v3676
    %3698 = vmatprep.subr.mxu0 0.0
    %3699 = vmatpush1.msra.mxu0 %v3675
    %3700 = vmatprep.subr.mxu0 0.0
    %3701 = vmatpush1.msra.mxu0 %v3674
    %3702 = vmatprep.subr.mxu0 0.0
    %3703 = vmatpush1.msra.mxu0 %v3673
    %3704 = vmatprep.subr.mxu0 0.0
    %3705 = vmatpush1.msra.mxu0 %v3672
    %3706 = vmatprep.subr.mxu0 0.0
    %3707 = vmatpush1.msra.mxu0 %v3671
    %3708 = vmatprep.subr.mxu0 0.0
    %3709 = vmatpush1.msra.mxu0 %v3670
    %3710 = vmatprep.subr.mxu0 0.0
    %3711 = vmatpush1.msra.mxu0 %v3669
    %3712 = vmatprep.subr.mxu0 0.0
    %3713 = vmatpush1.msra.mxu0 %v3668
    %3714 = vmatprep.subr.mxu0 0.0
    %3715 = vmatpush1.msra.mxu0 %v3667
    %3716 = vmatprep.subr.mxu0 0.0
    %3717 = vmatpush1.msra.mxu0 %v3666
    %3718 = vmatprep.subr.mxu0 0.0
    %3719 = vmatpush1.msra.mxu0 %v3665
    %3720 = vmatprep.subr.mxu0 0.0
    %3721 = vmatpush2.msra.mxu0 0.0
    %3722 = vmatprep.subr.mxu0 0.0
    %3723 = vmatpush2.msra.mxu0 0.0
    %3724 = vmatprep.subr.mxu0 0.0
    %3725 = vmatpush2.msra.mxu0 0.0
    %3726 = vmatprep.subr.mxu0 0.0
    %3727 = vmatpush2.msra.mxu0 0.0
    %3728 = vmatprep.subr.mxu0 0.0
    %3729 = vmatpush2.msra.mxu0 0.0
    %3730 = vmatprep.subr.mxu0 0.0
    %3731 = vmatpush2.msra.mxu0 0.0
    %3732 = vmatprep.subr.mxu0 0.0
    %3733 = vmatpush2.msra.mxu0 0.0
    %3734 = vmatprep.subr.mxu0 0.0
    %3735 = vmatpush2.msra.mxu0 0.0
    %3736 = vmatprep.subr.mxu0 0.0
    %3737 = vmatpush2.msra.mxu0 0.0
    %3738 = vmatprep.subr.mxu0 0.0
    %3739 = vmatpush2.msra.mxu0 0.0
    %3740 = vmatprep.subr.mxu0 0.0
    %3741 = vmatpush2.msra.mxu0 0.0
    %3742 = vmatprep.subr.mxu0 0.0
    %3743 = vmatpush2.msra.mxu0 0.0
    %3744 = vmatprep.subr.mxu0 0.0
    %3745 = vmatpush2.msra.mxu0 0.0
    %3746 = vmatprep.subr.mxu0 0.0
    %3747 = vmatpush2.msra.mxu0 0.0
    %3748 = vmatprep.subr.mxu0 0.0
    %3749 = vmatpush2.msra.mxu0 0.0
    %3750 = vmatprep.subr.mxu0 0.0
    %3751 = vmatpush2.msra.mxu0 0.0
    %3752 = vmatprep.mubr.f32.mxu0 0.0
    %3753 = vmatmul.mubr.f32.gmra.mxu0 %v3664
    %v3754 = vpop.f32.mrf.mxu0
    %v3755 = vadd.f32 %v3686, %v3754
    %v3756 = vpop.f32.mrf.mxu0
    %3757 = vdwg.mxu0
    %3758 = vmax.xlane.f32.xlu0 %v3755
    %v3759 = vpop.xlane.xlu0 %3758
    %v3760 = vsub.f32 %v3755, %v3759
    %v3761 = vmul.f32 %v3760, 1.442695
    %v3762 = vpow.pop %v3761
    %3763 = vadd.xlane.f32.xlu0 %v3762
    %v3764 = vpop.xlane.xlu0 %3763
    %v3765 = vlog2.pop %v3764
    %v3766 = vmul.f32 %v3765, 0.6931472
    %v3767 = vsub.f32 %v3760, %v3766
    %3768 = vst [vmem:[#allocation8] sm:$0xff] %v3767
    // Predicated region
    $region42: #{tpu_custom_call.1} parent=1 // pred_check
      _
    $region43: #{tpu_custom_call.1} parent=1 // pred_check_branch
      %3770 = sbr.rel (0) target = $region45
    $region44: #{tpu_custom_call.1} parent=1 // pred_region
      %s3772 = ssub.s32 128, 128
      %3773 = vsyncadd [#allocation5], %s3772
      %s3775 = sshll.u32 [#allocation8], 4
      %s3776 = int_to_ptr.vmem [resolvable:$true] %s3775
      %3778 = dma.vmem_to_hbm [thread:$0]  %s3776, 128, %s8, [#allocation5]
    $region45: #{tpu_custom_call.1} parent=1 // pred_fallthru
      _
    // Predicated region
    $region46: #{tpu_custom_call.1} parent=1 // pred_check
      _
    $region47: #{tpu_custom_call.1} parent=1 // pred_check_branch
      %3780 = sbr.rel (0) target = $region49
    $region48: #{tpu_custom_call.1} parent=1 // pred_region
      %3781 = dma.done [#allocation5], 128
    $region49: #{tpu_custom_call.1} parent=1 // pred_fallthru
      _
    %3782 = vsyncpa [#allocation4], 1
    %3783 = vsyncpa [#allocation7], 1
    %3784 = vsyncpa [#allocation5], 1

</llo_original>
